<compile_context>
chip_gen: v7x
topology: tpu7x:2x2x1
jax: 0.10.0
libtpu: 0.0.40
codegen_flags: <defaults>
</compile_context>

<pallas_src>
import functools

import jax
import jax.numpy as jnp
from jax.experimental import pallas as pl
from jax.experimental.pallas import tpu as pltpu


def _layer_norm(x, gamma, beta, eps=1e-5):
    mu = jnp.mean(x, axis=-1, keepdims=True)
    var = jnp.mean((x - mu) ** 2, axis=-1, keepdims=True)
    return (x - mu) * jax.lax.rsqrt(var + eps) * gamma + beta


def encoder_stack_kernel(x_ref, bias_ref,
                         wq_ref, wk_ref, wv_ref, bq_ref, bk_ref, bv_ref,
                         wout_ref, bout_ref, g1_ref, be1_ref,
                         w1_ref, bf1_ref, w2_ref, bf2_ref, g2_ref, be2_ref,
                         gf_ref, bef_ref,
                         o_ref, *, num_heads, num_layers):
    x = x_ref[0]                       # (S, H) float32
    bias = bias_ref[0]                 # (1, S) float32 additive mask (0 / -1e9)
    S, H = x.shape
    hd = H // num_heads
    scale = 1.0 / (hd ** 0.5)

    for l in range(num_layers):        # static unroll (num_layers is small & static)
        # Broadcast the activations over heads so every contraction is a clean
        # leading-batch-dim matmul (no major-dim transposes inside the kernel).
        xb = jnp.broadcast_to(x.astype(jnp.bfloat16)[None], (num_heads, S, H))

        # Per-head projections: (nh, S, H) @ (nh, H, hd) -> (nh, S, hd), f32 accumulate.
        q = jnp.einsum('hsk,hkd->hsd', xb, wq_ref[l],
                       preferred_element_type=jnp.float32) + bq_ref[l]
        k = jnp.einsum('hsk,hkd->hsd', xb, wk_ref[l],
                       preferred_element_type=jnp.float32) + bk_ref[l]
        v = jnp.einsum('hsk,hkd->hsd', xb, wv_ref[l],
                       preferred_element_type=jnp.float32) + bv_ref[l]

        # Scores: contract head_dim directly (no k.T relayout).
        scores = jnp.einsum('hqd,hkd->hqk', q.astype(jnp.bfloat16),
                            k.astype(jnp.bfloat16),
                            preferred_element_type=jnp.float32)
        scores = scores * scale + bias          # additive mask bias, finite -1e9

        # Softmax in f32; reciprocal on the EUP instead of a vector divide.
        m = jnp.max(scores, axis=-1, keepdims=True)
        p = jnp.exp(scores - m)
        denom = jnp.sum(p, axis=-1, keepdims=True)
        p = p * pl.reciprocal(denom, approx=True)

        # Context: (nh, S, S) @ (nh, S, hd) -> (nh, S, hd)
        ctx = jnp.einsum('hqk,hkd->hqd', p.astype(jnp.bfloat16),
                         v.astype(jnp.bfloat16),
                         preferred_element_type=jnp.float32)

        # Output projection with head-blocked Wout, summed over heads
        # (fuses the head-concat into the contraction; no transpose/concatenate).
        proj = jnp.einsum('hqd,hdo->hqo', ctx.astype(jnp.bfloat16), wout_ref[l],
                          preferred_element_type=jnp.float32)
        attn = jnp.sum(proj, axis=0) + bout_ref[l]           # (S, H)

        # Residual + LayerNorm 1 (f32)
        y = _layer_norm(x + attn, g1_ref[l], be1_ref[l])

        # FFN: Linear(H, 4H) -> ReLU -> Linear(4H, H), bf16 matmuls / f32 accumulate
        h1 = jnp.dot(y.astype(jnp.bfloat16), w1_ref[l],
                     preferred_element_type=jnp.float32) + bf1_ref[l]
        h1 = jnp.maximum(h1, 0.0)
        ff = jnp.dot(h1.astype(jnp.bfloat16), w2_ref[l],
                     preferred_element_type=jnp.float32) + bf2_ref[l]

        # Residual + LayerNorm 2 (f32)
        x = _layer_norm(y + ff, g2_ref[l], be2_ref[l])

    # Final LayerNorm fused into the same kernel (no extra HBM round trip).
    o_ref[0] = _layer_norm(x, gf_ref[...], bef_ref[...])


def _full_spec(shape):
    # Full-array block, constant index map over the batch grid.
    return pl.BlockSpec(shape, lambda b: tuple(0 for _ in shape))


def _split_attention_weights(wqkv, bqkv, wout, num_heads):
    """Split PyTorch-style packed qkv ([h0: q k v | h1: q k v | ...]) into
    head-batched tensors with contiguous columns.  Done once outside the kernel."""
    H = wqkv.shape[0]
    hd = H // num_heads
    r = wqkv.reshape(H, num_heads, 3, hd)
    wq = jnp.transpose(r[:, :, 0, :], (1, 0, 2))   # (nh, H, hd)
    wk = jnp.transpose(r[:, :, 1, :], (1, 0, 2))
    wv = jnp.transpose(r[:, :, 2, :], (1, 0, 2))
    rb = bqkv.reshape(num_heads, 3, hd)
    bq = rb[:, 0, :].reshape(num_heads, 1, hd)
    bk = rb[:, 1, :].reshape(num_heads, 1, hd)
    bv = rb[:, 2, :].reshape(num_heads, 1, hd)
    wo = wout.reshape(num_heads, hd, H)            # (nh, hd, H): head h -> rows h*hd..
    return wq, wk, wv, bq, bk, bv, wo


def _stack_layer_params(layers, num_heads):
    wq, wk, wv, bq, bk, bv, wo = [], [], [], [], [], [], []
    names = ("bout", "g1", "be1", "w1", "bf1", "w2", "bf2", "g2", "be2")
    others = {n: [] for n in names}
    for lp in layers:
        a, b, c, d, e, f, g = _split_attention_weights(
            lp["wqkv"], lp["bqkv"], lp["wout"], num_heads)
        wq.append(a); wk.append(b); wv.append(c)
        bq.append(d); bk.append(e); bv.append(f); wo.append(g)
        for n in names:
            others[n].append(lp[n])

    def stk(xs, dtype=None):
        s = jnp.stack(xs)
        return s.astype(dtype) if dtype is not None else s

    return {
        "wq": stk(wq, jnp.bfloat16), "wk": stk(wk, jnp.bfloat16), "wv": stk(wv, jnp.bfloat16),
        "bq": stk(bq), "bk": stk(bk), "bv": stk(bv),
        "wout": stk(wo, jnp.bfloat16), "bout": stk(others["bout"]),
        "g1": stk(others["g1"]), "be1": stk(others["be1"]),
        "w1": stk(others["w1"], jnp.bfloat16), "bf1": stk(others["bf1"]),
        "w2": stk(others["w2"], jnp.bfloat16), "bf2": stk(others["bf2"]),
        "g2": stk(others["g2"]), "be2": stk(others["be2"]),
    }


def transformer_encoder_pallas(x, mask_bias, stacked, g_final, be_final,
                               num_heads, num_layers):
    B, S, H = x.shape
    hd = H // num_heads
    L = num_layers
    kernel = functools.partial(encoder_stack_kernel,
                               num_heads=num_heads, num_layers=num_layers)
    in_specs = [
        pl.BlockSpec((1, S, H), lambda b: (b, 0, 0)),            # x
        pl.BlockSpec((1, 1, S), lambda b: (b, 0, 0)),            # additive mask bias
        _full_spec((L, num_heads, H, hd)),                       # wq
        _full_spec((L, num_heads, H, hd)),                       # wk
        _full_spec((L, num_heads, H, hd)),                       # wv
        _full_spec((L, num_heads, 1, hd)),                       # bq
        _full_spec((L, num_heads, 1, hd)),                       # bk
        _full_spec((L, num_heads, 1, hd)),                       # bv
        _full_spec((L, num_heads, hd, H)),                       # wout (head-blocked)
        _full_spec((L, 1, H)),                                   # bout
        _full_spec((L, 1, H)), _full_spec((L, 1, H)),            # ln1 gamma, beta
        _full_spec((L, H, 4 * H)), _full_spec((L, 1, 4 * H)),    # ffn W1, b1
        _full_spec((L, 4 * H, H)), _full_spec((L, 1, H)),        # ffn W2, b2
        _full_spec((L, 1, H)), _full_spec((L, 1, H)),            # ln2 gamma, beta
        _full_spec((1, H)), _full_spec((1, H)),                  # final LN gamma, beta
    ]
    return pl.pallas_call(
        kernel,
        out_shape=jax.ShapeDtypeStruct((B, S, H), jnp.float32),
        grid=(B,),
        in_specs=in_specs,
        out_specs=pl.BlockSpec((1, S, H), lambda b: (b, 0, 0)),
        compiler_params=pltpu.CompilerParams(
            dimension_semantics=("parallel",),
            vmem_limit_bytes=32 * 1024 * 1024),
    )(x, mask_bias,
      stacked["wq"], stacked["wk"], stacked["wv"],
      stacked["bq"], stacked["bk"], stacked["bv"],
      stacked["wout"], stacked["bout"], stacked["g1"], stacked["be1"],
      stacked["w1"], stacked["bf1"], stacked["w2"], stacked["bf2"],
      stacked["g2"], stacked["be2"],
      g_final, be_final)


def init_params(key, hidden_dim, num_heads, num_layers, vocab_size, max_length):
    H = hidden_dim
    params = {}
    k_emb, k_pos, key = jax.random.split(key, 3)
    params["tok_emb"] = 0.02 * jax.random.normal(k_emb, (vocab_size, H), jnp.float32)
    params["pos_emb"] = 0.02 * jax.random.normal(k_pos, (max_length, H), jnp.float32)
    layers = []
    for _ in range(num_layers):
        ks = jax.random.split(key, 5)
        key = ks[-1]
        layers.append({
            "wqkv": 0.02 * jax.random.normal(ks[0], (H, 3 * H), jnp.float32),
            "bqkv": jnp.zeros((1, 3 * H), jnp.float32),
            "wout": 0.02 * jax.random.normal(ks[1], (H, H), jnp.float32),
            "bout": jnp.zeros((1, H), jnp.float32),
            "g1": jnp.ones((1, H), jnp.float32),
            "be1": jnp.zeros((1, H), jnp.float32),
            "w1": 0.02 * jax.random.normal(ks[2], (H, 4 * H), jnp.float32),
            "bf1": jnp.zeros((1, 4 * H), jnp.float32),
            "w2": 0.02 * jax.random.normal(ks[3], (4 * H, H), jnp.float32),
            "bf2": jnp.zeros((1, H), jnp.float32),
            "g2": jnp.ones((1, H), jnp.float32),
            "be2": jnp.zeros((1, H), jnp.float32),
        })
    params["layers"] = layers
    params["g_final"] = jnp.ones((1, H), jnp.float32)
    params["be_final"] = jnp.zeros((1, H), jnp.float32)
    return params


def transformer_encoder_forward(params, input_ids, attention_mask, num_heads):
    B, S = input_ids.shape
    # Embedding lookups are glue (plain JAX gathers).
    positions = jnp.arange(S, dtype=jnp.int32)
    x = jnp.take(params["tok_emb"], input_ids, axis=0) \
        + jnp.take(params["pos_emb"], positions, axis=0)[None, :, :]
    # Additive mask bias: 0 where attended, -1e9 where masked (finite -> no NaN).
    mask_f = attention_mask.astype(jnp.float32).reshape(B, 1, S)
    mask_bias = (1.0 - mask_f) * (-1e9)
    stacked = _stack_layer_params(params["layers"], num_heads)
    return transformer_encoder_pallas(x, mask_bias, stacked,
                                      params["g_final"], params["be_final"],
                                      num_heads, len(params["layers"]))


if __name__ == "__main__":
    hidden_dim = 32
    num_heads = 4
    num_layers = 2
    vocab_size = 50
    max_length = 16
    batch = 2
    seq = 8

    key = jax.random.PRNGKey(0)
    k_ids, k_params = jax.random.split(key)
    input_ids = jax.random.randint(k_ids, (batch, seq), 0, vocab_size, dtype=jnp.int32)
    attention_mask = jnp.ones((batch, seq), dtype=jnp.int32)

    params = init_params(k_params, hidden_dim, num_heads, num_layers,
                         vocab_size, max_length)

    # TODO(synk): H=32 / S=8 lane dims stay sub-128 (padding H would change
    # LayerNorm statistics); at realistic model sizes use 128/256-aligned tiles.
    out = transformer_encoder_forward(params, input_ids, attention_mask, num_heads)
    jax.block_until_ready(out)
    assert out.shape == (batch, seq, hidden_dim)
    print("KERNEL_OK")
</pallas_src>

<mosaic_0001>
module attributes {stable_mosaic.version = 11 : i64} {
  func.func @encoder_stack_kernel(%arg0: i32, %arg1: memref<1x8x32xf32, #tpu.memory_space<vmem>>, %arg2: memref<1x1x8xf32, #tpu.memory_space<vmem>>, %arg3: memref<2x4x32x8xbf16, #tpu.memory_space<vmem>>, %arg4: memref<2x4x32x8xbf16, #tpu.memory_space<vmem>>, %arg5: memref<2x4x32x8xbf16, #tpu.memory_space<vmem>>, %arg6: memref<2x4x1x8xf32, #tpu.memory_space<vmem>>, %arg7: memref<2x4x1x8xf32, #tpu.memory_space<vmem>>, %arg8: memref<2x4x1x8xf32, #tpu.memory_space<vmem>>, %arg9: memref<2x4x8x32xbf16, #tpu.memory_space<vmem>>, %arg10: memref<2x1x32xf32, #tpu.memory_space<vmem>>, %arg11: memref<2x1x32xf32, #tpu.memory_space<vmem>>, %arg12: memref<2x1x32xf32, #tpu.memory_space<vmem>>, %arg13: memref<2x32x128xbf16, #tpu.memory_space<vmem>>, %arg14: memref<2x1x128xf32, #tpu.memory_space<vmem>>, %arg15: memref<2x128x32xbf16, #tpu.memory_space<vmem>>, %arg16: memref<2x1x32xf32, #tpu.memory_space<vmem>>, %arg17: memref<2x1x32xf32, #tpu.memory_space<vmem>>, %arg18: memref<2x1x32xf32, #tpu.memory_space<vmem>>, %arg19: memref<1x32xf32, #tpu.memory_space<vmem>>, %arg20: memref<1x32xf32, #tpu.memory_space<vmem>>, %arg21: memref<1x8x32xf32, #tpu.memory_space<vmem>>) attributes {dimension_semantics = [#tpu.dimension_semantics<parallel>], iteration_bounds = array<i64: 2>, scalar_prefetch = 0 : i64, scratch_operands = 0 : i64, tpu.core_type = #tpu.core_type<tc>, window_params = [{transform_indices = @transform_0, window_bounds = array<i64: 1, 8, 32>}, {transform_indices = @transform_1, window_bounds = array<i64: 1, 1, 8>}, {pipeline_mode = #tpu.pipeline_mode<synchronous>, transform_indices = @transform_2, window_bounds = array<i64: 2, 4, 32, 8>}, {pipeline_mode = #tpu.pipeline_mode<synchronous>, transform_indices = @transform_3, window_bounds = array<i64: 2, 4, 32, 8>}, {pipeline_mode = #tpu.pipeline_mode<synchronous>, transform_indices = @transform_4, window_bounds = array<i64: 2, 4, 32, 8>}, {pipeline_mode = #tpu.pipeline_mode<synchronous>, transform_indices = @transform_5, window_bounds = array<i64: 2, 4, 1, 8>}, {pipeline_mode = #tpu.pipeline_mode<synchronous>, transform_indices = @transform_6, window_bounds = array<i64: 2, 4, 1, 8>}, {pipeline_mode = #tpu.pipeline_mode<synchronous>, transform_indices = @transform_7, window_bounds = array<i64: 2, 4, 1, 8>}, {pipeline_mode = #tpu.pipeline_mode<synchronous>, transform_indices = @transform_8, window_bounds = array<i64: 2, 4, 8, 32>}, {pipeline_mode = #tpu.pipeline_mode<synchronous>, transform_indices = @transform_9, window_bounds = array<i64: 2, 1, 32>}, {pipeline_mode = #tpu.pipeline_mode<synchronous>, transform_indices = @transform_10, window_bounds = array<i64: 2, 1, 32>}, {pipeline_mode = #tpu.pipeline_mode<synchronous>, transform_indices = @transform_11, window_bounds = array<i64: 2, 1, 32>}, {pipeline_mode = #tpu.pipeline_mode<synchronous>, transform_indices = @transform_12, window_bounds = array<i64: 2, 32, 128>}, {pipeline_mode = #tpu.pipeline_mode<synchronous>, transform_indices = @transform_13, window_bounds = array<i64: 2, 1, 128>}, {pipeline_mode = #tpu.pipeline_mode<synchronous>, transform_indices = @transform_14, window_bounds = array<i64: 2, 128, 32>}, {pipeline_mode = #tpu.pipeline_mode<synchronous>, transform_indices = @transform_15, window_bounds = array<i64: 2, 1, 32>}, {pipeline_mode = #tpu.pipeline_mode<synchronous>, transform_indices = @transform_16, window_bounds = array<i64: 2, 1, 32>}, {pipeline_mode = #tpu.pipeline_mode<synchronous>, transform_indices = @transform_17, window_bounds = array<i64: 2, 1, 32>}, {pipeline_mode = #tpu.pipeline_mode<synchronous>, transform_indices = @transform_18, window_bounds = array<i64: 1, 32>}, {pipeline_mode = #tpu.pipeline_mode<synchronous>, transform_indices = @transform_19, window_bounds = array<i64: 1, 32>}, {transform_indices = @transform_20, window_bounds = array<i64: 1, 8, 32>}]} {
    %c0 = arith.constant 0 : index
    %c0_0 = arith.constant 0 : index
    %c0_1 = arith.constant 0 : index
    %0 = vector.load %arg1[%c0, %c0_0, %c0_1] : memref<1x8x32xf32, #tpu.memory_space<vmem>>, vector<1x8x32xf32>
    %1 = vector.shape_cast %0 : vector<1x8x32xf32> to vector<8x32xf32>
    %c0_2 = arith.constant 0 : index
    %c0_3 = arith.constant 0 : index
    %c0_4 = arith.constant 0 : index
    %2 = vector.load %arg2[%c0_2, %c0_3, %c0_4] : memref<1x1x8xf32, #tpu.memory_space<vmem>>, vector<1x1x8xf32>
    %3 = vector.shape_cast %2 : vector<1x1x8xf32> to vector<1x8xf32>
    %4 = arith.truncf %1 : vector<8x32xf32> to vector<8x32xbf16>
    %5 = vector.shape_cast %4 : vector<8x32xbf16> to vector<1x8x32xbf16>
    %6 = vector.shape_cast %5 : vector<1x8x32xbf16> to vector<1x8x32xbf16>
    %7 = vector.broadcast %6 : vector<1x8x32xbf16> to vector<4x8x32xbf16>
    %c0_5 = arith.constant 0 : index
    %c0_6 = arith.constant 0 : index
    %c0_7 = arith.constant 0 : index
    %c0_8 = arith.constant 0 : index
    %8 = vector.load %arg3[%c0_5, %c0_6, %c0_7, %c0_8] : memref<2x4x32x8xbf16, #tpu.memory_space<vmem>>, vector<1x4x32x8xbf16>
    %9 = vector.shape_cast %8 : vector<1x4x32x8xbf16> to vector<4x32x8xbf16>
    "tpu.trace_start"() <{level = 10 : i32, message = "hsk,hkd->hsd"}> : () -> ()
    %cst = arith.constant dense<0.000000e+00> : vector<4x8x8xf32>
    %10 = tpu.matmul %7, %9, %cst {dimension_numbers = #tpu.dot_dimension_numbers<[2], [1], [1], [2], [0, 0, 0, 1, 1, 2], [0], [0]>} : vector<4x8x32xbf16>, vector<4x32x8xbf16>, vector<4x8x8xf32> -> vector<4x8x8xf32>
    "tpu.trace_stop"() : () -> ()
    %c0_9 = arith.constant 0 : index
    %c0_10 = arith.constant 0 : index
    %c0_11 = arith.constant 0 : index
    %c0_12 = arith.constant 0 : index
    %11 = vector.load %arg6[%c0_9, %c0_10, %c0_11, %c0_12] : memref<2x4x1x8xf32, #tpu.memory_space<vmem>>, vector<1x4x1x8xf32>
    %12 = vector.shape_cast %11 : vector<1x4x1x8xf32> to vector<4x1x8xf32>
    %13 = vector.broadcast %12 : vector<4x1x8xf32> to vector<4x8x8xf32>
    %14 = arith.addf %10, %13 : vector<4x8x8xf32>
    %c0_13 = arith.constant 0 : index
    %c0_14 = arith.constant 0 : index
    %c0_15 = arith.constant 0 : index
    %c0_16 = arith.constant 0 : index
    %15 = vector.load %arg4[%c0_13, %c0_14, %c0_15, %c0_16] : memref<2x4x32x8xbf16, #tpu.memory_space<vmem>>, vector<1x4x32x8xbf16>
    %16 = vector.shape_cast %15 : vector<1x4x32x8xbf16> to vector<4x32x8xbf16>
    "tpu.trace_start"() <{level = 10 : i32, message = "hsk,hkd->hsd"}> : () -> ()
    %cst_17 = arith.constant dense<0.000000e+00> : vector<4x8x8xf32>
    %17 = tpu.matmul %7, %16, %cst_17 {dimension_numbers = #tpu.dot_dimension_numbers<[2], [1], [1], [2], [0, 0, 0, 1, 1, 2], [0], [0]>} : vector<4x8x32xbf16>, vector<4x32x8xbf16>, vector<4x8x8xf32> -> vector<4x8x8xf32>
    "tpu.trace_stop"() : () -> ()
    %c0_18 = arith.constant 0 : index
    %c0_19 = arith.constant 0 : index
    %c0_20 = arith.constant 0 : index
    %c0_21 = arith.constant 0 : index
    %18 = vector.load %arg7[%c0_18, %c0_19, %c0_20, %c0_21] : memref<2x4x1x8xf32, #tpu.memory_space<vmem>>, vector<1x4x1x8xf32>
    %19 = vector.shape_cast %18 : vector<1x4x1x8xf32> to vector<4x1x8xf32>
    %20 = vector.broadcast %19 : vector<4x1x8xf32> to vector<4x8x8xf32>
    %21 = arith.addf %17, %20 : vector<4x8x8xf32>
    %c0_22 = arith.constant 0 : index
    %c0_23 = arith.constant 0 : index
    %c0_24 = arith.constant 0 : index
    %c0_25 = arith.constant 0 : index
    %22 = vector.load %arg5[%c0_22, %c0_23, %c0_24, %c0_25] : memref<2x4x32x8xbf16, #tpu.memory_space<vmem>>, vector<1x4x32x8xbf16>
    %23 = vector.shape_cast %22 : vector<1x4x32x8xbf16> to vector<4x32x8xbf16>
    "tpu.trace_start"() <{level = 10 : i32, message = "hsk,hkd->hsd"}> : () -> ()
    %cst_26 = arith.constant dense<0.000000e+00> : vector<4x8x8xf32>
    %24 = tpu.matmul %7, %23, %cst_26 {dimension_numbers = #tpu.dot_dimension_numbers<[2], [1], [1], [2], [0, 0, 0, 1, 1, 2], [0], [0]>} : vector<4x8x32xbf16>, vector<4x32x8xbf16>, vector<4x8x8xf32> -> vector<4x8x8xf32>
    "tpu.trace_stop"() : () -> ()
    %c0_27 = arith.constant 0 : index
    %c0_28 = arith.constant 0 : index
    %c0_29 = arith.constant 0 : index
    %c0_30 = arith.constant 0 : index
    %25 = vector.load %arg8[%c0_27, %c0_28, %c0_29, %c0_30] : memref<2x4x1x8xf32, #tpu.memory_space<vmem>>, vector<1x4x1x8xf32>
    %26 = vector.shape_cast %25 : vector<1x4x1x8xf32> to vector<4x1x8xf32>
    %27 = vector.broadcast %26 : vector<4x1x8xf32> to vector<4x8x8xf32>
    %28 = arith.addf %24, %27 : vector<4x8x8xf32>
    %29 = arith.truncf %14 : vector<4x8x8xf32> to vector<4x8x8xbf16>
    %30 = arith.truncf %21 : vector<4x8x8xf32> to vector<4x8x8xbf16>
    "tpu.trace_start"() <{level = 10 : i32, message = "hqd,hkd->hqk"}> : () -> ()
    %cst_31 = arith.constant dense<0.000000e+00> : vector<4x8x8xf32>
    %31 = tpu.matmul %29, %30, %cst_31 {dimension_numbers = #tpu.dot_dimension_numbers<[2], [2], [1], [1], [0, 0, 0, 1, 1, 1], [0], [0]>} : vector<4x8x8xbf16>, vector<4x8x8xbf16>, vector<4x8x8xf32> -> vector<4x8x8xf32>
    "tpu.trace_stop"() : () -> ()
    %cst_32 = arith.constant 0.353553385 : f32
    %32 = vector.broadcast %cst_32 : f32 to vector<4x8x8xf32>
    %33 = arith.mulf %31, %32 : vector<4x8x8xf32>
    %34 = vector.shape_cast %3 : vector<1x8xf32> to vector<1x1x8xf32>
    %35 = vector.broadcast %34 : vector<1x1x8xf32> to vector<4x8x8xf32>
    %36 = arith.addf %33, %35 : vector<4x8x8xf32>
    %cst_33 = arith.constant dense<0xFF800000> : vector<4x8xf32>
    %37 = vector.multi_reduction <maximumf>, %36, %cst_33 [2] : vector<4x8x8xf32> to vector<4x8xf32>
    %38 = vector.shape_cast %37 : vector<4x8xf32> to vector<4x8x1xf32>
    %39 = vector.broadcast %38 : vector<4x8x1xf32> to vector<4x8x8xf32>
    %40 = arith.subf %36, %39 : vector<4x8x8xf32>
    %41 = math.exp %40 : vector<4x8x8xf32>
    %cst_34 = arith.constant dense<0.000000e+00> : vector<4x8xf32>
    %42 = vector.multi_reduction <add>, %41, %cst_34 [2] : vector<4x8x8xf32> to vector<4x8xf32>
    %43 = vector.shape_cast %42 : vector<4x8xf32> to vector<4x8x1xf32>
    %44 = tpu.reciprocal %43 {approx = true} : vector<4x8x1xf32> -> vector<4x8x1xf32>
    %45 = vector.broadcast %44 : vector<4x8x1xf32> to vector<4x8x8xf32>
    %46 = arith.mulf %41, %45 : vector<4x8x8xf32>
    %47 = arith.truncf %46 : vector<4x8x8xf32> to vector<4x8x8xbf16>
    %48 = arith.truncf %28 : vector<4x8x8xf32> to vector<4x8x8xbf16>
    "tpu.trace_start"() <{level = 10 : i32, message = "hqk,hkd->hqd"}> : () -> ()
    %cst_35 = arith.constant dense<0.000000e+00> : vector<4x8x8xf32>
    %49 = tpu.matmul %47, %48, %cst_35 {dimension_numbers = #tpu.dot_dimension_numbers<[2], [1], [1], [2], [0, 0, 0, 1, 1, 2], [0], [0]>} : vector<4x8x8xbf16>, vector<4x8x8xbf16>, vector<4x8x8xf32> -> vector<4x8x8xf32>
    "tpu.trace_stop"() : () -> ()
    %50 = arith.truncf %49 : vector<4x8x8xf32> to vector<4x8x8xbf16>
    %c0_36 = arith.constant 0 : index
    %c0_37 = arith.constant 0 : index
    %c0_38 = arith.constant 0 : index
    %c0_39 = arith.constant 0 : index
    %51 = vector.load %arg9[%c0_36, %c0_37, %c0_38, %c0_39] : memref<2x4x8x32xbf16, #tpu.memory_space<vmem>>, vector<1x4x8x32xbf16>
    %52 = vector.shape_cast %51 : vector<1x4x8x32xbf16> to vector<4x8x32xbf16>
    "tpu.trace_start"() <{level = 10 : i32, message = "hqd,hdo->hqo"}> : () -> ()
    %cst_40 = arith.constant dense<0.000000e+00> : vector<4x8x32xf32>
    %53 = tpu.matmul %50, %52, %cst_40 {dimension_numbers = #tpu.dot_dimension_numbers<[2], [1], [1], [2], [0, 0, 0, 1, 1, 2], [0], [0]>} : vector<4x8x8xbf16>, vector<4x8x32xbf16>, vector<4x8x32xf32> -> vector<4x8x32xf32>
    "tpu.trace_stop"() : () -> ()
    %cst_41 = arith.constant dense<0.000000e+00> : vector<8x32xf32>
    %54 = vector.multi_reduction <add>, %53, %cst_41 [0] : vector<4x8x32xf32> to vector<8x32xf32>
    %c0_42 = arith.constant 0 : index
    %c0_43 = arith.constant 0 : index
    %c0_44 = arith.constant 0 : index
    %55 = vector.load %arg10[%c0_42, %c0_43, %c0_44] : memref<2x1x32xf32, #tpu.memory_space<vmem>>, vector<1x1x32xf32>
    %56 = vector.shape_cast %55 : vector<1x1x32xf32> to vector<1x32xf32>
    %57 = vector.broadcast %56 : vector<1x32xf32> to vector<8x32xf32>
    %58 = arith.addf %54, %57 : vector<8x32xf32>
    %59 = arith.addf %1, %58 : vector<8x32xf32>
    %c0_45 = arith.constant 0 : index
    %c0_46 = arith.constant 0 : index
    %c0_47 = arith.constant 0 : index
    %60 = vector.load %arg11[%c0_45, %c0_46, %c0_47] : memref<2x1x32xf32, #tpu.memory_space<vmem>>, vector<1x1x32xf32>
    %61 = vector.shape_cast %60 : vector<1x1x32xf32> to vector<1x32xf32>
    %c0_48 = arith.constant 0 : index
    %c0_49 = arith.constant 0 : index
    %c0_50 = arith.constant 0 : index
    %62 = vector.load %arg12[%c0_48, %c0_49, %c0_50] : memref<2x1x32xf32, #tpu.memory_space<vmem>>, vector<1x1x32xf32>
    %63 = vector.shape_cast %62 : vector<1x1x32xf32> to vector<1x32xf32>
    %cst_51 = arith.constant dense<0.000000e+00> : vector<8xf32>
    %64 = vector.multi_reduction <add>, %59, %cst_51 [1] : vector<8x32xf32> to vector<8xf32>
    %65 = vector.shape_cast %64 : vector<8xf32> to vector<8x1xf32>
    %cst_52 = arith.constant 3.200000e+01 : f32
    %66 = vector.broadcast %cst_52 : f32 to vector<8x1xf32>
    %67 = arith.divf %65, %66 : vector<8x1xf32>
    %68 = vector.broadcast %67 : vector<8x1xf32> to vector<8x32xf32>
    %69 = arith.subf %59, %68 : vector<8x32xf32>
    %70 = arith.mulf %69, %69 : vector<8x32xf32>
    %cst_53 = arith.constant dense<0.000000e+00> : vector<8xf32>
    %71 = vector.multi_reduction <add>, %70, %cst_53 [1] : vector<8x32xf32> to vector<8xf32>
    %72 = vector.shape_cast %71 : vector<8xf32> to vector<8x1xf32>
    %cst_54 = arith.constant 3.200000e+01 : f32
    %73 = vector.broadcast %cst_54 : f32 to vector<8x1xf32>
    %74 = arith.divf %72, %73 : vector<8x1xf32>
    %75 = vector.broadcast %67 : vector<8x1xf32> to vector<8x32xf32>
    %76 = arith.subf %59, %75 : vector<8x32xf32>
    %cst_55 = arith.constant 9.99999974E-6 : f32
    %77 = vector.broadcast %cst_55 : f32 to vector<8x1xf32>
    %78 = arith.addf %74, %77 : vector<8x1xf32>
    %79 = math.rsqrt %78 : vector<8x1xf32>
    %80 = vector.broadcast %79 : vector<8x1xf32> to vector<8x32xf32>
    %81 = arith.mulf %76, %80 : vector<8x32xf32>
    %82 = vector.broadcast %61 : vector<1x32xf32> to vector<8x32xf32>
    %83 = arith.mulf %81, %82 : vector<8x32xf32>
    %84 = vector.broadcast %63 : vector<1x32xf32> to vector<8x32xf32>
    %85 = arith.addf %83, %84 : vector<8x32xf32>
    %86 = arith.truncf %85 : vector<8x32xf32> to vector<8x32xbf16>
    %c0_56 = arith.constant 0 : index
    %c0_57 = arith.constant 0 : index
    %c0_58 = arith.constant 0 : index
    %87 = vector.load %arg13[%c0_56, %c0_57, %c0_58] : memref<2x32x128xbf16, #tpu.memory_space<vmem>>, vector<1x32x128xbf16>
    %88 = vector.shape_cast %87 : vector<1x32x128xbf16> to vector<32x128xbf16>
    %cst_59 = arith.constant dense<0.000000e+00> : vector<8x128xf32>
    %89 = tpu.matmul %86, %88, %cst_59 {dimension_numbers = #tpu.dot_dimension_numbers<[1], [0], [0], [1], [0, 0, 1, 1], [], []>} : vector<8x32xbf16>, vector<32x128xbf16>, vector<8x128xf32> -> vector<8x128xf32>
    %c0_60 = arith.constant 0 : index
    %c0_61 = arith.constant 0 : index
    %c0_62 = arith.constant 0 : index
    %90 = vector.load %arg14[%c0_60, %c0_61, %c0_62] : memref<2x1x128xf32, #tpu.memory_space<vmem>>, vector<1x1x128xf32>
    %91 = vector.shape_cast %90 : vector<1x1x128xf32> to vector<1x128xf32>
    %92 = vector.broadcast %91 : vector<1x128xf32> to vector<8x128xf32>
    %93 = arith.addf %89, %92 : vector<8x128xf32>
    %cst_63 = arith.constant 0.000000e+00 : f32
    %94 = vector.broadcast %cst_63 : f32 to vector<8x128xf32>
    %95 = arith.maximumf %93, %94 : vector<8x128xf32>
    %96 = arith.truncf %95 : vector<8x128xf32> to vector<8x128xbf16>
    %c0_64 = arith.constant 0 : index
    %c0_65 = arith.constant 0 : index
    %c0_66 = arith.constant 0 : index
    %97 = vector.load %arg15[%c0_64, %c0_65, %c0_66] : memref<2x128x32xbf16, #tpu.memory_space<vmem>>, vector<1x128x32xbf16>
    %98 = vector.shape_cast %97 : vector<1x128x32xbf16> to vector<128x32xbf16>
    %cst_67 = arith.constant dense<0.000000e+00> : vector<8x32xf32>
    %99 = tpu.matmul %96, %98, %cst_67 {dimension_numbers = #tpu.dot_dimension_numbers<[1], [0], [0], [1], [0, 0, 1, 1], [], []>} : vector<8x128xbf16>, vector<128x32xbf16>, vector<8x32xf32> -> vector<8x32xf32>
    %c0_68 = arith.constant 0 : index
    %c0_69 = arith.constant 0 : index
    %c0_70 = arith.constant 0 : index
    %100 = vector.load %arg16[%c0_68, %c0_69, %c0_70] : memref<2x1x32xf32, #tpu.memory_space<vmem>>, vector<1x1x32xf32>
    %101 = vector.shape_cast %100 : vector<1x1x32xf32> to vector<1x32xf32>
    %102 = vector.broadcast %101 : vector<1x32xf32> to vector<8x32xf32>
    %103 = arith.addf %99, %102 : vector<8x32xf32>
    %104 = arith.addf %85, %103 : vector<8x32xf32>
    %c0_71 = arith.constant 0 : index
    %c0_72 = arith.constant 0 : index
    %c0_73 = arith.constant 0 : index
    %105 = vector.load %arg17[%c0_71, %c0_72, %c0_73] : memref<2x1x32xf32, #tpu.memory_space<vmem>>, vector<1x1x32xf32>
    %106 = vector.shape_cast %105 : vector<1x1x32xf32> to vector<1x32xf32>
    %c0_74 = arith.constant 0 : index
    %c0_75 = arith.constant 0 : index
    %c0_76 = arith.constant 0 : index
    %107 = vector.load %arg18[%c0_74, %c0_75, %c0_76] : memref<2x1x32xf32, #tpu.memory_space<vmem>>, vector<1x1x32xf32>
    %108 = vector.shape_cast %107 : vector<1x1x32xf32> to vector<1x32xf32>
    %cst_77 = arith.constant dense<0.000000e+00> : vector<8xf32>
    %109 = vector.multi_reduction <add>, %104, %cst_77 [1] : vector<8x32xf32> to vector<8xf32>
    %110 = vector.shape_cast %109 : vector<8xf32> to vector<8x1xf32>
    %cst_78 = arith.constant 3.200000e+01 : f32
    %111 = vector.broadcast %cst_78 : f32 to vector<8x1xf32>
    %112 = arith.divf %110, %111 : vector<8x1xf32>
    %113 = vector.broadcast %112 : vector<8x1xf32> to vector<8x32xf32>
    %114 = arith.subf %104, %113 : vector<8x32xf32>
    %115 = arith.mulf %114, %114 : vector<8x32xf32>
    %cst_79 = arith.constant dense<0.000000e+00> : vector<8xf32>
    %116 = vector.multi_reduction <add>, %115, %cst_79 [1] : vector<8x32xf32> to vector<8xf32>
    %117 = vector.shape_cast %116 : vector<8xf32> to vector<8x1xf32>
    %cst_80 = arith.constant 3.200000e+01 : f32
    %118 = vector.broadcast %cst_80 : f32 to vector<8x1xf32>
    %119 = arith.divf %117, %118 : vector<8x1xf32>
    %120 = vector.broadcast %112 : vector<8x1xf32> to vector<8x32xf32>
    %121 = arith.subf %104, %120 : vector<8x32xf32>
    %cst_81 = arith.constant 9.99999974E-6 : f32
    %122 = vector.broadcast %cst_81 : f32 to vector<8x1xf32>
    %123 = arith.addf %119, %122 : vector<8x1xf32>
    %124 = math.rsqrt %123 : vector<8x1xf32>
    %125 = vector.broadcast %124 : vector<8x1xf32> to vector<8x32xf32>
    %126 = arith.mulf %121, %125 : vector<8x32xf32>
    %127 = vector.broadcast %106 : vector<1x32xf32> to vector<8x32xf32>
    %128 = arith.mulf %126, %127 : vector<8x32xf32>
    %129 = vector.broadcast %108 : vector<1x32xf32> to vector<8x32xf32>
    %130 = arith.addf %128, %129 : vector<8x32xf32>
    %131 = arith.truncf %130 : vector<8x32xf32> to vector<8x32xbf16>
    %132 = vector.shape_cast %131 : vector<8x32xbf16> to vector<1x8x32xbf16>
    %133 = vector.shape_cast %132 : vector<1x8x32xbf16> to vector<1x8x32xbf16>
    %134 = vector.broadcast %133 : vector<1x8x32xbf16> to vector<4x8x32xbf16>
    %c1 = arith.constant 1 : index
    %c0_82 = arith.constant 0 : index
    %c0_83 = arith.constant 0 : index
    %c0_84 = arith.constant 0 : index
    %135 = vector.load %arg3[%c1, %c0_82, %c0_83, %c0_84] : memref<2x4x32x8xbf16, #tpu.memory_space<vmem>>, vector<1x4x32x8xbf16>
    %136 = vector.shape_cast %135 : vector<1x4x32x8xbf16> to vector<4x32x8xbf16>
    "tpu.trace_start"() <{level = 10 : i32, message = "hsk,hkd->hsd"}> : () -> ()
    %cst_85 = arith.constant dense<0.000000e+00> : vector<4x8x8xf32>
    %137 = tpu.matmul %134, %136, %cst_85 {dimension_numbers = #tpu.dot_dimension_numbers<[2], [1], [1], [2], [0, 0, 0, 1, 1, 2], [0], [0]>} : vector<4x8x32xbf16>, vector<4x32x8xbf16>, vector<4x8x8xf32> -> vector<4x8x8xf32>
    "tpu.trace_stop"() : () -> ()
    %c1_86 = arith.constant 1 : index
    %c0_87 = arith.constant 0 : index
    %c0_88 = arith.constant 0 : index
    %c0_89 = arith.constant 0 : index
    %138 = vector.load %arg6[%c1_86, %c0_87, %c0_88, %c0_89] : memref<2x4x1x8xf32, #tpu.memory_space<vmem>>, vector<1x4x1x8xf32>
    %139 = vector.shape_cast %138 : vector<1x4x1x8xf32> to vector<4x1x8xf32>
    %140 = vector.broadcast %139 : vector<4x1x8xf32> to vector<4x8x8xf32>
    %141 = arith.addf %137, %140 : vector<4x8x8xf32>
    %c1_90 = arith.constant 1 : index
    %c0_91 = arith.constant 0 : index
    %c0_92 = arith.constant 0 : index
    %c0_93 = arith.constant 0 : index
    %142 = vector.load %arg4[%c1_90, %c0_91, %c0_92, %c0_93] : memref<2x4x32x8xbf16, #tpu.memory_space<vmem>>, vector<1x4x32x8xbf16>
    %143 = vector.shape_cast %142 : vector<1x4x32x8xbf16> to vector<4x32x8xbf16>
    "tpu.trace_start"() <{level = 10 : i32, message = "hsk,hkd->hsd"}> : () -> ()
    %cst_94 = arith.constant dense<0.000000e+00> : vector<4x8x8xf32>
    %144 = tpu.matmul %134, %143, %cst_94 {dimension_numbers = #tpu.dot_dimension_numbers<[2], [1], [1], [2], [0, 0, 0, 1, 1, 2], [0], [0]>} : vector<4x8x32xbf16>, vector<4x32x8xbf16>, vector<4x8x8xf32> -> vector<4x8x8xf32>
    "tpu.trace_stop"() : () -> ()
    %c1_95 = arith.constant 1 : index
    %c0_96 = arith.constant 0 : index
    %c0_97 = arith.constant 0 : index
    %c0_98 = arith.constant 0 : index
    %145 = vector.load %arg7[%c1_95, %c0_96, %c0_97, %c0_98] : memref<2x4x1x8xf32, #tpu.memory_space<vmem>>, vector<1x4x1x8xf32>
    %146 = vector.shape_cast %145 : vector<1x4x1x8xf32> to vector<4x1x8xf32>
    %147 = vector.broadcast %146 : vector<4x1x8xf32> to vector<4x8x8xf32>
    %148 = arith.addf %144, %147 : vector<4x8x8xf32>
    %c1_99 = arith.constant 1 : index
    %c0_100 = arith.constant 0 : index
    %c0_101 = arith.constant 0 : index
    %c0_102 = arith.constant 0 : index
    %149 = vector.load %arg5[%c1_99, %c0_100, %c0_101, %c0_102] : memref<2x4x32x8xbf16, #tpu.memory_space<vmem>>, vector<1x4x32x8xbf16>
    %150 = vector.shape_cast %149 : vector<1x4x32x8xbf16> to vector<4x32x8xbf16>
    "tpu.trace_start"() <{level = 10 : i32, message = "hsk,hkd->hsd"}> : () -> ()
    %cst_103 = arith.constant dense<0.000000e+00> : vector<4x8x8xf32>
    %151 = tpu.matmul %134, %150, %cst_103 {dimension_numbers = #tpu.dot_dimension_numbers<[2], [1], [1], [2], [0, 0, 0, 1, 1, 2], [0], [0]>} : vector<4x8x32xbf16>, vector<4x32x8xbf16>, vector<4x8x8xf32> -> vector<4x8x8xf32>
    "tpu.trace_stop"() : () -> ()
    %c1_104 = arith.constant 1 : index
    %c0_105 = arith.constant 0 : index
    %c0_106 = arith.constant 0 : index
    %c0_107 = arith.constant 0 : index
    %152 = vector.load %arg8[%c1_104, %c0_105, %c0_106, %c0_107] : memref<2x4x1x8xf32, #tpu.memory_space<vmem>>, vector<1x4x1x8xf32>
    %153 = vector.shape_cast %152 : vector<1x4x1x8xf32> to vector<4x1x8xf32>
    %154 = vector.broadcast %153 : vector<4x1x8xf32> to vector<4x8x8xf32>
    %155 = arith.addf %151, %154 : vector<4x8x8xf32>
    %156 = arith.truncf %141 : vector<4x8x8xf32> to vector<4x8x8xbf16>
    %157 = arith.truncf %148 : vector<4x8x8xf32> to vector<4x8x8xbf16>
    "tpu.trace_start"() <{level = 10 : i32, message = "hqd,hkd->hqk"}> : () -> ()
    %cst_108 = arith.constant dense<0.000000e+00> : vector<4x8x8xf32>
    %158 = tpu.matmul %156, %157, %cst_108 {dimension_numbers = #tpu.dot_dimension_numbers<[2], [2], [1], [1], [0, 0, 0, 1, 1, 1], [0], [0]>} : vector<4x8x8xbf16>, vector<4x8x8xbf16>, vector<4x8x8xf32> -> vector<4x8x8xf32>
    "tpu.trace_stop"() : () -> ()
    %cst_109 = arith.constant 0.353553385 : f32
    %159 = vector.broadcast %cst_109 : f32 to vector<4x8x8xf32>
    %160 = arith.mulf %158, %159 : vector<4x8x8xf32>
    %161 = vector.shape_cast %3 : vector<1x8xf32> to vector<1x1x8xf32>
    %162 = vector.broadcast %161 : vector<1x1x8xf32> to vector<4x8x8xf32>
    %163 = arith.addf %160, %162 : vector<4x8x8xf32>
    %cst_110 = arith.constant dense<0xFF800000> : vector<4x8xf32>
    %164 = vector.multi_reduction <maximumf>, %163, %cst_110 [2] : vector<4x8x8xf32> to vector<4x8xf32>
    %165 = vector.shape_cast %164 : vector<4x8xf32> to vector<4x8x1xf32>
    %166 = vector.broadcast %165 : vector<4x8x1xf32> to vector<4x8x8xf32>
    %167 = arith.subf %163, %166 : vector<4x8x8xf32>
    %168 = math.exp %167 : vector<4x8x8xf32>
    %cst_111 = arith.constant dense<0.000000e+00> : vector<4x8xf32>
    %169 = vector.multi_reduction <add>, %168, %cst_111 [2] : vector<4x8x8xf32> to vector<4x8xf32>
    %170 = vector.shape_cast %169 : vector<4x8xf32> to vector<4x8x1xf32>
    %171 = tpu.reciprocal %170 {approx = true} : vector<4x8x1xf32> -> vector<4x8x1xf32>
    %172 = vector.broadcast %171 : vector<4x8x1xf32> to vector<4x8x8xf32>
    %173 = arith.mulf %168, %172 : vector<4x8x8xf32>
    %174 = arith.truncf %173 : vector<4x8x8xf32> to vector<4x8x8xbf16>
    %175 = arith.truncf %155 : vector<4x8x8xf32> to vector<4x8x8xbf16>
    "tpu.trace_start"() <{level = 10 : i32, message = "hqk,hkd->hqd"}> : () -> ()
    %cst_112 = arith.constant dense<0.000000e+00> : vector<4x8x8xf32>
    %176 = tpu.matmul %174, %175, %cst_112 {dimension_numbers = #tpu.dot_dimension_numbers<[2], [1], [1], [2], [0, 0, 0, 1, 1, 2], [0], [0]>} : vector<4x8x8xbf16>, vector<4x8x8xbf16>, vector<4x8x8xf32> -> vector<4x8x8xf32>
    "tpu.trace_stop"() : () -> ()
    %177 = arith.truncf %176 : vector<4x8x8xf32> to vector<4x8x8xbf16>
    %c1_113 = arith.constant 1 : index
    %c0_114 = arith.constant 0 : index
    %c0_115 = arith.constant 0 : index
    %c0_116 = arith.constant 0 : index
    %178 = vector.load %arg9[%c1_113, %c0_114, %c0_115, %c0_116] : memref<2x4x8x32xbf16, #tpu.memory_space<vmem>>, vector<1x4x8x32xbf16>
    %179 = vector.shape_cast %178 : vector<1x4x8x32xbf16> to vector<4x8x32xbf16>
    "tpu.trace_start"() <{level = 10 : i32, message = "hqd,hdo->hqo"}> : () -> ()
    %cst_117 = arith.constant dense<0.000000e+00> : vector<4x8x32xf32>
    %180 = tpu.matmul %177, %179, %cst_117 {dimension_numbers = #tpu.dot_dimension_numbers<[2], [1], [1], [2], [0, 0, 0, 1, 1, 2], [0], [0]>} : vector<4x8x8xbf16>, vector<4x8x32xbf16>, vector<4x8x32xf32> -> vector<4x8x32xf32>
    "tpu.trace_stop"() : () -> ()
    %cst_118 = arith.constant dense<0.000000e+00> : vector<8x32xf32>
    %181 = vector.multi_reduction <add>, %180, %cst_118 [0] : vector<4x8x32xf32> to vector<8x32xf32>
    %c1_119 = arith.constant 1 : index
    %c0_120 = arith.constant 0 : index
    %c0_121 = arith.constant 0 : index
    %182 = vector.load %arg10[%c1_119, %c0_120, %c0_121] : memref<2x1x32xf32, #tpu.memory_space<vmem>>, vector<1x1x32xf32>
    %183 = vector.shape_cast %182 : vector<1x1x32xf32> to vector<1x32xf32>
    %184 = vector.broadcast %183 : vector<1x32xf32> to vector<8x32xf32>
    %185 = arith.addf %181, %184 : vector<8x32xf32>
    %186 = arith.addf %130, %185 : vector<8x32xf32>
    %c1_122 = arith.constant 1 : index
    %c0_123 = arith.constant 0 : index
    %c0_124 = arith.constant 0 : index
    %187 = vector.load %arg11[%c1_122, %c0_123, %c0_124] : memref<2x1x32xf32, #tpu.memory_space<vmem>>, vector<1x1x32xf32>
    %188 = vector.shape_cast %187 : vector<1x1x32xf32> to vector<1x32xf32>
    %c1_125 = arith.constant 1 : index
    %c0_126 = arith.constant 0 : index
    %c0_127 = arith.constant 0 : index
    %189 = vector.load %arg12[%c1_125, %c0_126, %c0_127] : memref<2x1x32xf32, #tpu.memory_space<vmem>>, vector<1x1x32xf32>
    %190 = vector.shape_cast %189 : vector<1x1x32xf32> to vector<1x32xf32>
    %cst_128 = arith.constant dense<0.000000e+00> : vector<8xf32>
    %191 = vector.multi_reduction <add>, %186, %cst_128 [1] : vector<8x32xf32> to vector<8xf32>
    %192 = vector.shape_cast %191 : vector<8xf32> to vector<8x1xf32>
    %cst_129 = arith.constant 3.200000e+01 : f32
    %193 = vector.broadcast %cst_129 : f32 to vector<8x1xf32>
    %194 = arith.divf %192, %193 : vector<8x1xf32>
    %195 = vector.broadcast %194 : vector<8x1xf32> to vector<8x32xf32>
    %196 = arith.subf %186, %195 : vector<8x32xf32>
    %197 = arith.mulf %196, %196 : vector<8x32xf32>
    %cst_130 = arith.constant dense<0.000000e+00> : vector<8xf32>
    %198 = vector.multi_reduction <add>, %197, %cst_130 [1] : vector<8x32xf32> to vector<8xf32>
    %199 = vector.shape_cast %198 : vector<8xf32> to vector<8x1xf32>
    %cst_131 = arith.constant 3.200000e+01 : f32
    %200 = vector.broadcast %cst_131 : f32 to vector<8x1xf32>
    %201 = arith.divf %199, %200 : vector<8x1xf32>
    %202 = vector.broadcast %194 : vector<8x1xf32> to vector<8x32xf32>
    %203 = arith.subf %186, %202 : vector<8x32xf32>
    %cst_132 = arith.constant 9.99999974E-6 : f32
    %204 = vector.broadcast %cst_132 : f32 to vector<8x1xf32>
    %205 = arith.addf %201, %204 : vector<8x1xf32>
    %206 = math.rsqrt %205 : vector<8x1xf32>
    %207 = vector.broadcast %206 : vector<8x1xf32> to vector<8x32xf32>
    %208 = arith.mulf %203, %207 : vector<8x32xf32>
    %209 = vector.broadcast %188 : vector<1x32xf32> to vector<8x32xf32>
    %210 = arith.mulf %208, %209 : vector<8x32xf32>
    %211 = vector.broadcast %190 : vector<1x32xf32> to vector<8x32xf32>
    %212 = arith.addf %210, %211 : vector<8x32xf32>
    %213 = arith.truncf %212 : vector<8x32xf32> to vector<8x32xbf16>
    %c1_133 = arith.constant 1 : index
    %c0_134 = arith.constant 0 : index
    %c0_135 = arith.constant 0 : index
    %214 = vector.load %arg13[%c1_133, %c0_134, %c0_135] : memref<2x32x128xbf16, #tpu.memory_space<vmem>>, vector<1x32x128xbf16>
    %215 = vector.shape_cast %214 : vector<1x32x128xbf16> to vector<32x128xbf16>
    %cst_136 = arith.constant dense<0.000000e+00> : vector<8x128xf32>
    %216 = tpu.matmul %213, %215, %cst_136 {dimension_numbers = #tpu.dot_dimension_numbers<[1], [0], [0], [1], [0, 0, 1, 1], [], []>} : vector<8x32xbf16>, vector<32x128xbf16>, vector<8x128xf32> -> vector<8x128xf32>
    %c1_137 = arith.constant 1 : index
    %c0_138 = arith.constant 0 : index
    %c0_139 = arith.constant 0 : index
    %217 = vector.load %arg14[%c1_137, %c0_138, %c0_139] : memref<2x1x128xf32, #tpu.memory_space<vmem>>, vector<1x1x128xf32>
    %218 = vector.shape_cast %217 : vector<1x1x128xf32> to vector<1x128xf32>
    %219 = vector.broadcast %218 : vector<1x128xf32> to vector<8x128xf32>
    %220 = arith.addf %216, %219 : vector<8x128xf32>
    %cst_140 = arith.constant 0.000000e+00 : f32
    %221 = vector.broadcast %cst_140 : f32 to vector<8x128xf32>
    %222 = arith.maximumf %220, %221 : vector<8x128xf32>
    %223 = arith.truncf %222 : vector<8x128xf32> to vector<8x128xbf16>
    %c1_141 = arith.constant 1 : index
    %c0_142 = arith.constant 0 : index
    %c0_143 = arith.constant 0 : index
    %224 = vector.load %arg15[%c1_141, %c0_142, %c0_143] : memref<2x128x32xbf16, #tpu.memory_space<vmem>>, vector<1x128x32xbf16>
    %225 = vector.shape_cast %224 : vector<1x128x32xbf16> to vector<128x32xbf16>
    %cst_144 = arith.constant dense<0.000000e+00> : vector<8x32xf32>
    %226 = tpu.matmul %223, %225, %cst_144 {dimension_numbers = #tpu.dot_dimension_numbers<[1], [0], [0], [1], [0, 0, 1, 1], [], []>} : vector<8x128xbf16>, vector<128x32xbf16>, vector<8x32xf32> -> vector<8x32xf32>
    %c1_145 = arith.constant 1 : index
    %c0_146 = arith.constant 0 : index
    %c0_147 = arith.constant 0 : index
    %227 = vector.load %arg16[%c1_145, %c0_146, %c0_147] : memref<2x1x32xf32, #tpu.memory_space<vmem>>, vector<1x1x32xf32>
    %228 = vector.shape_cast %227 : vector<1x1x32xf32> to vector<1x32xf32>
    %229 = vector.broadcast %228 : vector<1x32xf32> to vector<8x32xf32>
    %230 = arith.addf %226, %229 : vector<8x32xf32>
    %231 = arith.addf %212, %230 : vector<8x32xf32>
    %c1_148 = arith.constant 1 : index
    %c0_149 = arith.constant 0 : index
    %c0_150 = arith.constant 0 : index
    %232 = vector.load %arg17[%c1_148, %c0_149, %c0_150] : memref<2x1x32xf32, #tpu.memory_space<vmem>>, vector<1x1x32xf32>
    %233 = vector.shape_cast %232 : vector<1x1x32xf32> to vector<1x32xf32>
    %c1_151 = arith.constant 1 : index
    %c0_152 = arith.constant 0 : index
    %c0_153 = arith.constant 0 : index
    %234 = vector.load %arg18[%c1_151, %c0_152, %c0_153] : memref<2x1x32xf32, #tpu.memory_space<vmem>>, vector<1x1x32xf32>
    %235 = vector.shape_cast %234 : vector<1x1x32xf32> to vector<1x32xf32>
    %cst_154 = arith.constant dense<0.000000e+00> : vector<8xf32>
    %236 = vector.multi_reduction <add>, %231, %cst_154 [1] : vector<8x32xf32> to vector<8xf32>
    %237 = vector.shape_cast %236 : vector<8xf32> to vector<8x1xf32>
    %cst_155 = arith.constant 3.200000e+01 : f32
    %238 = vector.broadcast %cst_155 : f32 to vector<8x1xf32>
    %239 = arith.divf %237, %238 : vector<8x1xf32>
    %240 = vector.broadcast %239 : vector<8x1xf32> to vector<8x32xf32>
    %241 = arith.subf %231, %240 : vector<8x32xf32>
    %242 = arith.mulf %241, %241 : vector<8x32xf32>
    %cst_156 = arith.constant dense<0.000000e+00> : vector<8xf32>
    %243 = vector.multi_reduction <add>, %242, %cst_156 [1] : vector<8x32xf32> to vector<8xf32>
    %244 = vector.shape_cast %243 : vector<8xf32> to vector<8x1xf32>
    %cst_157 = arith.constant 3.200000e+01 : f32
    %245 = vector.broadcast %cst_157 : f32 to vector<8x1xf32>
    %246 = arith.divf %244, %245 : vector<8x1xf32>
    %247 = vector.broadcast %239 : vector<8x1xf32> to vector<8x32xf32>
    %248 = arith.subf %231, %247 : vector<8x32xf32>
    %cst_158 = arith.constant 9.99999974E-6 : f32
    %249 = vector.broadcast %cst_158 : f32 to vector<8x1xf32>
    %250 = arith.addf %246, %249 : vector<8x1xf32>
    %251 = math.rsqrt %250 : vector<8x1xf32>
    %252 = vector.broadcast %251 : vector<8x1xf32> to vector<8x32xf32>
    %253 = arith.mulf %248, %252 : vector<8x32xf32>
    %254 = vector.broadcast %233 : vector<1x32xf32> to vector<8x32xf32>
    %255 = arith.mulf %253, %254 : vector<8x32xf32>
    %256 = vector.broadcast %235 : vector<1x32xf32> to vector<8x32xf32>
    %257 = arith.addf %255, %256 : vector<8x32xf32>
    %c0_159 = arith.constant 0 : index
    %c0_160 = arith.constant 0 : index
    %258 = vector.load %arg19[%c0_159, %c0_160] : memref<1x32xf32, #tpu.memory_space<vmem>>, vector<1x32xf32>
    %c0_161 = arith.constant 0 : index
    %c0_162 = arith.constant 0 : index
    %259 = vector.load %arg20[%c0_161, %c0_162] : memref<1x32xf32, #tpu.memory_space<vmem>>, vector<1x32xf32>
    %cst_163 = arith.constant dense<0.000000e+00> : vector<8xf32>
    %260 = vector.multi_reduction <add>, %257, %cst_163 [1] : vector<8x32xf32> to vector<8xf32>
    %261 = vector.shape_cast %260 : vector<8xf32> to vector<8x1xf32>
    %cst_164 = arith.constant 3.200000e+01 : f32
    %262 = vector.broadcast %cst_164 : f32 to vector<8x1xf32>
    %263 = arith.divf %261, %262 : vector<8x1xf32>
    %264 = vector.broadcast %263 : vector<8x1xf32> to vector<8x32xf32>
    %265 = arith.subf %257, %264 : vector<8x32xf32>
    %266 = arith.mulf %265, %265 : vector<8x32xf32>
    %cst_165 = arith.constant dense<0.000000e+00> : vector<8xf32>
    %267 = vector.multi_reduction <add>, %266, %cst_165 [1] : vector<8x32xf32> to vector<8xf32>
    %268 = vector.shape_cast %267 : vector<8xf32> to vector<8x1xf32>
    %cst_166 = arith.constant 3.200000e+01 : f32
    %269 = vector.broadcast %cst_166 : f32 to vector<8x1xf32>
    %270 = arith.divf %268, %269 : vector<8x1xf32>
    %271 = vector.broadcast %263 : vector<8x1xf32> to vector<8x32xf32>
    %272 = arith.subf %257, %271 : vector<8x32xf32>
    %cst_167 = arith.constant 9.99999974E-6 : f32
    %273 = vector.broadcast %cst_167 : f32 to vector<8x1xf32>
    %274 = arith.addf %270, %273 : vector<8x1xf32>
    %275 = math.rsqrt %274 : vector<8x1xf32>
    %276 = vector.broadcast %275 : vector<8x1xf32> to vector<8x32xf32>
    %277 = arith.mulf %272, %276 : vector<8x32xf32>
    %278 = vector.broadcast %258 : vector<1x32xf32> to vector<8x32xf32>
    %279 = arith.mulf %277, %278 : vector<8x32xf32>
    %280 = vector.broadcast %259 : vector<1x32xf32> to vector<8x32xf32>
    %281 = arith.addf %279, %280 : vector<8x32xf32>
    %c0_168 = arith.constant 0 : index
    %c0_169 = arith.constant 0 : index
    %c0_170 = arith.constant 0 : index
    %282 = vector.load %arg21[%c0_168, %c0_169, %c0_170] : memref<1x8x32xf32, #tpu.memory_space<vmem>>, vector<1x8x32xf32>
    %283 = vector.shape_cast %282 : vector<1x8x32xf32> to vector<8x32xf32>
    %284 = vector.shape_cast %281 : vector<8x32xf32> to vector<1x8x32xf32>
    tpu.vector_store %arg21[%c0_168, %c0_169, %c0_170], %284 {strides = array<i32>} : memref<1x8x32xf32, #tpu.memory_space<vmem>>, vector<1x8x32xf32>,
    return
  }
  func.func @transform_0(%arg0: i32) -> (i32, i32, i32) {
    %c0_i32 = arith.constant 0 : i32
    %c0_i32_0 = arith.constant 0 : i32
    %c0_i32_1 = arith.constant 0 : i32
    return %arg0, %c0_i32, %c0_i32_0 : i32, i32, i32
  }
  func.func @transform_1(%arg0: i32) -> (i32, i32, i32) {
    %c0_i32 = arith.constant 0 : i32
    %c0_i32_0 = arith.constant 0 : i32
    %c0_i32_1 = arith.constant 0 : i32
    return %arg0, %c0_i32, %c0_i32_0 : i32, i32, i32
  }
  func.func @transform_2(%arg0: i32) -> (i32, i32, i32, i32) {
    %c0_i32 = arith.constant 0 : i32
    %c0_i32_0 = arith.constant 0 : i32
    %c0_i32_1 = arith.constant 0 : i32
    %c0_i32_2 = arith.constant 0 : i32
    %c0_i32_3 = arith.constant 0 : i32
    return %c0_i32, %c0_i32_0, %c0_i32_1, %c0_i32_2 : i32, i32, i32, i32
  }
  func.func @transform_3(%arg0: i32) -> (i32, i32, i32, i32) {
    %c0_i32 = arith.constant 0 : i32
    %c0_i32_0 = arith.constant 0 : i32
    %c0_i32_1 = arith.constant 0 : i32
    %c0_i32_2 = arith.constant 0 : i32
    %c0_i32_3 = arith.constant 0 : i32
    return %c0_i32, %c0_i32_0, %c0_i32_1, %c0_i32_2 : i32, i32, i32, i32
  }
  func.func @transform_4(%arg0: i32) -> (i32, i32, i32, i32) {
    %c0_i32 = arith.constant 0 : i32
    %c0_i32_0 = arith.constant 0 : i32
    %c0_i32_1 = arith.constant 0 : i32
    %c0_i32_2 = arith.constant 0 : i32
    %c0_i32_3 = arith.constant 0 : i32
    return %c0_i32, %c0_i32_0, %c0_i32_1, %c0_i32_2 : i32, i32, i32, i32
  }
  func.func @transform_5(%arg0: i32) -> (i32, i32, i32, i32) {
    %c0_i32 = arith.constant 0 : i32
    %c0_i32_0 = arith.constant 0 : i32
    %c0_i32_1 = arith.constant 0 : i32
    %c0_i32_2 = arith.constant 0 : i32
    %c0_i32_3 = arith.constant 0 : i32
    return %c0_i32, %c0_i32_0, %c0_i32_1, %c0_i32_2 : i32, i32, i32, i32
  }
  func.func @transform_6(%arg0: i32) -> (i32, i32, i32, i32) {
    %c0_i32 = arith.constant 0 : i32
    %c0_i32_0 = arith.constant 0 : i32
    %c0_i32_1 = arith.constant 0 : i32
    %c0_i32_2 = arith.constant 0 : i32
    %c0_i32_3 = arith.constant 0 : i32
    return %c0_i32, %c0_i32_0, %c0_i32_1, %c0_i32_2 : i32, i32, i32, i32
  }
  func.func @transform_7(%arg0: i32) -> (i32, i32, i32, i32) {
    %c0_i32 = arith.constant 0 : i32
    %c0_i32_0 = arith.constant 0 : i32
    %c0_i32_1 = arith.constant 0 : i32
    %c0_i32_2 = arith.constant 0 : i32
    %c0_i32_3 = arith.constant 0 : i32
    return %c0_i32, %c0_i32_0, %c0_i32_1, %c0_i32_2 : i32, i32, i32, i32
  }
  func.func @transform_8(%arg0: i32) -> (i32, i32, i32, i32) {
    %c0_i32 = arith.constant 0 : i32
    %c0_i32_0 = arith.constant 0 : i32
    %c0_i32_1 = arith.constant 0 : i32
    %c0_i32_2 = arith.constant 0 : i32
    %c0_i32_3 = arith.constant 0 : i32
    return %c0_i32, %c0_i32_0, %c0_i32_1, %c0_i32_2 : i32, i32, i32, i32
  }
  func.func @transform_9(%arg0: i32) -> (i32, i32, i32) {
    %c0_i32 = arith.constant 0 : i32
    %c0_i32_0 = arith.constant 0 : i32
    %c0_i32_1 = arith.constant 0 : i32
    %c0_i32_2 = arith.constant 0 : i32
    return %c0_i32, %c0_i32_0, %c0_i32_1 : i32, i32, i32
  }
  func.func @transform_10(%arg0: i32) -> (i32, i32, i32) {
    %c0_i32 = arith.constant 0 : i32
    %c0_i32_0 = arith.constant 0 : i32
    %c0_i32_1 = arith.constant 0 : i32
    %c0_i32_2 = arith.constant 0 : i32
    return %c0_i32, %c0_i32_0, %c0_i32_1 : i32, i32, i32
  }
  func.func @transform_11(%arg0: i32) -> (i32, i32, i32) {
    %c0_i32 = arith.constant 0 : i32
    %c0_i32_0 = arith.constant 0 : i32
    %c0_i32_1 = arith.constant 0 : i32
    %c0_i32_2 = arith.constant 0 : i32
    return %c0_i32, %c0_i32_0, %c0_i32_1 : i32, i32, i32
  }
  func.func @transform_12(%arg0: i32) -> (i32, i32, i32) {
    %c0_i32 = arith.constant 0 : i32
    %c0_i32_0 = arith.constant 0 : i32
    %c0_i32_1 = arith.constant 0 : i32
    %c0_i32_2 = arith.constant 0 : i32
    return %c0_i32, %c0_i32_0, %c0_i32_1 : i32, i32, i32
  }
  func.func @transform_13(%arg0: i32) -> (i32, i32, i32) {
    %c0_i32 = arith.constant 0 : i32
    %c0_i32_0 = arith.constant 0 : i32
    %c0_i32_1 = arith.constant 0 : i32
    %c0_i32_2 = arith.constant 0 : i32
    return %c0_i32, %c0_i32_0, %c0_i32_1 : i32, i32, i32
  }
  func.func @transform_14(%arg0: i32) -> (i32, i32, i32) {
    %c0_i32 = arith.constant 0 : i32
    %c0_i32_0 = arith.constant 0 : i32
    %c0_i32_1 = arith.constant 0 : i32
    %c0_i32_2 = arith.constant 0 : i32
    return %c0_i32, %c0_i32_0, %c0_i32_1 : i32, i32, i32
  }
  func.func @transform_15(%arg0: i32) -> (i32, i32, i32) {
    %c0_i32 = arith.constant 0 : i32
    %c0_i32_0 = arith.constant 0 : i32
    %c0_i32_1 = arith.constant 0 : i32
    %c0_i32_2 = arith.constant 0 : i32
    return %c0_i32, %c0_i32_0, %c0_i32_1 : i32, i32, i32
  }
  func.func @transform_16(%arg0: i32) -> (i32, i32, i32) {
    %c0_i32 = arith.constant 0 : i32
    %c0_i32_0 = arith.constant 0 : i32
    %c0_i32_1 = arith.constant 0 : i32
    %c0_i32_2 = arith.constant 0 : i32
    return %c0_i32, %c0_i32_0, %c0_i32_1 : i32, i32, i32
  }
  func.func @transform_17(%arg0: i32) -> (i32, i32, i32) {
    %c0_i32 = arith.constant 0 : i32
    %c0_i32_0 = arith.constant 0 : i32
    %c0_i32_1 = arith.constant 0 : i32
    %c0_i32_2 = arith.constant 0 : i32
    return %c0_i32, %c0_i32_0, %c0_i32_1 : i32, i32, i32
  }
  func.func @transform_18(%arg0: i32) -> (i32, i32) {
    %c0_i32 = arith.constant 0 : i32
    %c0_i32_0 = arith.constant 0 : i32
    %c0_i32_1 = arith.constant 0 : i32
    return %c0_i32, %c0_i32_0 : i32, i32
  }
  func.func @transform_19(%arg0: i32) -> (i32, i32) {
    %c0_i32 = arith.constant 0 : i32
    %c0_i32_0 = arith.constant 0 : i32
    %c0_i32_1 = arith.constant 0 : i32
    return %c0_i32, %c0_i32_0 : i32, i32
  }
  func.func @transform_20(%arg0: i32) -> (i32, i32, i32) {
    %c0_i32 = arith.constant 0 : i32
    %c0_i32_0 = arith.constant 0 : i32
    %c0_i32_1 = arith.constant 0 : i32
    return %arg0, %c0_i32, %c0_i32_0 : i32, i32, i32
  }
}

</mosaic_0001>

<llo_original>
// kernel: tpu_custom_call.1
$region0: #{tpu_custom_call.1}
  #allocation0 [shape = 'u32[]', space=smem, size = 0x4, offset = 0x4, fixed_abs, tag = 'smem constant byte address 0x4 - core index']
  #allocation1 [shape = 'u32[144,128]{1,0:T(1,128)}', space=vmem, size = 0x12000, scoped, tag = 'internal scratch']
  %s0 = inlined_call_operand.vmem [shape: f32[2,8,32], index: 0, kind: input, shape index: {}]
  %s1 = inlined_call_operand.vmem [shape: f32[2,1,8], index: 1, kind: input, shape index: {}]
  %s2 = inlined_call_operand.vmem [shape: bf16[2,4,32,8], index: 2, kind: input, shape index: {}]
  %s3 = inlined_call_operand.vmem [shape: bf16[2,4,32,8], index: 3, kind: input, shape index: {}]
  %s4 = inlined_call_operand.vmem [shape: bf16[2,4,32,8], index: 4, kind: input, shape index: {}]
  %s5 = inlined_call_operand.vmem [shape: f32[2,4,1,8], index: 5, kind: input, shape index: {}]
  %s6 = inlined_call_operand.vmem [shape: f32[2,4,1,8], index: 6, kind: input, shape index: {}]
  %s7 = inlined_call_operand.vmem [shape: f32[2,4,1,8], index: 7, kind: input, shape index: {}]
  %s8 = inlined_call_operand.vmem [shape: bf16[2,4,8,32], index: 8, kind: input, shape index: {}]
  %s9 = inlined_call_operand.vmem [shape: f32[2,1,32], index: 9, kind: input, shape index: {}]
  %s10 = inlined_call_operand.vmem [shape: f32[2,1,32], index: 10, kind: input, shape index: {}]
  %s11 = inlined_call_operand.vmem [shape: f32[2,1,32], index: 11, kind: input, shape index: {}]
  %s12 = inlined_call_operand.vmem [shape: bf16[2,32,128], index: 12, kind: input, shape index: {}]
  %s13 = inlined_call_operand.vmem [shape: f32[2,1,128], index: 13, kind: input, shape index: {}]
  %s14 = inlined_call_operand.vmem [shape: bf16[2,128,32], index: 14, kind: input, shape index: {}]
  %s15 = inlined_call_operand.vmem [shape: f32[2,1,32], index: 15, kind: input, shape index: {}]
  %s16 = inlined_call_operand.vmem [shape: f32[2,1,32], index: 16, kind: input, shape index: {}]
  %s17 = inlined_call_operand.vmem [shape: f32[2,1,32], index: 17, kind: input, shape index: {}]
  %s18 = inlined_call_operand.vmem [shape: f32[1,32], index: 18, kind: input, shape index: {}]
  %s19 = inlined_call_operand.vmem [shape: f32[1,32], index: 19, kind: input, shape index: {}]
  %s20 = inlined_call_operand.hbm [shape: f32[2,8,32], index: 20, kind: output, shape index: {}]
  %s21 = sld [smem:[#allocation0]]
  $region113: #{tpu_custom_call.1} parent=0
    _
  %s23 = ssub.s32 1, %s21
  %s24 = scalar_select 0, %s23, %s21
  $region1: #{tpu_custom_call.1} parent=0
    #allocation2 [shape = 'u8[8192]{0}', space=vmem, size = 0x2000, scoped, tag = 'output window, operand 0']
    #allocation3 [shape = 's32[2]{0}', space=sflag, size = 0x8, scoped, tag = 'scoped memory for tpu_custom_call.1']
    %25 = vsyncpa [#allocation3], 0
    %s26 = scalar_lea.sflag [#allocation3], 1
    %27 = vsyncpa %s26, 0
    loop: start=0, step=1, limit=4
    $region2: #{tpu_custom_call.1} parent=1 // loop_pre_header
      _
    $region3: #{tpu_custom_call.1} parent=1 // loop_header
      %s29 = sphi 0, %s33
      %p30 = scmp.ge.s32.totalorder %s29, 4
      %s39 = sphi 0, %s41
      %s42 = sphi 0, %s39
      %s43 = sphi 0, %s42
      %s59 = sphi 0, %s43
      %s65 = sphi 0, %s67
      %s68 = sphi 0, %s65
      %s69 = sphi 0, %s68
      %s85 = sphi 0, %s69
      %s89 = sphi 0, %s89
      %s91 = sphi 0, %s89
      %s92 = sphi 0, %s91
      %s106 = sphi 0, %s92
      %s110 = sphi 0, %s110
      %s112 = sphi 0, %s110
      %s113 = sphi 0, %s112
      %s127 = sphi 0, %s113
      %s131 = sphi 0, %s131
      %s133 = sphi 0, %s131
      %s134 = sphi 0, %s133
      %s148 = sphi 0, %s134
      %s152 = sphi 0, %s152
      %s154 = sphi 0, %s152
      %s155 = sphi 0, %s154
      %s169 = sphi 0, %s155
      %s173 = sphi 0, %s173
      %s175 = sphi 0, %s173
      %s176 = sphi 0, %s175
      %s190 = sphi 0, %s176
      %s194 = sphi 0, %s194
      %s196 = sphi 0, %s194
      %s197 = sphi 0, %s196
      %s211 = sphi 0, %s197
      %s215 = sphi 0, %s215
      %s217 = sphi 0, %s215
      %s218 = sphi 0, %s217
      %s232 = sphi 0, %s218
      %s236 = sphi 0, %s236
      %s238 = sphi 0, %s236
      %s239 = sphi 0, %s238
      %s253 = sphi 0, %s239
      %s257 = sphi 0, %s257
      %s259 = sphi 0, %s257
      %s260 = sphi 0, %s259
      %s274 = sphi 0, %s260
      %s278 = sphi 0, %s278
      %s280 = sphi 0, %s278
      %s281 = sphi 0, %s280
      %s295 = sphi 0, %s281
      %s299 = sphi 0, %s299
      %s301 = sphi 0, %s299
      %s302 = sphi 0, %s301
      %s316 = sphi 0, %s302
      %s320 = sphi 0, %s320
      %s322 = sphi 0, %s320
      %s323 = sphi 0, %s322
      %s337 = sphi 0, %s323
      %s341 = sphi 0, %s341
      %s343 = sphi 0, %s341
      %s344 = sphi 0, %s343
      %s358 = sphi 0, %s344
      %s362 = sphi 0, %s362
      %s364 = sphi 0, %s362
      %s365 = sphi 0, %s364
      %s379 = sphi 0, %s365
      %s383 = sphi 0, %s383
      %s385 = sphi 0, %s383
      %s386 = sphi 0, %s385
      %s400 = sphi 0, %s386
      %s404 = sphi 0, %s404
      %s406 = sphi 0, %s404
      %s407 = sphi 0, %s406
      %s421 = sphi 0, %s407
      %s425 = sphi 0, %s425
      %s427 = sphi 0, %s425
      %s428 = sphi 0, %s427
      %s442 = sphi 0, %s428
      %s446 = sphi 0, %s446
      %s448 = sphi 0, %s446
      %s449 = sphi 0, %s448
      %s463 = sphi 0, %s449
      %s469 = sphi 0, %s471
      %s472 = sphi 0, %s469
      %s473 = sphi 0, %s472
      %s489 = sphi 0, %s473
    $region4: #{tpu_custom_call.1} parent=1 // loop_header_branch
      %32 = sbr.rel (%p30) target = $region8
    $region5: #{tpu_custom_call.1} parent=1 // loop_body
      %s34 = ssub.s32 %s29, 1
      %s35 = ssub.s32 %s29, 2
      %s36 = sadd.s32 %s29, 1
      %s37 = ssub.s32 %s29, %s36
      %p38 = scmp.eq.s32.totalorder %s37, 0
      %s40 = sadd.s32 %s39, 1
      %s41 = scalar_select %p38, %s39, %s40
      %p44 = pneg %p38
      %p45 = scmp.eq.s32.totalorder %s29, 1
      %p46 = por %p44, %p45
      %p47 = scmp.ne.s32.totalorder %s39, %s42
      %p48 = scmp.eq.s32.totalorder %s29, 0
      %p49 = por %p47, %p48
      %p50 = scmp.ne.s32.totalorder %s39, %s42
      %p51 = scmp.eq.s32.totalorder %s34, 1
      %p52 = por %p50, %p51
      %p53 = scmp.ne.s32.totalorder %s42, %s43
      %p54 = scmp.eq.s32.totalorder %s34, 0
      %p55 = por %p53, %p54
      %p56 = scmp.ne.s32.totalorder %s42, %s43
      %p57 = scmp.eq.s32.totalorder %s35, 1
      %p58 = por %p56, %p57
      %p60 = scmp.ne.s32.totalorder %s43, %s59
      %p61 = scmp.eq.s32.totalorder %s35, 0
      %p62 = por %p60, %p61
      %s63 = ssub.s32 %s29, %s36
      %p64 = scmp.eq.s32.totalorder %s63, 0
      %s66 = sadd.s32 %s65, 1
      %s67 = scalar_select %p64, %s65, %s66
      %p70 = pneg %p64
      %p71 = scmp.eq.s32.totalorder %s29, 1
      %p72 = por %p70, %p71
      %p73 = scmp.ne.s32.totalorder %s65, %s68
      %p74 = scmp.eq.s32.totalorder %s29, 0
      %p75 = por %p73, %p74
      %p76 = scmp.ne.s32.totalorder %s65, %s68
      %p77 = scmp.eq.s32.totalorder %s34, 1
      %p78 = por %p76, %p77
      %p79 = scmp.ne.s32.totalorder %s68, %s69
      %p80 = scmp.eq.s32.totalorder %s34, 0
      %p81 = por %p79, %p80
      %p82 = scmp.ne.s32.totalorder %s68, %s69
      %p83 = scmp.eq.s32.totalorder %s35, 1
      %p84 = por %p82, %p83
      %p86 = scmp.ne.s32.totalorder %s69, %s85
      %p87 = scmp.eq.s32.totalorder %s35, 0
      %p88 = por %p86, %p87
      %s90 = sadd.s32 %s89, 1
      %p93 = scmp.eq.s32.totalorder %s29, 1
      %p94 = scmp.ne.s32.totalorder %s89, %s91
      %p95 = scmp.eq.s32.totalorder %s29, 0
      %p96 = por %p94, %p95
      %p97 = scmp.ne.s32.totalorder %s89, %s91
      %p98 = scmp.eq.s32.totalorder %s34, 1
      %p99 = por %p97, %p98
      %p100 = scmp.ne.s32.totalorder %s91, %s92
      %p101 = scmp.eq.s32.totalorder %s34, 0
      %p102 = por %p100, %p101
      %p103 = scmp.ne.s32.totalorder %s91, %s92
      %p104 = scmp.eq.s32.totalorder %s35, 1
      %p105 = por %p103, %p104
      %p107 = scmp.ne.s32.totalorder %s92, %s106
      %p108 = scmp.eq.s32.totalorder %s35, 0
      %p109 = por %p107, %p108
      %s111 = sadd.s32 %s110, 1
      %p114 = scmp.eq.s32.totalorder %s29, 1
      %p115 = scmp.ne.s32.totalorder %s110, %s112
      %p116 = scmp.eq.s32.totalorder %s29, 0
      %p117 = por %p115, %p116
      %p118 = scmp.ne.s32.totalorder %s110, %s112
      %p119 = scmp.eq.s32.totalorder %s34, 1
      %p120 = por %p118, %p119
      %p121 = scmp.ne.s32.totalorder %s112, %s113
      %p122 = scmp.eq.s32.totalorder %s34, 0
      %p123 = por %p121, %p122
      %p124 = scmp.ne.s32.totalorder %s112, %s113
      %p125 = scmp.eq.s32.totalorder %s35, 1
      %p126 = por %p124, %p125
      %p128 = scmp.ne.s32.totalorder %s113, %s127
      %p129 = scmp.eq.s32.totalorder %s35, 0
      %p130 = por %p128, %p129
      %s132 = sadd.s32 %s131, 1
      %p135 = scmp.eq.s32.totalorder %s29, 1
      %p136 = scmp.ne.s32.totalorder %s131, %s133
      %p137 = scmp.eq.s32.totalorder %s29, 0
      %p138 = por %p136, %p137
      %p139 = scmp.ne.s32.totalorder %s131, %s133
      %p140 = scmp.eq.s32.totalorder %s34, 1
      %p141 = por %p139, %p140
      %p142 = scmp.ne.s32.totalorder %s133, %s134
      %p143 = scmp.eq.s32.totalorder %s34, 0
      %p144 = por %p142, %p143
      %p145 = scmp.ne.s32.totalorder %s133, %s134
      %p146 = scmp.eq.s32.totalorder %s35, 1
      %p147 = por %p145, %p146
      %p149 = scmp.ne.s32.totalorder %s134, %s148
      %p150 = scmp.eq.s32.totalorder %s35, 0
      %p151 = por %p149, %p150
      %s153 = sadd.s32 %s152, 1
      %p156 = scmp.eq.s32.totalorder %s29, 1
      %p157 = scmp.ne.s32.totalorder %s152, %s154
      %p158 = scmp.eq.s32.totalorder %s29, 0
      %p159 = por %p157, %p158
      %p160 = scmp.ne.s32.totalorder %s152, %s154
      %p161 = scmp.eq.s32.totalorder %s34, 1
      %p162 = por %p160, %p161
      %p163 = scmp.ne.s32.totalorder %s154, %s155
      %p164 = scmp.eq.s32.totalorder %s34, 0
      %p165 = por %p163, %p164
      %p166 = scmp.ne.s32.totalorder %s154, %s155
      %p167 = scmp.eq.s32.totalorder %s35, 1
      %p168 = por %p166, %p167
      %p170 = scmp.ne.s32.totalorder %s155, %s169
      %p171 = scmp.eq.s32.totalorder %s35, 0
      %p172 = por %p170, %p171
      %s174 = sadd.s32 %s173, 1
      %p177 = scmp.eq.s32.totalorder %s29, 1
      %p178 = scmp.ne.s32.totalorder %s173, %s175
      %p179 = scmp.eq.s32.totalorder %s29, 0
      %p180 = por %p178, %p179
      %p181 = scmp.ne.s32.totalorder %s173, %s175
      %p182 = scmp.eq.s32.totalorder %s34, 1
      %p183 = por %p181, %p182
      %p184 = scmp.ne.s32.totalorder %s175, %s176
      %p185 = scmp.eq.s32.totalorder %s34, 0
      %p186 = por %p184, %p185
      %p187 = scmp.ne.s32.totalorder %s175, %s176
      %p188 = scmp.eq.s32.totalorder %s35, 1
      %p189 = por %p187, %p188
      %p191 = scmp.ne.s32.totalorder %s176, %s190
      %p192 = scmp.eq.s32.totalorder %s35, 0
      %p193 = por %p191, %p192
      %s195 = sadd.s32 %s194, 1
      %p198 = scmp.eq.s32.totalorder %s29, 1
      %p199 = scmp.ne.s32.totalorder %s194, %s196
      %p200 = scmp.eq.s32.totalorder %s29, 0
      %p201 = por %p199, %p200
      %p202 = scmp.ne.s32.totalorder %s194, %s196
      %p203 = scmp.eq.s32.totalorder %s34, 1
      %p204 = por %p202, %p203
      %p205 = scmp.ne.s32.totalorder %s196, %s197
      %p206 = scmp.eq.s32.totalorder %s34, 0
      %p207 = por %p205, %p206
      %p208 = scmp.ne.s32.totalorder %s196, %s197
      %p209 = scmp.eq.s32.totalorder %s35, 1
      %p210 = por %p208, %p209
      %p212 = scmp.ne.s32.totalorder %s197, %s211
      %p213 = scmp.eq.s32.totalorder %s35, 0
      %p214 = por %p212, %p213
      %s216 = sadd.s32 %s215, 1
      %p219 = scmp.eq.s32.totalorder %s29, 1
      %p220 = scmp.ne.s32.totalorder %s215, %s217
      %p221 = scmp.eq.s32.totalorder %s29, 0
      %p222 = por %p220, %p221
      %p223 = scmp.ne.s32.totalorder %s215, %s217
      %p224 = scmp.eq.s32.totalorder %s34, 1
      %p225 = por %p223, %p224
      %p226 = scmp.ne.s32.totalorder %s217, %s218
      %p227 = scmp.eq.s32.totalorder %s34, 0
      %p228 = por %p226, %p227
      %p229 = scmp.ne.s32.totalorder %s217, %s218
      %p230 = scmp.eq.s32.totalorder %s35, 1
      %p231 = por %p229, %p230
      %p233 = scmp.ne.s32.totalorder %s218, %s232
      %p234 = scmp.eq.s32.totalorder %s35, 0
      %p235 = por %p233, %p234
      %s237 = sadd.s32 %s236, 1
      %p240 = scmp.eq.s32.totalorder %s29, 1
      %p241 = scmp.ne.s32.totalorder %s236, %s238
      %p242 = scmp.eq.s32.totalorder %s29, 0
      %p243 = por %p241, %p242
      %p244 = scmp.ne.s32.totalorder %s236, %s238
      %p245 = scmp.eq.s32.totalorder %s34, 1
      %p246 = por %p244, %p245
      %p247 = scmp.ne.s32.totalorder %s238, %s239
      %p248 = scmp.eq.s32.totalorder %s34, 0
      %p249 = por %p247, %p248
      %p250 = scmp.ne.s32.totalorder %s238, %s239
      %p251 = scmp.eq.s32.totalorder %s35, 1
      %p252 = por %p250, %p251
      %p254 = scmp.ne.s32.totalorder %s239, %s253
      %p255 = scmp.eq.s32.totalorder %s35, 0
      %p256 = por %p254, %p255
      %s258 = sadd.s32 %s257, 1
      %p261 = scmp.eq.s32.totalorder %s29, 1
      %p262 = scmp.ne.s32.totalorder %s257, %s259
      %p263 = scmp.eq.s32.totalorder %s29, 0
      %p264 = por %p262, %p263
      %p265 = scmp.ne.s32.totalorder %s257, %s259
      %p266 = scmp.eq.s32.totalorder %s34, 1
      %p267 = por %p265, %p266
      %p268 = scmp.ne.s32.totalorder %s259, %s260
      %p269 = scmp.eq.s32.totalorder %s34, 0
      %p270 = por %p268, %p269
      %p271 = scmp.ne.s32.totalorder %s259, %s260
      %p272 = scmp.eq.s32.totalorder %s35, 1
      %p273 = por %p271, %p272
      %p275 = scmp.ne.s32.totalorder %s260, %s274
      %p276 = scmp.eq.s32.totalorder %s35, 0
      %p277 = por %p275, %p276
      %s279 = sadd.s32 %s278, 1
      %p282 = scmp.eq.s32.totalorder %s29, 1
      %p283 = scmp.ne.s32.totalorder %s278, %s280
      %p284 = scmp.eq.s32.totalorder %s29, 0
      %p285 = por %p283, %p284
      %p286 = scmp.ne.s32.totalorder %s278, %s280
      %p287 = scmp.eq.s32.totalorder %s34, 1
      %p288 = por %p286, %p287
      %p289 = scmp.ne.s32.totalorder %s280, %s281
      %p290 = scmp.eq.s32.totalorder %s34, 0
      %p291 = por %p289, %p290
      %p292 = scmp.ne.s32.totalorder %s280, %s281
      %p293 = scmp.eq.s32.totalorder %s35, 1
      %p294 = por %p292, %p293
      %p296 = scmp.ne.s32.totalorder %s281, %s295
      %p297 = scmp.eq.s32.totalorder %s35, 0
      %p298 = por %p296, %p297
      %s300 = sadd.s32 %s299, 1
      %p303 = scmp.eq.s32.totalorder %s29, 1
      %p304 = scmp.ne.s32.totalorder %s299, %s301
      %p305 = scmp.eq.s32.totalorder %s29, 0
      %p306 = por %p304, %p305
      %p307 = scmp.ne.s32.totalorder %s299, %s301
      %p308 = scmp.eq.s32.totalorder %s34, 1
      %p309 = por %p307, %p308
      %p310 = scmp.ne.s32.totalorder %s301, %s302
      %p311 = scmp.eq.s32.totalorder %s34, 0
      %p312 = por %p310, %p311
      %p313 = scmp.ne.s32.totalorder %s301, %s302
      %p314 = scmp.eq.s32.totalorder %s35, 1
      %p315 = por %p313, %p314
      %p317 = scmp.ne.s32.totalorder %s302, %s316
      %p318 = scmp.eq.s32.totalorder %s35, 0
      %p319 = por %p317, %p318
      %s321 = sadd.s32 %s320, 1
      %p324 = scmp.eq.s32.totalorder %s29, 1
      %p325 = scmp.ne.s32.totalorder %s320, %s322
      %p326 = scmp.eq.s32.totalorder %s29, 0
      %p327 = por %p325, %p326
      %p328 = scmp.ne.s32.totalorder %s320, %s322
      %p329 = scmp.eq.s32.totalorder %s34, 1
      %p330 = por %p328, %p329
      %p331 = scmp.ne.s32.totalorder %s322, %s323
      %p332 = scmp.eq.s32.totalorder %s34, 0
      %p333 = por %p331, %p332
      %p334 = scmp.ne.s32.totalorder %s322, %s323
      %p335 = scmp.eq.s32.totalorder %s35, 1
      %p336 = por %p334, %p335
      %p338 = scmp.ne.s32.totalorder %s323, %s337
      %p339 = scmp.eq.s32.totalorder %s35, 0
      %p340 = por %p338, %p339
      %s342 = sadd.s32 %s341, 1
      %p345 = scmp.eq.s32.totalorder %s29, 1
      %p346 = scmp.ne.s32.totalorder %s341, %s343
      %p347 = scmp.eq.s32.totalorder %s29, 0
      %p348 = por %p346, %p347
      %p349 = scmp.ne.s32.totalorder %s341, %s343
      %p350 = scmp.eq.s32.totalorder %s34, 1
      %p351 = por %p349, %p350
      %p352 = scmp.ne.s32.totalorder %s343, %s344
      %p353 = scmp.eq.s32.totalorder %s34, 0
      %p354 = por %p352, %p353
      %p355 = scmp.ne.s32.totalorder %s343, %s344
      %p356 = scmp.eq.s32.totalorder %s35, 1
      %p357 = por %p355, %p356
      %p359 = scmp.ne.s32.totalorder %s344, %s358
      %p360 = scmp.eq.s32.totalorder %s35, 0
      %p361 = por %p359, %p360
      %s363 = sadd.s32 %s362, 1
      %p366 = scmp.eq.s32.totalorder %s29, 1
      %p367 = scmp.ne.s32.totalorder %s362, %s364
      %p368 = scmp.eq.s32.totalorder %s29, 0
      %p369 = por %p367, %p368
      %p370 = scmp.ne.s32.totalorder %s362, %s364
      %p371 = scmp.eq.s32.totalorder %s34, 1
      %p372 = por %p370, %p371
      %p373 = scmp.ne.s32.totalorder %s364, %s365
      %p374 = scmp.eq.s32.totalorder %s34, 0
      %p375 = por %p373, %p374
      %p376 = scmp.ne.s32.totalorder %s364, %s365
      %p377 = scmp.eq.s32.totalorder %s35, 1
      %p378 = por %p376, %p377
      %p380 = scmp.ne.s32.totalorder %s365, %s379
      %p381 = scmp.eq.s32.totalorder %s35, 0
      %p382 = por %p380, %p381
      %s384 = sadd.s32 %s383, 1
      %p387 = scmp.eq.s32.totalorder %s29, 1
      %p388 = scmp.ne.s32.totalorder %s383, %s385
      %p389 = scmp.eq.s32.totalorder %s29, 0
      %p390 = por %p388, %p389
      %p391 = scmp.ne.s32.totalorder %s383, %s385
      %p392 = scmp.eq.s32.totalorder %s34, 1
      %p393 = por %p391, %p392
      %p394 = scmp.ne.s32.totalorder %s385, %s386
      %p395 = scmp.eq.s32.totalorder %s34, 0
      %p396 = por %p394, %p395
      %p397 = scmp.ne.s32.totalorder %s385, %s386
      %p398 = scmp.eq.s32.totalorder %s35, 1
      %p399 = por %p397, %p398
      %p401 = scmp.ne.s32.totalorder %s386, %s400
      %p402 = scmp.eq.s32.totalorder %s35, 0
      %p403 = por %p401, %p402
      %s405 = sadd.s32 %s404, 1
      %p408 = scmp.eq.s32.totalorder %s29, 1
      %p409 = scmp.ne.s32.totalorder %s404, %s406
      %p410 = scmp.eq.s32.totalorder %s29, 0
      %p411 = por %p409, %p410
      %p412 = scmp.ne.s32.totalorder %s404, %s406
      %p413 = scmp.eq.s32.totalorder %s34, 1
      %p414 = por %p412, %p413
      %p415 = scmp.ne.s32.totalorder %s406, %s407
      %p416 = scmp.eq.s32.totalorder %s34, 0
      %p417 = por %p415, %p416
      %p418 = scmp.ne.s32.totalorder %s406, %s407
      %p419 = scmp.eq.s32.totalorder %s35, 1
      %p420 = por %p418, %p419
      %p422 = scmp.ne.s32.totalorder %s407, %s421
      %p423 = scmp.eq.s32.totalorder %s35, 0
      %p424 = por %p422, %p423
      %s426 = sadd.s32 %s425, 1
      %p429 = scmp.eq.s32.totalorder %s29, 1
      %p430 = scmp.ne.s32.totalorder %s425, %s427
      %p431 = scmp.eq.s32.totalorder %s29, 0
      %p432 = por %p430, %p431
      %p433 = scmp.ne.s32.totalorder %s425, %s427
      %p434 = scmp.eq.s32.totalorder %s34, 1
      %p435 = por %p433, %p434
      %p436 = scmp.ne.s32.totalorder %s427, %s428
      %p437 = scmp.eq.s32.totalorder %s34, 0
      %p438 = por %p436, %p437
      %p439 = scmp.ne.s32.totalorder %s427, %s428
      %p440 = scmp.eq.s32.totalorder %s35, 1
      %p441 = por %p439, %p440
      %p443 = scmp.ne.s32.totalorder %s428, %s442
      %p444 = scmp.eq.s32.totalorder %s35, 0
      %p445 = por %p443, %p444
      %s447 = sadd.s32 %s446, 1
      %p450 = scmp.eq.s32.totalorder %s29, 1
      %p451 = scmp.ne.s32.totalorder %s446, %s448
      %p452 = scmp.eq.s32.totalorder %s29, 0
      %p453 = por %p451, %p452
      %p454 = scmp.ne.s32.totalorder %s446, %s448
      %p455 = scmp.eq.s32.totalorder %s34, 1
      %p456 = por %p454, %p455
      %p457 = scmp.ne.s32.totalorder %s448, %s449
      %p458 = scmp.eq.s32.totalorder %s34, 0
      %p459 = por %p457, %p458
      %p460 = scmp.ne.s32.totalorder %s448, %s449
      %p461 = scmp.eq.s32.totalorder %s35, 1
      %p462 = por %p460, %p461
      %p464 = scmp.ne.s32.totalorder %s449, %s463
      %p465 = scmp.eq.s32.totalorder %s35, 0
      %p466 = por %p464, %p465
      %s467 = ssub.s32 %s29, %s36
      %p468 = scmp.eq.s32.totalorder %s467, 0
      %s470 = sadd.s32 %s469, 1
      %s471 = scalar_select %p468, %s469, %s470
      %p474 = pneg %p468
      %p475 = scmp.eq.s32.totalorder %s29, 1
      %p476 = por %p474, %p475
      %p477 = scmp.ne.s32.totalorder %s469, %s472
      %p478 = scmp.eq.s32.totalorder %s29, 0
      %p479 = por %p477, %p478
      %p480 = scmp.ne.s32.totalorder %s469, %s472
      %p481 = scmp.eq.s32.totalorder %s34, 1
      %p482 = por %p480, %p481
      %p483 = scmp.ne.s32.totalorder %s472, %s473
      %p484 = scmp.eq.s32.totalorder %s34, 0
      %p485 = por %p483, %p484
      %p486 = scmp.ne.s32.totalorder %s472, %s473
      %p487 = scmp.eq.s32.totalorder %s35, 1
      %p488 = por %p486, %p487
      %p490 = scmp.ne.s32.totalorder %s473, %s489
      %p491 = scmp.eq.s32.totalorder %s35, 0
      %p492 = por %p490, %p491
      %p493 = scmp.le.s32.totalorder 1, %s29
      %p494 = scmp.lt.s32.totalorder %s29, 3
      %p495 = pnand %p493, %p494
      %p496 = pneg %p495
      // Predicated region
      $region9: #{tpu_custom_call.1} parent=5 // pred_check
        _
      $region10: #{tpu_custom_call.1} parent=5 // pred_check_branch
        %498 = sbr.rel (%p495) target = $region12
      $region11: #{tpu_custom_call.1} parent=5 // pred_region
        %s499 = ssub.s32 %s29, 1
        // Predicated region
        $region13: #{tpu_custom_call.1} parent=11 // pred_check
          %p500 = pneg %p102
        $region14: #{tpu_custom_call.1} parent=11 // pred_check_branch
          %502 = sbr.rel (%p500) target = $region16
        $region15: #{tpu_custom_call.1} parent=11 // pred_region
          _
        $region16: #{tpu_custom_call.1} parent=11 // pred_fallthru
          _
        // Predicated region
        $region17: #{tpu_custom_call.1} parent=11 // pred_check
          %p503 = pneg %p123
        $region18: #{tpu_custom_call.1} parent=11 // pred_check_branch
          %505 = sbr.rel (%p503) target = $region20
        $region19: #{tpu_custom_call.1} parent=11 // pred_region
          _
        $region20: #{tpu_custom_call.1} parent=11 // pred_fallthru
          _
        // Predicated region
        $region21: #{tpu_custom_call.1} parent=11 // pred_check
          %p506 = pneg %p144
        $region22: #{tpu_custom_call.1} parent=11 // pred_check_branch
          %508 = sbr.rel (%p506) target = $region24
        $region23: #{tpu_custom_call.1} parent=11 // pred_region
          _
        $region24: #{tpu_custom_call.1} parent=11 // pred_fallthru
          _
        // Predicated region
        $region25: #{tpu_custom_call.1} parent=11 // pred_check
          %p509 = pneg %p165
        $region26: #{tpu_custom_call.1} parent=11 // pred_check_branch
          %511 = sbr.rel (%p509) target = $region28
        $region27: #{tpu_custom_call.1} parent=11 // pred_region
          _
        $region28: #{tpu_custom_call.1} parent=11 // pred_fallthru
          _
        // Predicated region
        $region29: #{tpu_custom_call.1} parent=11 // pred_check
          %p512 = pneg %p186
        $region30: #{tpu_custom_call.1} parent=11 // pred_check_branch
          %514 = sbr.rel (%p512) target = $region32
        $region31: #{tpu_custom_call.1} parent=11 // pred_region
          _
        $region32: #{tpu_custom_call.1} parent=11 // pred_fallthru
          _
        // Predicated region
        $region33: #{tpu_custom_call.1} parent=11 // pred_check
          %p515 = pneg %p207
        $region34: #{tpu_custom_call.1} parent=11 // pred_check_branch
          %517 = sbr.rel (%p515) target = $region36
        $region35: #{tpu_custom_call.1} parent=11 // pred_region
          _
        $region36: #{tpu_custom_call.1} parent=11 // pred_fallthru
          _
        // Predicated region
        $region37: #{tpu_custom_call.1} parent=11 // pred_check
          %p518 = pneg %p228
        $region38: #{tpu_custom_call.1} parent=11 // pred_check_branch
          %520 = sbr.rel (%p518) target = $region40
        $region39: #{tpu_custom_call.1} parent=11 // pred_region
          _
        $region40: #{tpu_custom_call.1} parent=11 // pred_fallthru
          _
        // Predicated region
        $region41: #{tpu_custom_call.1} parent=11 // pred_check
          %p521 = pneg %p249
        $region42: #{tpu_custom_call.1} parent=11 // pred_check_branch
          %523 = sbr.rel (%p521) target = $region44
        $region43: #{tpu_custom_call.1} parent=11 // pred_region
          _
        $region44: #{tpu_custom_call.1} parent=11 // pred_fallthru
          _
        // Predicated region
        $region45: #{tpu_custom_call.1} parent=11 // pred_check
          %p524 = pneg %p270
        $region46: #{tpu_custom_call.1} parent=11 // pred_check_branch
          %526 = sbr.rel (%p524) target = $region48
        $region47: #{tpu_custom_call.1} parent=11 // pred_region
          _
        $region48: #{tpu_custom_call.1} parent=11 // pred_fallthru
          _
        // Predicated region
        $region49: #{tpu_custom_call.1} parent=11 // pred_check
          %p527 = pneg %p291
        $region50: #{tpu_custom_call.1} parent=11 // pred_check_branch
          %529 = sbr.rel (%p527) target = $region52
        $region51: #{tpu_custom_call.1} parent=11 // pred_region
          _
        $region52: #{tpu_custom_call.1} parent=11 // pred_fallthru
          _
        // Predicated region
        $region53: #{tpu_custom_call.1} parent=11 // pred_check
          %p530 = pneg %p312
        $region54: #{tpu_custom_call.1} parent=11 // pred_check_branch
          %532 = sbr.rel (%p530) target = $region56
        $region55: #{tpu_custom_call.1} parent=11 // pred_region
          _
        $region56: #{tpu_custom_call.1} parent=11 // pred_fallthru
          _
        // Predicated region
        $region57: #{tpu_custom_call.1} parent=11 // pred_check
          %p533 = pneg %p333
        $region58: #{tpu_custom_call.1} parent=11 // pred_check_branch
          %535 = sbr.rel (%p533) target = $region60
        $region59: #{tpu_custom_call.1} parent=11 // pred_region
          _
        $region60: #{tpu_custom_call.1} parent=11 // pred_fallthru
          _
        // Predicated region
        $region61: #{tpu_custom_call.1} parent=11 // pred_check
          %p536 = pneg %p354
        $region62: #{tpu_custom_call.1} parent=11 // pred_check_branch
          %538 = sbr.rel (%p536) target = $region64
        $region63: #{tpu_custom_call.1} parent=11 // pred_region
          _
        $region64: #{tpu_custom_call.1} parent=11 // pred_fallthru
          _
        // Predicated region
        $region65: #{tpu_custom_call.1} parent=11 // pred_check
          %p539 = pneg %p375
        $region66: #{tpu_custom_call.1} parent=11 // pred_check_branch
          %541 = sbr.rel (%p539) target = $region68
        $region67: #{tpu_custom_call.1} parent=11 // pred_region
          _
        $region68: #{tpu_custom_call.1} parent=11 // pred_fallthru
          _
        // Predicated region
        $region69: #{tpu_custom_call.1} parent=11 // pred_check
          %p542 = pneg %p396
        $region70: #{tpu_custom_call.1} parent=11 // pred_check_branch
          %544 = sbr.rel (%p542) target = $region72
        $region71: #{tpu_custom_call.1} parent=11 // pred_region
          _
        $region72: #{tpu_custom_call.1} parent=11 // pred_fallthru
          _
        // Predicated region
        $region73: #{tpu_custom_call.1} parent=11 // pred_check
          %p545 = pneg %p417
        $region74: #{tpu_custom_call.1} parent=11 // pred_check_branch
          %547 = sbr.rel (%p545) target = $region76
        $region75: #{tpu_custom_call.1} parent=11 // pred_region
          _
        $region76: #{tpu_custom_call.1} parent=11 // pred_fallthru
          _
        // Predicated region
        $region77: #{tpu_custom_call.1} parent=11 // pred_check
          %p548 = pneg %p438
        $region78: #{tpu_custom_call.1} parent=11 // pred_check_branch
          %550 = sbr.rel (%p548) target = $region80
        $region79: #{tpu_custom_call.1} parent=11 // pred_region
          _
        $region80: #{tpu_custom_call.1} parent=11 // pred_fallthru
          _
        // Predicated region
        $region81: #{tpu_custom_call.1} parent=11 // pred_check
          %p551 = pneg %p459
        $region82: #{tpu_custom_call.1} parent=11 // pred_check_branch
          %553 = sbr.rel (%p551) target = $region84
        $region83: #{tpu_custom_call.1} parent=11 // pred_region
          _
        $region84: #{tpu_custom_call.1} parent=11 // pred_fallthru
          _
      $region12: #{tpu_custom_call.1} parent=5 // pred_fallthru
        _
      %p554 = scmp.lt.s32.totalorder %s29, 2
      // Predicated region
      $region85: #{tpu_custom_call.1} parent=5 // pred_check
        %p555 = pneg %p554
      $region86: #{tpu_custom_call.1} parent=5 // pred_check_branch
        %557 = sbr.rel (%p555) target = $region88
      $region87: #{tpu_custom_call.1} parent=5 // pred_region
        // Predicated region
        $region89: #{tpu_custom_call.1} parent=87 // pred_check
          %p558 = pneg %p49
        $region90: #{tpu_custom_call.1} parent=87 // pred_check_branch
          %560 = sbr.rel (%p558) target = $region92
        $region91: #{tpu_custom_call.1} parent=87 // pred_region
          %p561 = scmp.lt.s32.totalorder %s29, 1
          %s562 = scalar_select %p561, %s29, 1
          %s563 = smul.addr %s562, 8
          %s564 = scalar_lea.vmem %s0, %s563
        $region92: #{tpu_custom_call.1} parent=87 // pred_fallthru
          _
        // Predicated region
        $region93: #{tpu_custom_call.1} parent=87 // pred_check
          %p565 = pneg %p75
        $region94: #{tpu_custom_call.1} parent=87 // pred_check_branch
          %567 = sbr.rel (%p565) target = $region96
        $region95: #{tpu_custom_call.1} parent=87 // pred_region
          %p568 = scmp.lt.s32.totalorder %s29, 1
          %s569 = scalar_select %p568, %s29, 1
          %s570 = scalar_lea.vmem %s1, %s569
        $region96: #{tpu_custom_call.1} parent=87 // pred_fallthru
          _
      $region88: #{tpu_custom_call.1} parent=5 // pred_fallthru
        _
      %p571 = scmp.le.s32.totalorder 1, %s29
      %p572 = scmp.lt.s32.totalorder %s29, 3
      %p573 = pnand %p571, %p572
      %p574 = pneg %p573
      // Predicated region
      $region97: #{tpu_custom_call.1} parent=5 // pred_check
        _
      $region98: #{tpu_custom_call.1} parent=5 // pred_check_branch
        %576 = sbr.rel (%p573) target = $region100
      $region99: #{tpu_custom_call.1} parent=5 // pred_region
        %s577 = ssub.s32 %s29, 1
        %p578 = scmp.lt.s32.totalorder %s34, 1
        %s579 = scalar_select %p578, %s34, 1
        %s580 = smul.addr %s579, 8
        %s581 = scalar_lea.vmem %s0, %s580
        %p582 = pneg %p55
        %p583 = pneg %p52
        %p584 = scmp.lt.s32.totalorder %s34, 1
        %s585 = scalar_select %p584, %s34, 1
        %s586 = scalar_lea.vmem %s1, %s585
        %p587 = pneg %p81
        %p588 = pneg %p78
        %p589 = pneg %p102
        %p590 = pneg %p99
        %p591 = pneg %p123
        %p592 = pneg %p120
        %p593 = pneg %p144
        %p594 = pneg %p141
        %p595 = pneg %p165
        %p596 = pneg %p162
        %p597 = pneg %p186
        %p598 = pneg %p183
        %p599 = pneg %p207
        %p600 = pneg %p204
        %p601 = pneg %p228
        %p602 = pneg %p225
        %p603 = pneg %p249
        %p604 = pneg %p246
        %p605 = pneg %p270
        %p606 = pneg %p267
        %p607 = pneg %p291
        %p608 = pneg %p288
        %p609 = pneg %p312
        %p610 = pneg %p309
        %p611 = pneg %p333
        %p612 = pneg %p330
        %p613 = pneg %p354
        %p614 = pneg %p351
        %p615 = pneg %p375
        %p616 = pneg %p372
        %p617 = pneg %p396
        %p618 = pneg %p393
        %p619 = pneg %p417
        %p620 = pneg %p414
        %p621 = pneg %p438
        %p622 = pneg %p435
        %p623 = pneg %p459
        %p624 = pneg %p456
        %p625 = pneg %p485
        %p626 = pneg %p482
        %s627 = sand.u32 %s472, 1
        %s628 = scalar_lea.sflag [#allocation3], %s627
        %s629 = sand.u32 %s472, 1
        %s630 = smul.addr %s629, 8
        %s631 = scalar_lea.vmem [#allocation2], %s630
        %p632 = scmp.lt.s32.totalorder %s34, 1
        %s633 = scalar_select %p632, %s34, 1
        %s634 = smul.addr %s633, 8
        %s635 = scalar_lea.vmem %s0, %s634
        %p636 = scmp.lt.s32.totalorder %s34, 1
        %s637 = scalar_select %p636, %s34, 1
        %s638 = scalar_lea.vmem %s1, %s637
        %v640 = vld [vmem:[%s635] sm:$0xff]
        %v641 = vld [vmem:[%s638] sm:$0x1]
        %v642 = vpack.c.bf16 %v640, %v640
        %v643 = vld [vmem:[%s2] sm:$0xf]
        %v644 = vld [vmem:[%s2 + $0x4] sm:$0xf]
        %v645 = vld [vmem:[%s2 + $0x8] sm:$0xf]
        %v646 = vld [vmem:[%s2 + $0xc] sm:$0xf]
        %v647 = vld [vmem:[%s2 + $0x10] sm:$0xf]
        %v648 = vld [vmem:[%s2 + $0x14] sm:$0xf]
        %v649 = vld [vmem:[%s2 + $0x18] sm:$0xf]
        %v650 = vld [vmem:[%s2 + $0x1c] sm:$0xf]
        %v651 = vld [vmem:[%s2 + $0x20] sm:$0xf]
        %v652 = vld [vmem:[%s2 + $0x24] sm:$0xf]
        %v653 = vld [vmem:[%s2 + $0x28] sm:$0xf]
        %v654 = vld [vmem:[%s2 + $0x2c] sm:$0xf]
        %v655 = vld [vmem:[%s2 + $0x30] sm:$0xf]
        %v656 = vld [vmem:[%s2 + $0x34] sm:$0xf]
        %v657 = vld [vmem:[%s2 + $0x38] sm:$0xf]
        %v658 = vld [vmem:[%s2 + $0x3c] sm:$0xf]
        %v659 = vld [vmem:[%s5] sm:$0x1]
        %v660 = vld [vmem:[%s5 + $0x1] sm:$0x1]
        %v661 = vld [vmem:[%s5 + $0x2] sm:$0x1]
        %v662 = vld [vmem:[%s5 + $0x3] sm:$0x1]
        %v667 = vlaneseq
        %v668 = vshrl.u32 %v667, 7
        %v669 = vsub.s32 0, %v668
        %v670 = vrot.slane %v659, %v669
        %v671 = vlaneseq
        %v672 = vshrl.u32 %v671, 7
        %v673 = vsub.s32 0, %v672
        %v674 = vrot.slane %v660, %v673
        %v675 = vlaneseq
        %v676 = vshrl.u32 %v675, 7
        %v677 = vsub.s32 0, %v676
        %v678 = vrot.slane %v661, %v677
        %v679 = vlaneseq
        %v680 = vshrl.u32 %v679, 7
        %v681 = vsub.s32 0, %v680
        %v682 = vrot.slane %v662, %v681
        %v691 = vunpack.c.l.b16 %v643
        %v692 = vunpack.c.l.b16 %v644
        %v693 = vunpack.c.l.b16 %v645
        %v694 = vunpack.c.l.b16 %v646
        %v695 = vpack.c.b16 %v692, %v691
        %v696 = vpack.c.b16 %v694, %v693
        %vm699 = vcmask 261120
        %v701 = vsel %vm699, %v642, 0
        %703 = vmatprep.subr.bf16.mxu0 0
        %704 = vmatpush1.bf16.msra.mxu0 %v695
        %705 = vmatprep.subr.bf16.mxu0 0
        %706 = vmatpush1.bf16.msra.mxu0 %v696
        %707 = vmatprep.subr.bf16.mxu0 0
        %708 = vmatpush1.bf16.msra.mxu0 0
        %709 = vmatprep.subr.bf16.mxu0 0
        %710 = vmatpush1.bf16.msra.mxu0 0
        %711 = vmatprep.subr.bf16.mxu0 0
        %712 = vmatpush1.bf16.msra.mxu0 0
        %713 = vmatprep.subr.bf16.mxu0 0
        %714 = vmatpush1.bf16.msra.mxu0 0
        %715 = vmatprep.subr.bf16.mxu0 0
        %716 = vmatpush1.bf16.msra.mxu0 0
        %717 = vmatprep.subr.bf16.mxu0 0
        %718 = vmatpush1.bf16.msra.mxu0 0
        %719 = vmatprep.subr.bf16.mxu0 0
        %720 = vmatpush1.bf16.msra.mxu0 0
        %721 = vmatprep.subr.bf16.mxu0 0
        %722 = vmatpush1.bf16.msra.mxu0 0
        %723 = vmatprep.subr.bf16.mxu0 0
        %724 = vmatpush1.bf16.msra.mxu0 0
        %725 = vmatprep.subr.bf16.mxu0 0
        %726 = vmatpush1.bf16.msra.mxu0 0
        %727 = vmatprep.subr.bf16.mxu0 0
        %728 = vmatpush1.bf16.msra.mxu0 0
        %729 = vmatprep.subr.bf16.mxu0 0
        %730 = vmatpush1.bf16.msra.mxu0 0
        %731 = vmatprep.subr.bf16.mxu0 0
        %732 = vmatpush1.bf16.msra.mxu0 0
        %733 = vmatprep.subr.bf16.mxu0 0
        %734 = vmatpush1.bf16.msra.mxu0 0
        %735 = vmatprep.mubr.bf16.mxu0 0
        %736 = vmatmul.mubr.bf16.gmra.mrb[0].mxu0 %v701
        %v737 = vpop.f32.mrb[0].mxu0
        %v738 = vadd.f32 %v670, %v737
        %v739 = vpop.f32.mrb[0].mxu0
        %v740 = vpop.f32.mrb[0].mxu0
        %v741 = vpop.f32.mrb[0].mxu0
        %742 = vdwg.mxu0
        %v747 = vunpack.c.l.b16 %v647
        %v748 = vunpack.c.l.b16 %v648
        %v749 = vunpack.c.l.b16 %v649
        %v750 = vunpack.c.l.b16 %v650
        %v751 = vpack.c.b16 %v748, %v747
        %v752 = vpack.c.b16 %v750, %v749
        %755 = vmatprep.subr.bf16.mxu0 0
        %756 = vmatpush1.bf16.msra.mxu0 %v751
        %757 = vmatprep.subr.bf16.mxu0 0
        %758 = vmatpush1.bf16.msra.mxu0 %v752
        %759 = vmatprep.subr.bf16.mxu0 0
        %760 = vmatpush1.bf16.msra.mxu0 0
        %761 = vmatprep.subr.bf16.mxu0 0
        %762 = vmatpush1.bf16.msra.mxu0 0
        %763 = vmatprep.subr.bf16.mxu0 0
        %764 = vmatpush1.bf16.msra.mxu0 0
        %765 = vmatprep.subr.bf16.mxu0 0
        %766 = vmatpush1.bf16.msra.mxu0 0
        %767 = vmatprep.subr.bf16.mxu0 0
        %768 = vmatpush1.bf16.msra.mxu0 0
        %769 = vmatprep.subr.bf16.mxu0 0
        %770 = vmatpush1.bf16.msra.mxu0 0
        %771 = vmatprep.subr.bf16.mxu0 0
        %772 = vmatpush1.bf16.msra.mxu0 0
        %773 = vmatprep.subr.bf16.mxu0 0
        %774 = vmatpush1.bf16.msra.mxu0 0
        %775 = vmatprep.subr.bf16.mxu0 0
        %776 = vmatpush1.bf16.msra.mxu0 0
        %777 = vmatprep.subr.bf16.mxu0 0
        %778 = vmatpush1.bf16.msra.mxu0 0
        %779 = vmatprep.subr.bf16.mxu0 0
        %780 = vmatpush1.bf16.msra.mxu0 0
        %781 = vmatprep.subr.bf16.mxu0 0
        %782 = vmatpush1.bf16.msra.mxu0 0
        %783 = vmatprep.subr.bf16.mxu0 0
        %784 = vmatpush1.bf16.msra.mxu0 0
        %785 = vmatprep.subr.bf16.mxu0 0
        %786 = vmatpush1.bf16.msra.mxu0 0
        %787 = vmatprep.mubr.bf16.mxu0 0
        %788 = vmatmul.mubr.bf16.gmra.mrb[0].mxu0 %v701
        %v789 = vpop.f32.mrb[0].mxu0
        %v790 = vadd.f32 %v674, %v789
        %v791 = vpop.f32.mrb[0].mxu0
        %v792 = vpop.f32.mrb[0].mxu0
        %v793 = vpop.f32.mrb[0].mxu0
        %794 = vdwg.mxu0
        %v799 = vunpack.c.l.b16 %v651
        %v800 = vunpack.c.l.b16 %v652
        %v801 = vunpack.c.l.b16 %v653
        %v802 = vunpack.c.l.b16 %v654
        %v803 = vpack.c.b16 %v800, %v799
        %v804 = vpack.c.b16 %v802, %v801
        %807 = vmatprep.subr.bf16.mxu0 0
        %808 = vmatpush1.bf16.msra.mxu0 %v803
        %809 = vmatprep.subr.bf16.mxu0 0
        %810 = vmatpush1.bf16.msra.mxu0 %v804
        %811 = vmatprep.subr.bf16.mxu0 0
        %812 = vmatpush1.bf16.msra.mxu0 0
        %813 = vmatprep.subr.bf16.mxu0 0
        %814 = vmatpush1.bf16.msra.mxu0 0
        %815 = vmatprep.subr.bf16.mxu0 0
        %816 = vmatpush1.bf16.msra.mxu0 0
        %817 = vmatprep.subr.bf16.mxu0 0
        %818 = vmatpush1.bf16.msra.mxu0 0
        %819 = vmatprep.subr.bf16.mxu0 0
        %820 = vmatpush1.bf16.msra.mxu0 0
        %821 = vmatprep.subr.bf16.mxu0 0
        %822 = vmatpush1.bf16.msra.mxu0 0
        %823 = vmatprep.subr.bf16.mxu0 0
        %824 = vmatpush1.bf16.msra.mxu0 0
        %825 = vmatprep.subr.bf16.mxu0 0
        %826 = vmatpush1.bf16.msra.mxu0 0
        %827 = vmatprep.subr.bf16.mxu0 0
        %828 = vmatpush1.bf16.msra.mxu0 0
        %829 = vmatprep.subr.bf16.mxu0 0
        %830 = vmatpush1.bf16.msra.mxu0 0
        %831 = vmatprep.subr.bf16.mxu0 0
        %832 = vmatpush1.bf16.msra.mxu0 0
        %833 = vmatprep.subr.bf16.mxu0 0
        %834 = vmatpush1.bf16.msra.mxu0 0
        %835 = vmatprep.subr.bf16.mxu0 0
        %836 = vmatpush1.bf16.msra.mxu0 0
        %837 = vmatprep.subr.bf16.mxu0 0
        %838 = vmatpush1.bf16.msra.mxu0 0
        %839 = vmatprep.mubr.bf16.mxu0 0
        %840 = vmatmul.mubr.bf16.gmra.mrb[0].mxu0 %v701
        %v841 = vpop.f32.mrb[0].mxu0
        %v842 = vadd.f32 %v678, %v841
        %v843 = vpop.f32.mrb[0].mxu0
        %v844 = vpop.f32.mrb[0].mxu0
        %v845 = vpop.f32.mrb[0].mxu0
        %846 = vdwg.mxu0
        %v851 = vunpack.c.l.b16 %v655
        %v852 = vunpack.c.l.b16 %v656
        %v853 = vunpack.c.l.b16 %v657
        %v854 = vunpack.c.l.b16 %v658
        %v855 = vpack.c.b16 %v852, %v851
        %v856 = vpack.c.b16 %v854, %v853
        %859 = vmatprep.subr.bf16.mxu0 0
        %860 = vmatpush1.bf16.msra.mxu0 %v855
        %861 = vmatprep.subr.bf16.mxu0 0
        %862 = vmatpush1.bf16.msra.mxu0 %v856
        %863 = vmatprep.subr.bf16.mxu0 0
        %864 = vmatpush1.bf16.msra.mxu0 0
        %865 = vmatprep.subr.bf16.mxu0 0
        %866 = vmatpush1.bf16.msra.mxu0 0
        %867 = vmatprep.subr.bf16.mxu0 0
        %868 = vmatpush1.bf16.msra.mxu0 0
        %869 = vmatprep.subr.bf16.mxu0 0
        %870 = vmatpush1.bf16.msra.mxu0 0
        %871 = vmatprep.subr.bf16.mxu0 0
        %872 = vmatpush1.bf16.msra.mxu0 0
        %873 = vmatprep.subr.bf16.mxu0 0
        %874 = vmatpush1.bf16.msra.mxu0 0
        %875 = vmatprep.subr.bf16.mxu0 0
        %876 = vmatpush1.bf16.msra.mxu0 0
        %877 = vmatprep.subr.bf16.mxu0 0
        %878 = vmatpush1.bf16.msra.mxu0 0
        %879 = vmatprep.subr.bf16.mxu0 0
        %880 = vmatpush1.bf16.msra.mxu0 0
        %881 = vmatprep.subr.bf16.mxu0 0
        %882 = vmatpush1.bf16.msra.mxu0 0
        %883 = vmatprep.subr.bf16.mxu0 0
        %884 = vmatpush1.bf16.msra.mxu0 0
        %885 = vmatprep.subr.bf16.mxu0 0
        %886 = vmatpush1.bf16.msra.mxu0 0
        %887 = vmatprep.subr.bf16.mxu0 0
        %888 = vmatpush1.bf16.msra.mxu0 0
        %889 = vmatprep.subr.bf16.mxu0 0
        %890 = vmatpush1.bf16.msra.mxu0 0
        %891 = vmatprep.mubr.bf16.mxu0 0
        %892 = vmatmul.mubr.bf16.gmra.mrb[0].mxu0 %v701
        %v893 = vpop.f32.mrb[0].mxu0
        %v894 = vadd.f32 %v682, %v893
        %v895 = vpop.f32.mrb[0].mxu0
        %v896 = vpop.f32.mrb[0].mxu0
        %v897 = vpop.f32.mrb[0].mxu0
        %898 = vdwg.mxu0
        %v899 = vld [vmem:[%s3] sm:$0xf]
        %v900 = vld [vmem:[%s3 + $0x4] sm:$0xf]
        %v901 = vld [vmem:[%s3 + $0x8] sm:$0xf]
        %v902 = vld [vmem:[%s3 + $0xc] sm:$0xf]
        %v903 = vld [vmem:[%s3 + $0x10] sm:$0xf]
        %v904 = vld [vmem:[%s3 + $0x14] sm:$0xf]
        %v905 = vld [vmem:[%s3 + $0x18] sm:$0xf]
        %v906 = vld [vmem:[%s3 + $0x1c] sm:$0xf]
        %v907 = vld [vmem:[%s3 + $0x20] sm:$0xf]
        %v908 = vld [vmem:[%s3 + $0x24] sm:$0xf]
        %v909 = vld [vmem:[%s3 + $0x28] sm:$0xf]
        %v910 = vld [vmem:[%s3 + $0x2c] sm:$0xf]
        %v911 = vld [vmem:[%s3 + $0x30] sm:$0xf]
        %v912 = vld [vmem:[%s3 + $0x34] sm:$0xf]
        %v913 = vld [vmem:[%s3 + $0x38] sm:$0xf]
        %v914 = vld [vmem:[%s3 + $0x3c] sm:$0xf]
        %v915 = vld [vmem:[%s6] sm:$0x1]
        %v916 = vld [vmem:[%s6 + $0x1] sm:$0x1]
        %v917 = vld [vmem:[%s6 + $0x2] sm:$0x1]
        %v918 = vld [vmem:[%s6 + $0x3] sm:$0x1]
        %v923 = vlaneseq
        %v924 = vshrl.u32 %v923, 7
        %v925 = vsub.s32 0, %v924
        %v926 = vrot.slane %v915, %v925
        %v927 = vlaneseq
        %v928 = vshrl.u32 %v927, 7
        %v929 = vsub.s32 0, %v928
        %v930 = vrot.slane %v916, %v929
        %v931 = vlaneseq
        %v932 = vshrl.u32 %v931, 7
        %v933 = vsub.s32 0, %v932
        %v934 = vrot.slane %v917, %v933
        %v935 = vlaneseq
        %v936 = vshrl.u32 %v935, 7
        %v937 = vsub.s32 0, %v936
        %v938 = vrot.slane %v918, %v937
        %v947 = vunpack.c.l.b16 %v899
        %v948 = vunpack.c.l.b16 %v900
        %v949 = vunpack.c.l.b16 %v901
        %v950 = vunpack.c.l.b16 %v902
        %v951 = vpack.c.b16 %v948, %v947
        %v952 = vpack.c.b16 %v950, %v949
        %955 = vmatprep.subr.bf16.mxu0 0
        %956 = vmatpush1.bf16.msra.mxu0 %v951
        %957 = vmatprep.subr.bf16.mxu0 0
        %958 = vmatpush1.bf16.msra.mxu0 %v952
        %959 = vmatprep.subr.bf16.mxu0 0
        %960 = vmatpush1.bf16.msra.mxu0 0
        %961 = vmatprep.subr.bf16.mxu0 0
        %962 = vmatpush1.bf16.msra.mxu0 0
        %963 = vmatprep.subr.bf16.mxu0 0
        %964 = vmatpush1.bf16.msra.mxu0 0
        %965 = vmatprep.subr.bf16.mxu0 0
        %966 = vmatpush1.bf16.msra.mxu0 0
        %967 = vmatprep.subr.bf16.mxu0 0
        %968 = vmatpush1.bf16.msra.mxu0 0
        %969 = vmatprep.subr.bf16.mxu0 0
        %970 = vmatpush1.bf16.msra.mxu0 0
        %971 = vmatprep.subr.bf16.mxu0 0
        %972 = vmatpush1.bf16.msra.mxu0 0
        %973 = vmatprep.subr.bf16.mxu0 0
        %974 = vmatpush1.bf16.msra.mxu0 0
        %975 = vmatprep.subr.bf16.mxu0 0
        %976 = vmatpush1.bf16.msra.mxu0 0
        %977 = vmatprep.subr.bf16.mxu0 0
        %978 = vmatpush1.bf16.msra.mxu0 0
        %979 = vmatprep.subr.bf16.mxu0 0
        %980 = vmatpush1.bf16.msra.mxu0 0
        %981 = vmatprep.subr.bf16.mxu0 0
        %982 = vmatpush1.bf16.msra.mxu0 0
        %983 = vmatprep.subr.bf16.mxu0 0
        %984 = vmatpush1.bf16.msra.mxu0 0
        %985 = vmatprep.subr.bf16.mxu0 0
        %986 = vmatpush1.bf16.msra.mxu0 0
        %987 = vmatprep.mubr.bf16.mxu0 0
        %988 = vmatmul.mubr.bf16.gmra.mrb[0].mxu0 %v701
        %v989 = vpop.f32.mrb[0].mxu0
        %v990 = vadd.f32 %v926, %v989
        %v991 = vpop.f32.mrb[0].mxu0
        %v992 = vpop.f32.mrb[0].mxu0
        %v993 = vpop.f32.mrb[0].mxu0
        %994 = vdwg.mxu0
        %v999 = vunpack.c.l.b16 %v903
        %v1000 = vunpack.c.l.b16 %v904
        %v1001 = vunpack.c.l.b16 %v905
        %v1002 = vunpack.c.l.b16 %v906
        %v1003 = vpack.c.b16 %v1000, %v999
        %v1004 = vpack.c.b16 %v1002, %v1001
        %1007 = vmatprep.subr.bf16.mxu0 0
        %1008 = vmatpush1.bf16.msra.mxu0 %v1003
        %1009 = vmatprep.subr.bf16.mxu0 0
        %1010 = vmatpush1.bf16.msra.mxu0 %v1004
        %1011 = vmatprep.subr.bf16.mxu0 0
        %1012 = vmatpush1.bf16.msra.mxu0 0
        %1013 = vmatprep.subr.bf16.mxu0 0
        %1014 = vmatpush1.bf16.msra.mxu0 0
        %1015 = vmatprep.subr.bf16.mxu0 0
        %1016 = vmatpush1.bf16.msra.mxu0 0
        %1017 = vmatprep.subr.bf16.mxu0 0
        %1018 = vmatpush1.bf16.msra.mxu0 0
        %1019 = vmatprep.subr.bf16.mxu0 0
        %1020 = vmatpush1.bf16.msra.mxu0 0
        %1021 = vmatprep.subr.bf16.mxu0 0
        %1022 = vmatpush1.bf16.msra.mxu0 0
        %1023 = vmatprep.subr.bf16.mxu0 0
        %1024 = vmatpush1.bf16.msra.mxu0 0
        %1025 = vmatprep.subr.bf16.mxu0 0
        %1026 = vmatpush1.bf16.msra.mxu0 0
        %1027 = vmatprep.subr.bf16.mxu0 0
        %1028 = vmatpush1.bf16.msra.mxu0 0
        %1029 = vmatprep.subr.bf16.mxu0 0
        %1030 = vmatpush1.bf16.msra.mxu0 0
        %1031 = vmatprep.subr.bf16.mxu0 0
        %1032 = vmatpush1.bf16.msra.mxu0 0
        %1033 = vmatprep.subr.bf16.mxu0 0
        %1034 = vmatpush1.bf16.msra.mxu0 0
        %1035 = vmatprep.subr.bf16.mxu0 0
        %1036 = vmatpush1.bf16.msra.mxu0 0
        %1037 = vmatprep.subr.bf16.mxu0 0
        %1038 = vmatpush1.bf16.msra.mxu0 0
        %1039 = vmatprep.mubr.bf16.mxu0 0
        %1040 = vmatmul.mubr.bf16.gmra.mrb[0].mxu0 %v701
        %v1041 = vpop.f32.mrb[0].mxu0
        %v1042 = vadd.f32 %v930, %v1041
        %v1043 = vpop.f32.mrb[0].mxu0
        %v1044 = vpop.f32.mrb[0].mxu0
        %v1045 = vpop.f32.mrb[0].mxu0
        %1046 = vdwg.mxu0
        %v1051 = vunpack.c.l.b16 %v907
        %v1052 = vunpack.c.l.b16 %v908
        %v1053 = vunpack.c.l.b16 %v909
        %v1054 = vunpack.c.l.b16 %v910
        %v1055 = vpack.c.b16 %v1052, %v1051
        %v1056 = vpack.c.b16 %v1054, %v1053
        %1059 = vmatprep.subr.bf16.mxu0 0
        %1060 = vmatpush1.bf16.msra.mxu0 %v1055
        %1061 = vmatprep.subr.bf16.mxu0 0
        %1062 = vmatpush1.bf16.msra.mxu0 %v1056
        %1063 = vmatprep.subr.bf16.mxu0 0
        %1064 = vmatpush1.bf16.msra.mxu0 0
        %1065 = vmatprep.subr.bf16.mxu0 0
        %1066 = vmatpush1.bf16.msra.mxu0 0
        %1067 = vmatprep.subr.bf16.mxu0 0
        %1068 = vmatpush1.bf16.msra.mxu0 0
        %1069 = vmatprep.subr.bf16.mxu0 0
        %1070 = vmatpush1.bf16.msra.mxu0 0
        %1071 = vmatprep.subr.bf16.mxu0 0
        %1072 = vmatpush1.bf16.msra.mxu0 0
        %1073 = vmatprep.subr.bf16.mxu0 0
        %1074 = vmatpush1.bf16.msra.mxu0 0
        %1075 = vmatprep.subr.bf16.mxu0 0
        %1076 = vmatpush1.bf16.msra.mxu0 0
        %1077 = vmatprep.subr.bf16.mxu0 0
        %1078 = vmatpush1.bf16.msra.mxu0 0
        %1079 = vmatprep.subr.bf16.mxu0 0
        %1080 = vmatpush1.bf16.msra.mxu0 0
        %1081 = vmatprep.subr.bf16.mxu0 0
        %1082 = vmatpush1.bf16.msra.mxu0 0
        %1083 = vmatprep.subr.bf16.mxu0 0
        %1084 = vmatpush1.bf16.msra.mxu0 0
        %1085 = vmatprep.subr.bf16.mxu0 0
        %1086 = vmatpush1.bf16.msra.mxu0 0
        %1087 = vmatprep.subr.bf16.mxu0 0
        %1088 = vmatpush1.bf16.msra.mxu0 0
        %1089 = vmatprep.subr.bf16.mxu0 0
        %1090 = vmatpush1.bf16.msra.mxu0 0
        %1091 = vmatprep.mubr.bf16.mxu0 0
        %1092 = vmatmul.mubr.bf16.gmra.mrb[0].mxu0 %v701
        %v1093 = vpop.f32.mrb[0].mxu0
        %v1094 = vadd.f32 %v934, %v1093
        %v1095 = vpop.f32.mrb[0].mxu0
        %v1096 = vpop.f32.mrb[0].mxu0
        %v1097 = vpop.f32.mrb[0].mxu0
        %1098 = vdwg.mxu0
        %v1103 = vunpack.c.l.b16 %v911
        %v1104 = vunpack.c.l.b16 %v912
        %v1105 = vunpack.c.l.b16 %v913
        %v1106 = vunpack.c.l.b16 %v914
        %v1107 = vpack.c.b16 %v1104, %v1103
        %v1108 = vpack.c.b16 %v1106, %v1105
        %1111 = vmatprep.subr.bf16.mxu0 0
        %1112 = vmatpush1.bf16.msra.mxu0 %v1107
        %1113 = vmatprep.subr.bf16.mxu0 0
        %1114 = vmatpush1.bf16.msra.mxu0 %v1108
        %1115 = vmatprep.subr.bf16.mxu0 0
        %1116 = vmatpush1.bf16.msra.mxu0 0
        %1117 = vmatprep.subr.bf16.mxu0 0
        %1118 = vmatpush1.bf16.msra.mxu0 0
        %1119 = vmatprep.subr.bf16.mxu0 0
        %1120 = vmatpush1.bf16.msra.mxu0 0
        %1121 = vmatprep.subr.bf16.mxu0 0
        %1122 = vmatpush1.bf16.msra.mxu0 0
        %1123 = vmatprep.subr.bf16.mxu0 0
        %1124 = vmatpush1.bf16.msra.mxu0 0
        %1125 = vmatprep.subr.bf16.mxu0 0
        %1126 = vmatpush1.bf16.msra.mxu0 0
        %1127 = vmatprep.subr.bf16.mxu0 0
        %1128 = vmatpush1.bf16.msra.mxu0 0
        %1129 = vmatprep.subr.bf16.mxu0 0
        %1130 = vmatpush1.bf16.msra.mxu0 0
        %1131 = vmatprep.subr.bf16.mxu0 0
        %1132 = vmatpush1.bf16.msra.mxu0 0
        %1133 = vmatprep.subr.bf16.mxu0 0
        %1134 = vmatpush1.bf16.msra.mxu0 0
        %1135 = vmatprep.subr.bf16.mxu0 0
        %1136 = vmatpush1.bf16.msra.mxu0 0
        %1137 = vmatprep.subr.bf16.mxu0 0
        %1138 = vmatpush1.bf16.msra.mxu0 0
        %1139 = vmatprep.subr.bf16.mxu0 0
        %1140 = vmatpush1.bf16.msra.mxu0 0
        %1141 = vmatprep.subr.bf16.mxu0 0
        %1142 = vmatpush1.bf16.msra.mxu0 0
        %1143 = vmatprep.mubr.bf16.mxu0 0
        %1144 = vmatmul.mubr.bf16.gmra.mrb[0].mxu0 %v701
        %v1145 = vpop.f32.mrb[0].mxu0
        %v1146 = vadd.f32 %v938, %v1145
        %v1147 = vpop.f32.mrb[0].mxu0
        %v1148 = vpop.f32.mrb[0].mxu0
        %v1149 = vpop.f32.mrb[0].mxu0
        %1150 = vdwg.mxu0
        %v1151 = vld [vmem:[%s4] sm:$0xf]
        %v1152 = vld [vmem:[%s4 + $0x4] sm:$0xf]
        %v1153 = vld [vmem:[%s4 + $0x8] sm:$0xf]
        %v1154 = vld [vmem:[%s4 + $0xc] sm:$0xf]
        %v1155 = vld [vmem:[%s4 + $0x10] sm:$0xf]
        %v1156 = vld [vmem:[%s4 + $0x14] sm:$0xf]
        %v1157 = vld [vmem:[%s4 + $0x18] sm:$0xf]
        %v1158 = vld [vmem:[%s4 + $0x1c] sm:$0xf]
        %v1159 = vld [vmem:[%s4 + $0x20] sm:$0xf]
        %v1160 = vld [vmem:[%s4 + $0x24] sm:$0xf]
        %v1161 = vld [vmem:[%s4 + $0x28] sm:$0xf]
        %v1162 = vld [vmem:[%s4 + $0x2c] sm:$0xf]
        %v1163 = vld [vmem:[%s4 + $0x30] sm:$0xf]
        %v1164 = vld [vmem:[%s4 + $0x34] sm:$0xf]
        %v1165 = vld [vmem:[%s4 + $0x38] sm:$0xf]
        %v1166 = vld [vmem:[%s4 + $0x3c] sm:$0xf]
        %v1167 = vld [vmem:[%s7] sm:$0x1]
        %v1168 = vld [vmem:[%s7 + $0x1] sm:$0x1]
        %v1169 = vld [vmem:[%s7 + $0x2] sm:$0x1]
        %v1170 = vld [vmem:[%s7 + $0x3] sm:$0x1]
        %v1175 = vlaneseq
        %v1176 = vshrl.u32 %v1175, 7
        %v1177 = vsub.s32 0, %v1176
        %v1178 = vrot.slane %v1167, %v1177
        %v1179 = vlaneseq
        %v1180 = vshrl.u32 %v1179, 7
        %v1181 = vsub.s32 0, %v1180
        %v1182 = vrot.slane %v1168, %v1181
        %v1183 = vlaneseq
        %v1184 = vshrl.u32 %v1183, 7
        %v1185 = vsub.s32 0, %v1184
        %v1186 = vrot.slane %v1169, %v1185
        %v1187 = vlaneseq
        %v1188 = vshrl.u32 %v1187, 7
        %v1189 = vsub.s32 0, %v1188
        %v1190 = vrot.slane %v1170, %v1189
        %v1199 = vunpack.c.l.b16 %v1151
        %v1200 = vunpack.c.l.b16 %v1152
        %v1201 = vunpack.c.l.b16 %v1153
        %v1202 = vunpack.c.l.b16 %v1154
        %v1203 = vpack.c.b16 %v1200, %v1199
        %v1204 = vpack.c.b16 %v1202, %v1201
        %1207 = vmatprep.subr.bf16.mxu0 0
        %1208 = vmatpush1.bf16.msra.mxu0 %v1203
        %1209 = vmatprep.subr.bf16.mxu0 0
        %1210 = vmatpush1.bf16.msra.mxu0 %v1204
        %1211 = vmatprep.subr.bf16.mxu0 0
        %1212 = vmatpush1.bf16.msra.mxu0 0
        %1213 = vmatprep.subr.bf16.mxu0 0
        %1214 = vmatpush1.bf16.msra.mxu0 0
        %1215 = vmatprep.subr.bf16.mxu0 0
        %1216 = vmatpush1.bf16.msra.mxu0 0
        %1217 = vmatprep.subr.bf16.mxu0 0
        %1218 = vmatpush1.bf16.msra.mxu0 0
        %1219 = vmatprep.subr.bf16.mxu0 0
        %1220 = vmatpush1.bf16.msra.mxu0 0
        %1221 = vmatprep.subr.bf16.mxu0 0
        %1222 = vmatpush1.bf16.msra.mxu0 0
        %1223 = vmatprep.subr.bf16.mxu0 0
        %1224 = vmatpush1.bf16.msra.mxu0 0
        %1225 = vmatprep.subr.bf16.mxu0 0
        %1226 = vmatpush1.bf16.msra.mxu0 0
        %1227 = vmatprep.subr.bf16.mxu0 0
        %1228 = vmatpush1.bf16.msra.mxu0 0
        %1229 = vmatprep.subr.bf16.mxu0 0
        %1230 = vmatpush1.bf16.msra.mxu0 0
        %1231 = vmatprep.subr.bf16.mxu0 0
        %1232 = vmatpush1.bf16.msra.mxu0 0
        %1233 = vmatprep.subr.bf16.mxu0 0
        %1234 = vmatpush1.bf16.msra.mxu0 0
        %1235 = vmatprep.subr.bf16.mxu0 0
        %1236 = vmatpush1.bf16.msra.mxu0 0
        %1237 = vmatprep.subr.bf16.mxu0 0
        %1238 = vmatpush1.bf16.msra.mxu0 0
        %1239 = vmatprep.mubr.bf16.mxu0 0
        %1240 = vmatmul.mubr.bf16.gmra.mrb[0].mxu0 %v701
        %v1241 = vpop.f32.mrb[0].mxu0
        %v1242 = vadd.f32 %v1178, %v1241
        %v1243 = vpop.f32.mrb[0].mxu0
        %v1244 = vpop.f32.mrb[0].mxu0
        %v1245 = vpop.f32.mrb[0].mxu0
        %1246 = vdwg.mxu0
        %v1251 = vunpack.c.l.b16 %v1155
        %v1252 = vunpack.c.l.b16 %v1156
        %v1253 = vunpack.c.l.b16 %v1157
        %v1254 = vunpack.c.l.b16 %v1158
        %v1255 = vpack.c.b16 %v1252, %v1251
        %v1256 = vpack.c.b16 %v1254, %v1253
        %1259 = vmatprep.subr.bf16.mxu0 0
        %1260 = vmatpush1.bf16.msra.mxu0 %v1255
        %1261 = vmatprep.subr.bf16.mxu0 0
        %1262 = vmatpush1.bf16.msra.mxu0 %v1256
        %1263 = vmatprep.subr.bf16.mxu0 0
        %1264 = vmatpush1.bf16.msra.mxu0 0
        %1265 = vmatprep.subr.bf16.mxu0 0
        %1266 = vmatpush1.bf16.msra.mxu0 0
        %1267 = vmatprep.subr.bf16.mxu0 0
        %1268 = vmatpush1.bf16.msra.mxu0 0
        %1269 = vmatprep.subr.bf16.mxu0 0
        %1270 = vmatpush1.bf16.msra.mxu0 0
        %1271 = vmatprep.subr.bf16.mxu0 0
        %1272 = vmatpush1.bf16.msra.mxu0 0
        %1273 = vmatprep.subr.bf16.mxu0 0
        %1274 = vmatpush1.bf16.msra.mxu0 0
        %1275 = vmatprep.subr.bf16.mxu0 0
        %1276 = vmatpush1.bf16.msra.mxu0 0
        %1277 = vmatprep.subr.bf16.mxu0 0
        %1278 = vmatpush1.bf16.msra.mxu0 0
        %1279 = vmatprep.subr.bf16.mxu0 0
        %1280 = vmatpush1.bf16.msra.mxu0 0
        %1281 = vmatprep.subr.bf16.mxu0 0
        %1282 = vmatpush1.bf16.msra.mxu0 0
        %1283 = vmatprep.subr.bf16.mxu0 0
        %1284 = vmatpush1.bf16.msra.mxu0 0
        %1285 = vmatprep.subr.bf16.mxu0 0
        %1286 = vmatpush1.bf16.msra.mxu0 0
        %1287 = vmatprep.subr.bf16.mxu0 0
        %1288 = vmatpush1.bf16.msra.mxu0 0
        %1289 = vmatprep.subr.bf16.mxu0 0
        %1290 = vmatpush1.bf16.msra.mxu0 0
        %1291 = vmatprep.mubr.bf16.mxu0 0
        %1292 = vmatmul.mubr.bf16.gmra.mrb[0].mxu0 %v701
        %v1293 = vpop.f32.mrb[0].mxu0
        %v1294 = vadd.f32 %v1182, %v1293
        %v1295 = vpop.f32.mrb[0].mxu0
        %v1296 = vpop.f32.mrb[0].mxu0
        %v1297 = vpop.f32.mrb[0].mxu0
        %1298 = vdwg.mxu0
        %v1303 = vunpack.c.l.b16 %v1159
        %v1304 = vunpack.c.l.b16 %v1160
        %v1305 = vunpack.c.l.b16 %v1161
        %v1306 = vunpack.c.l.b16 %v1162
        %v1307 = vpack.c.b16 %v1304, %v1303
        %v1308 = vpack.c.b16 %v1306, %v1305
        %1311 = vmatprep.subr.bf16.mxu0 0
        %1312 = vmatpush1.bf16.msra.mxu0 %v1307
        %1313 = vmatprep.subr.bf16.mxu0 0
        %1314 = vmatpush1.bf16.msra.mxu0 %v1308
        %1315 = vmatprep.subr.bf16.mxu0 0
        %1316 = vmatpush1.bf16.msra.mxu0 0
        %1317 = vmatprep.subr.bf16.mxu0 0
        %1318 = vmatpush1.bf16.msra.mxu0 0
        %1319 = vmatprep.subr.bf16.mxu0 0
        %1320 = vmatpush1.bf16.msra.mxu0 0
        %1321 = vmatprep.subr.bf16.mxu0 0
        %1322 = vmatpush1.bf16.msra.mxu0 0
        %1323 = vmatprep.subr.bf16.mxu0 0
        %1324 = vmatpush1.bf16.msra.mxu0 0
        %1325 = vmatprep.subr.bf16.mxu0 0
        %1326 = vmatpush1.bf16.msra.mxu0 0
        %1327 = vmatprep.subr.bf16.mxu0 0
        %1328 = vmatpush1.bf16.msra.mxu0 0
        %1329 = vmatprep.subr.bf16.mxu0 0
        %1330 = vmatpush1.bf16.msra.mxu0 0
        %1331 = vmatprep.subr.bf16.mxu0 0
        %1332 = vmatpush1.bf16.msra.mxu0 0
        %1333 = vmatprep.subr.bf16.mxu0 0
        %1334 = vmatpush1.bf16.msra.mxu0 0
        %1335 = vmatprep.subr.bf16.mxu0 0
        %1336 = vmatpush1.bf16.msra.mxu0 0
        %1337 = vmatprep.subr.bf16.mxu0 0
        %1338 = vmatpush1.bf16.msra.mxu0 0
        %1339 = vmatprep.subr.bf16.mxu0 0
        %1340 = vmatpush1.bf16.msra.mxu0 0
        %1341 = vmatprep.subr.bf16.mxu0 0
        %1342 = vmatpush1.bf16.msra.mxu0 0
        %1343 = vmatprep.mubr.bf16.mxu0 0
        %1344 = vmatmul.mubr.bf16.gmra.mrb[0].mxu0 %v701
        %v1345 = vpop.f32.mrb[0].mxu0
        %v1346 = vadd.f32 %v1186, %v1345
        %v1347 = vpop.f32.mrb[0].mxu0
        %v1348 = vpop.f32.mrb[0].mxu0
        %v1349 = vpop.f32.mrb[0].mxu0
        %1350 = vdwg.mxu0
        %v1355 = vunpack.c.l.b16 %v1163
        %v1356 = vunpack.c.l.b16 %v1164
        %v1357 = vunpack.c.l.b16 %v1165
        %v1358 = vunpack.c.l.b16 %v1166
        %v1359 = vpack.c.b16 %v1356, %v1355
        %v1360 = vpack.c.b16 %v1358, %v1357
        %1363 = vmatprep.subr.bf16.mxu0 0
        %1364 = vmatpush1.bf16.msra.mxu0 %v1359
        %1365 = vmatprep.subr.bf16.mxu0 0
        %1366 = vmatpush1.bf16.msra.mxu0 %v1360
        %1367 = vmatprep.subr.bf16.mxu0 0
        %1368 = vmatpush1.bf16.msra.mxu0 0
        %1369 = vmatprep.subr.bf16.mxu0 0
        %1370 = vmatpush1.bf16.msra.mxu0 0
        %1371 = vmatprep.subr.bf16.mxu0 0
        %1372 = vmatpush1.bf16.msra.mxu0 0
        %1373 = vmatprep.subr.bf16.mxu0 0
        %1374 = vmatpush1.bf16.msra.mxu0 0
        %1375 = vmatprep.subr.bf16.mxu0 0
        %1376 = vmatpush1.bf16.msra.mxu0 0
        %1377 = vmatprep.subr.bf16.mxu0 0
        %1378 = vmatpush1.bf16.msra.mxu0 0
        %1379 = vmatprep.subr.bf16.mxu0 0
        %1380 = vmatpush1.bf16.msra.mxu0 0
        %1381 = vmatprep.subr.bf16.mxu0 0
        %1382 = vmatpush1.bf16.msra.mxu0 0
        %1383 = vmatprep.subr.bf16.mxu0 0
        %1384 = vmatpush1.bf16.msra.mxu0 0
        %1385 = vmatprep.subr.bf16.mxu0 0
        %1386 = vmatpush1.bf16.msra.mxu0 0
        %1387 = vmatprep.subr.bf16.mxu0 0
        %1388 = vmatpush1.bf16.msra.mxu0 0
        %1389 = vmatprep.subr.bf16.mxu0 0
        %1390 = vmatpush1.bf16.msra.mxu0 0
        %1391 = vmatprep.subr.bf16.mxu0 0
        %1392 = vmatpush1.bf16.msra.mxu0 0
        %1393 = vmatprep.subr.bf16.mxu0 0
        %1394 = vmatpush1.bf16.msra.mxu0 0
        %1395 = vmatprep.mubr.bf16.mxu0 0
        %1396 = vmatmul.mubr.bf16.gmra.mrb[0].mxu0 %v701
        %v1397 = vpop.f32.mrb[0].mxu0
        %v1398 = vadd.f32 %v1190, %v1397
        %v1399 = vpop.f32.mrb[0].mxu0
        %v1400 = vpop.f32.mrb[0].mxu0
        %v1401 = vpop.f32.mrb[0].mxu0
        %1402 = vdwg.mxu0
        %v1403 = vpack.c.bf16 %v738, %v738
        %v1404 = vpack.c.bf16 %v790, %v790
        %v1405 = vpack.c.bf16 %v842, %v842
        %v1406 = vpack.c.bf16 %v894, %v894
        %v1407 = vpack.c.bf16 %v990, %v990
        %v1408 = vpack.c.bf16 %v1042, %v1042
        %v1409 = vpack.c.bf16 %v1094, %v1094
        %v1410 = vpack.c.bf16 %v1146, %v1146
        %vm1411 = vcmask 64512
        %v1413 = vsel %vm1411, %v1403, 0
        %v1416 = vsel %vm1411, %v1407, 0
        %1418 = vmatprep.subr.bf16.mxu0 0
        %1419 = vmatpush1.bf16.xpose.msra.mxu0 %v1416
        %1420 = vmatprep.subr.bf16.mxu0 0
        %1421 = vmatpush1.bf16.xpose.msra.mxu0 0
        %1422 = vmatprep.subr.bf16.mxu0 0
        %1423 = vmatpush1.bf16.xpose.msra.mxu0 0
        %1424 = vmatprep.subr.bf16.mxu0 0
        %1425 = vmatpush1.bf16.xpose.msra.mxu0 0
        %1426 = vmatprep.subr.bf16.mxu0 0
        %1427 = vmatpush1.bf16.xpose.msra.mxu0 0
        %1428 = vmatprep.subr.bf16.mxu0 0
        %1429 = vmatpush1.bf16.xpose.msra.mxu0 0
        %1430 = vmatprep.subr.bf16.mxu0 0
        %1431 = vmatpush1.bf16.xpose.msra.mxu0 0
        %1432 = vmatprep.subr.bf16.mxu0 0
        %1433 = vmatpush1.bf16.xpose.msra.mxu0 0
        %1434 = vmatprep.subr.bf16.mxu0 0
        %1435 = vmatpush1.bf16.xpose.msra.mxu0 0
        %1436 = vmatprep.subr.bf16.mxu0 0
        %1437 = vmatpush1.bf16.xpose.msra.mxu0 0
        %1438 = vmatprep.subr.bf16.mxu0 0
        %1439 = vmatpush1.bf16.xpose.msra.mxu0 0
        %1440 = vmatprep.subr.bf16.mxu0 0
        %1441 = vmatpush1.bf16.xpose.msra.mxu0 0
        %1442 = vmatprep.subr.bf16.mxu0 0
        %1443 = vmatpush1.bf16.xpose.msra.mxu0 0
        %1444 = vmatprep.subr.bf16.mxu0 0
        %1445 = vmatpush1.bf16.xpose.msra.mxu0 0
        %1446 = vmatprep.subr.bf16.mxu0 0
        %1447 = vmatpush1.bf16.xpose.msra.mxu0 0
        %1448 = vmatprep.subr.bf16.mxu0 0
        %1449 = vmatpush1.bf16.xpose.msra.mxu0 0
        %1450 = vmatprep.mubr.bf16.mxu0 0
        %1451 = vmatmul.mubr.bf16.gmra.mrb[0].mxu0 %v1413
        %v1452 = vpop.f32.mrb[0].mxu0
        %v1453 = vadd.f32 0.0, %v1452
        %v1454 = vpop.f32.mrb[0].mxu0
        %v1455 = vpop.f32.mrb[0].mxu0
        %v1456 = vpop.f32.mrb[0].mxu0
        %1457 = vdwg.mxu0
        %v1459 = vsel %vm1411, %v1404, 0
        %v1462 = vsel %vm1411, %v1408, 0
        %1464 = vmatprep.subr.bf16.mxu0 0
        %1465 = vmatpush1.bf16.xpose.msra.mxu0 %v1462
        %1466 = vmatprep.subr.bf16.mxu0 0
        %1467 = vmatpush1.bf16.xpose.msra.mxu0 0
        %1468 = vmatprep.subr.bf16.mxu0 0
        %1469 = vmatpush1.bf16.xpose.msra.mxu0 0
        %1470 = vmatprep.subr.bf16.mxu0 0
        %1471 = vmatpush1.bf16.xpose.msra.mxu0 0
        %1472 = vmatprep.subr.bf16.mxu0 0
        %1473 = vmatpush1.bf16.xpose.msra.mxu0 0
        %1474 = vmatprep.subr.bf16.mxu0 0
        %1475 = vmatpush1.bf16.xpose.msra.mxu0 0
        %1476 = vmatprep.subr.bf16.mxu0 0
        %1477 = vmatpush1.bf16.xpose.msra.mxu0 0
        %1478 = vmatprep.subr.bf16.mxu0 0
        %1479 = vmatpush1.bf16.xpose.msra.mxu0 0
        %1480 = vmatprep.subr.bf16.mxu0 0
        %1481 = vmatpush1.bf16.xpose.msra.mxu0 0
        %1482 = vmatprep.subr.bf16.mxu0 0
        %1483 = vmatpush1.bf16.xpose.msra.mxu0 0
        %1484 = vmatprep.subr.bf16.mxu0 0
        %1485 = vmatpush1.bf16.xpose.msra.mxu0 0
        %1486 = vmatprep.subr.bf16.mxu0 0
        %1487 = vmatpush1.bf16.xpose.msra.mxu0 0
        %1488 = vmatprep.subr.bf16.mxu0 0
        %1489 = vmatpush1.bf16.xpose.msra.mxu0 0
        %1490 = vmatprep.subr.bf16.mxu0 0
        %1491 = vmatpush1.bf16.xpose.msra.mxu0 0
        %1492 = vmatprep.subr.bf16.mxu0 0
        %1493 = vmatpush1.bf16.xpose.msra.mxu0 0
        %1494 = vmatprep.subr.bf16.mxu0 0
        %1495 = vmatpush1.bf16.xpose.msra.mxu0 0
        %1496 = vmatprep.mubr.bf16.mxu0 0
        %1497 = vmatmul.mubr.bf16.gmra.mrb[0].mxu0 %v1459
        %v1498 = vpop.f32.mrb[0].mxu0
        %v1499 = vadd.f32 0.0, %v1498
        %v1500 = vpop.f32.mrb[0].mxu0
        %v1501 = vpop.f32.mrb[0].mxu0
        %v1502 = vpop.f32.mrb[0].mxu0
        %1503 = vdwg.mxu0
        %v1505 = vsel %vm1411, %v1405, 0
        %v1508 = vsel %vm1411, %v1409, 0
        %1510 = vmatprep.subr.bf16.mxu0 0
        %1511 = vmatpush1.bf16.xpose.msra.mxu0 %v1508
        %1512 = vmatprep.subr.bf16.mxu0 0
        %1513 = vmatpush1.bf16.xpose.msra.mxu0 0
        %1514 = vmatprep.subr.bf16.mxu0 0
        %1515 = vmatpush1.bf16.xpose.msra.mxu0 0
        %1516 = vmatprep.subr.bf16.mxu0 0
        %1517 = vmatpush1.bf16.xpose.msra.mxu0 0
        %1518 = vmatprep.subr.bf16.mxu0 0
        %1519 = vmatpush1.bf16.xpose.msra.mxu0 0
        %1520 = vmatprep.subr.bf16.mxu0 0
        %1521 = vmatpush1.bf16.xpose.msra.mxu0 0
        %1522 = vmatprep.subr.bf16.mxu0 0
        %1523 = vmatpush1.bf16.xpose.msra.mxu0 0
        %1524 = vmatprep.subr.bf16.mxu0 0
        %1525 = vmatpush1.bf16.xpose.msra.mxu0 0
        %1526 = vmatprep.subr.bf16.mxu0 0
        %1527 = vmatpush1.bf16.xpose.msra.mxu0 0
        %1528 = vmatprep.subr.bf16.mxu0 0
        %1529 = vmatpush1.bf16.xpose.msra.mxu0 0
        %1530 = vmatprep.subr.bf16.mxu0 0
        %1531 = vmatpush1.bf16.xpose.msra.mxu0 0
        %1532 = vmatprep.subr.bf16.mxu0 0
        %1533 = vmatpush1.bf16.xpose.msra.mxu0 0
        %1534 = vmatprep.subr.bf16.mxu0 0
        %1535 = vmatpush1.bf16.xpose.msra.mxu0 0
        %1536 = vmatprep.subr.bf16.mxu0 0
        %1537 = vmatpush1.bf16.xpose.msra.mxu0 0
        %1538 = vmatprep.subr.bf16.mxu0 0
        %1539 = vmatpush1.bf16.xpose.msra.mxu0 0
        %1540 = vmatprep.subr.bf16.mxu0 0
        %1541 = vmatpush1.bf16.xpose.msra.mxu0 0
        %1542 = vmatprep.mubr.bf16.mxu0 0
        %1543 = vmatmul.mubr.bf16.gmra.mrb[0].mxu0 %v1505
        %v1544 = vpop.f32.mrb[0].mxu0
        %v1545 = vadd.f32 0.0, %v1544
        %v1546 = vpop.f32.mrb[0].mxu0
        %v1547 = vpop.f32.mrb[0].mxu0
        %v1548 = vpop.f32.mrb[0].mxu0
        %1549 = vdwg.mxu0
        %v1551 = vsel %vm1411, %v1406, 0
        %v1554 = vsel %vm1411, %v1410, 0
        %1556 = vmatprep.subr.bf16.mxu0 0
        %1557 = vmatpush1.bf16.xpose.msra.mxu0 %v1554
        %1558 = vmatprep.subr.bf16.mxu0 0
        %1559 = vmatpush1.bf16.xpose.msra.mxu0 0
        %1560 = vmatprep.subr.bf16.mxu0 0
        %1561 = vmatpush1.bf16.xpose.msra.mxu0 0
        %1562 = vmatprep.subr.bf16.mxu0 0
        %1563 = vmatpush1.bf16.xpose.msra.mxu0 0
        %1564 = vmatprep.subr.bf16.mxu0 0
        %1565 = vmatpush1.bf16.xpose.msra.mxu0 0
        %1566 = vmatprep.subr.bf16.mxu0 0
        %1567 = vmatpush1.bf16.xpose.msra.mxu0 0
        %1568 = vmatprep.subr.bf16.mxu0 0
        %1569 = vmatpush1.bf16.xpose.msra.mxu0 0
        %1570 = vmatprep.subr.bf16.mxu0 0
        %1571 = vmatpush1.bf16.xpose.msra.mxu0 0
        %1572 = vmatprep.subr.bf16.mxu0 0
        %1573 = vmatpush1.bf16.xpose.msra.mxu0 0
        %1574 = vmatprep.subr.bf16.mxu0 0
        %1575 = vmatpush1.bf16.xpose.msra.mxu0 0
        %1576 = vmatprep.subr.bf16.mxu0 0
        %1577 = vmatpush1.bf16.xpose.msra.mxu0 0
        %1578 = vmatprep.subr.bf16.mxu0 0
        %1579 = vmatpush1.bf16.xpose.msra.mxu0 0
        %1580 = vmatprep.subr.bf16.mxu0 0
        %1581 = vmatpush1.bf16.xpose.msra.mxu0 0
        %1582 = vmatprep.subr.bf16.mxu0 0
        %1583 = vmatpush1.bf16.xpose.msra.mxu0 0
        %1584 = vmatprep.subr.bf16.mxu0 0
        %1585 = vmatpush1.bf16.xpose.msra.mxu0 0
        %1586 = vmatprep.subr.bf16.mxu0 0
        %1587 = vmatpush1.bf16.xpose.msra.mxu0 0
        %1588 = vmatprep.mubr.bf16.mxu0 0
        %1589 = vmatmul.mubr.bf16.gmra.mrb[0].mxu0 %v1551
        %v1590 = vpop.f32.mrb[0].mxu0
        %v1591 = vadd.f32 0.0, %v1590
        %v1592 = vpop.f32.mrb[0].mxu0
        %v1593 = vpop.f32.mrb[0].mxu0
        %v1594 = vpop.f32.mrb[0].mxu0
        %1595 = vdwg.mxu0
        %v1596 = vmul.f32 %v1453, 0.35355338
        %v1597 = vmul.f32 %v1499, 0.35355338
        %v1598 = vmul.f32 %v1545, 0.35355338
        %v1599 = vmul.f32 %v1591, 0.35355338
        %v1601 = vlaneseq
        %v1602 = vshrl.u32 %v1601, 7
        %v1603 = vsub.s32 0, %v1602
        %v1604 = vrot.slane %v641, %v1603
        %v1606 = vadd.f32 %v1596, %v1604
        %v1607 = vadd.f32 %v1597, %v1604
        %v1608 = vadd.f32 %v1598, %v1604
        %v1609 = vadd.f32 %v1599, %v1604
        %v1610 = vsel %vm1411, %v1606, -inf
        %1611 = vmax.xlane.f32.xlu0 %v1610
        %v1612 = vpop.xlane.xlu0 %1611
        %v1613 = vsel %vm1411, %v1607, -inf
        %1614 = vmax.xlane.f32.xlu0 %v1613
        %v1615 = vpop.xlane.xlu0 %1614
        %v1616 = vsel %vm1411, %v1608, -inf
        %1617 = vmax.xlane.f32.xlu0 %v1616
        %v1618 = vpop.xlane.xlu0 %1617
        %v1619 = vsel %vm1411, %v1609, -inf
        %1620 = vmax.xlane.f32.xlu0 %v1619
        %v1621 = vpop.xlane.xlu0 %1620
        %v1622 = vsub.f32 %v1606, %v1612
        %v1623 = vsub.f32 %v1607, %v1615
        %v1624 = vsub.f32 %v1608, %v1618
        %v1625 = vsub.f32 %v1609, %v1621
        %v1626 = vmul.f32 %v1622, 1.442695
        %v1627 = vpow.pop %v1626
        %v1628 = vmul.f32 %v1623, 1.442695
        %v1629 = vpow.pop %v1628
        %v1630 = vmul.f32 %v1624, 1.442695
        %v1631 = vpow.pop %v1630
        %v1632 = vmul.f32 %v1625, 1.442695
        %v1633 = vpow.pop %v1632
        %v1634 = vsel %vm1411, %v1627, 0.0
        %1635 = vadd.xlane.f32.xlu0 %v1634
        %v1636 = vpop.xlane.xlu0 %1635
        %v1637 = vsel %vm1411, %v1629, 0.0
        %1638 = vadd.xlane.f32.xlu0 %v1637
        %v1639 = vpop.xlane.xlu0 %1638
        %v1640 = vsel %vm1411, %v1631, 0.0
        %1641 = vadd.xlane.f32.xlu0 %v1640
        %v1642 = vpop.xlane.xlu0 %1641
        %v1643 = vsel %vm1411, %v1633, 0.0
        %1644 = vadd.xlane.f32.xlu0 %v1643
        %v1645 = vpop.xlane.xlu0 %1644
        %v1646 = vrcp.pop %v1636
        %v1647 = vrcp.pop %v1639
        %v1648 = vrcp.pop %v1642
        %v1649 = vrcp.pop %v1645
        %v1650 = vmul.f32 %v1627, %v1646
        %v1651 = vmul.f32 %v1629, %v1647
        %v1652 = vmul.f32 %v1631, %v1648
        %v1653 = vmul.f32 %v1633, %v1649
        %v1654 = vpack.c.bf16 %v1650, %v1650
        %v1655 = vpack.c.bf16 %v1651, %v1651
        %v1656 = vpack.c.bf16 %v1652, %v1652
        %v1657 = vpack.c.bf16 %v1653, %v1653
        %v1658 = vpack.c.bf16 %v1242, %v1242
        %v1659 = vpack.c.bf16 %v1294, %v1294
        %v1660 = vpack.c.bf16 %v1346, %v1346
        %v1661 = vpack.c.bf16 %v1398, %v1398
        %v1663 = vsel %vm1411, %v1654, 0
        %vm1665 = vcmask 1043456
        %v1667 = vsel %vm1665, %v1658, 0
        %1669 = vmatprep.subr.bf16.mxu0 0
        %1670 = vmatpush1.bf16.msra.mxu0 %v1667
        %1671 = vmatprep.subr.bf16.mxu0 0
        %1672 = vmatpush1.bf16.msra.mxu0 0
        %1673 = vmatprep.subr.bf16.mxu0 0
        %1674 = vmatpush1.bf16.msra.mxu0 0
        %1675 = vmatprep.subr.bf16.mxu0 0
        %1676 = vmatpush1.bf16.msra.mxu0 0
        %1677 = vmatprep.subr.bf16.mxu0 0
        %1678 = vmatpush1.bf16.msra.mxu0 0
        %1679 = vmatprep.subr.bf16.mxu0 0
        %1680 = vmatpush1.bf16.msra.mxu0 0
        %1681 = vmatprep.subr.bf16.mxu0 0
        %1682 = vmatpush1.bf16.msra.mxu0 0
        %1683 = vmatprep.subr.bf16.mxu0 0
        %1684 = vmatpush1.bf16.msra.mxu0 0
        %1685 = vmatprep.subr.bf16.mxu0 0
        %1686 = vmatpush1.bf16.msra.mxu0 0
        %1687 = vmatprep.subr.bf16.mxu0 0
        %1688 = vmatpush1.bf16.msra.mxu0 0
        %1689 = vmatprep.subr.bf16.mxu0 0
        %1690 = vmatpush1.bf16.msra.mxu0 0
        %1691 = vmatprep.subr.bf16.mxu0 0
        %1692 = vmatpush1.bf16.msra.mxu0 0
        %1693 = vmatprep.subr.bf16.mxu0 0
        %1694 = vmatpush1.bf16.msra.mxu0 0
        %1695 = vmatprep.subr.bf16.mxu0 0
        %1696 = vmatpush1.bf16.msra.mxu0 0
        %1697 = vmatprep.subr.bf16.mxu0 0
        %1698 = vmatpush1.bf16.msra.mxu0 0
        %1699 = vmatprep.subr.bf16.mxu0 0
        %1700 = vmatpush1.bf16.msra.mxu0 0
        %1701 = vmatprep.mubr.bf16.mxu0 0
        %1702 = vmatmul.mubr.bf16.gmra.mrb[0].mxu0 %v1663
        %v1703 = vpop.f32.mrb[0].mxu0
        %v1704 = vadd.f32 0.0, %v1703
        %v1705 = vpop.f32.mrb[0].mxu0
        %v1706 = vpop.f32.mrb[0].mxu0
        %v1707 = vpop.f32.mrb[0].mxu0
        %1708 = vdwg.mxu0
        %v1710 = vsel %vm1411, %v1655, 0
        %v1713 = vsel %vm1665, %v1659, 0
        %1715 = vmatprep.subr.bf16.mxu0 0
        %1716 = vmatpush1.bf16.msra.mxu0 %v1713
        %1717 = vmatprep.subr.bf16.mxu0 0
        %1718 = vmatpush1.bf16.msra.mxu0 0
        %1719 = vmatprep.subr.bf16.mxu0 0
        %1720 = vmatpush1.bf16.msra.mxu0 0
        %1721 = vmatprep.subr.bf16.mxu0 0
        %1722 = vmatpush1.bf16.msra.mxu0 0
        %1723 = vmatprep.subr.bf16.mxu0 0
        %1724 = vmatpush1.bf16.msra.mxu0 0
        %1725 = vmatprep.subr.bf16.mxu0 0
        %1726 = vmatpush1.bf16.msra.mxu0 0
        %1727 = vmatprep.subr.bf16.mxu0 0
        %1728 = vmatpush1.bf16.msra.mxu0 0
        %1729 = vmatprep.subr.bf16.mxu0 0
        %1730 = vmatpush1.bf16.msra.mxu0 0
        %1731 = vmatprep.subr.bf16.mxu0 0
        %1732 = vmatpush1.bf16.msra.mxu0 0
        %1733 = vmatprep.subr.bf16.mxu0 0
        %1734 = vmatpush1.bf16.msra.mxu0 0
        %1735 = vmatprep.subr.bf16.mxu0 0
        %1736 = vmatpush1.bf16.msra.mxu0 0
        %1737 = vmatprep.subr.bf16.mxu0 0
        %1738 = vmatpush1.bf16.msra.mxu0 0
        %1739 = vmatprep.subr.bf16.mxu0 0
        %1740 = vmatpush1.bf16.msra.mxu0 0
        %1741 = vmatprep.subr.bf16.mxu0 0
        %1742 = vmatpush1.bf16.msra.mxu0 0
        %1743 = vmatprep.subr.bf16.mxu0 0
        %1744 = vmatpush1.bf16.msra.mxu0 0
        %1745 = vmatprep.subr.bf16.mxu0 0
        %1746 = vmatpush1.bf16.msra.mxu0 0
        %1747 = vmatprep.mubr.bf16.mxu0 0
        %1748 = vmatmul.mubr.bf16.gmra.mrb[0].mxu0 %v1710
        %v1749 = vpop.f32.mrb[0].mxu0
        %v1750 = vadd.f32 0.0, %v1749
        %v1751 = vpop.f32.mrb[0].mxu0
        %v1752 = vpop.f32.mrb[0].mxu0
        %v1753 = vpop.f32.mrb[0].mxu0
        %1754 = vdwg.mxu0
        %v1756 = vsel %vm1411, %v1656, 0
        %v1759 = vsel %vm1665, %v1660, 0
        %1761 = vmatprep.subr.bf16.mxu0 0
        %1762 = vmatpush1.bf16.msra.mxu0 %v1759
        %1763 = vmatprep.subr.bf16.mxu0 0
        %1764 = vmatpush1.bf16.msra.mxu0 0
        %1765 = vmatprep.subr.bf16.mxu0 0
        %1766 = vmatpush1.bf16.msra.mxu0 0
        %1767 = vmatprep.subr.bf16.mxu0 0
        %1768 = vmatpush1.bf16.msra.mxu0 0
        %1769 = vmatprep.subr.bf16.mxu0 0
        %1770 = vmatpush1.bf16.msra.mxu0 0
        %1771 = vmatprep.subr.bf16.mxu0 0
        %1772 = vmatpush1.bf16.msra.mxu0 0
        %1773 = vmatprep.subr.bf16.mxu0 0
        %1774 = vmatpush1.bf16.msra.mxu0 0
        %1775 = vmatprep.subr.bf16.mxu0 0
        %1776 = vmatpush1.bf16.msra.mxu0 0
        %1777 = vmatprep.subr.bf16.mxu0 0
        %1778 = vmatpush1.bf16.msra.mxu0 0
        %1779 = vmatprep.subr.bf16.mxu0 0
        %1780 = vmatpush1.bf16.msra.mxu0 0
        %1781 = vmatprep.subr.bf16.mxu0 0
        %1782 = vmatpush1.bf16.msra.mxu0 0
        %1783 = vmatprep.subr.bf16.mxu0 0
        %1784 = vmatpush1.bf16.msra.mxu0 0
        %1785 = vmatprep.subr.bf16.mxu0 0
        %1786 = vmatpush1.bf16.msra.mxu0 0
        %1787 = vmatprep.subr.bf16.mxu0 0
        %1788 = vmatpush1.bf16.msra.mxu0 0
        %1789 = vmatprep.subr.bf16.mxu0 0
        %1790 = vmatpush1.bf16.msra.mxu0 0
        %1791 = vmatprep.subr.bf16.mxu0 0
        %1792 = vmatpush1.bf16.msra.mxu0 0
        %1793 = vmatprep.mubr.bf16.mxu0 0
        %1794 = vmatmul.mubr.bf16.gmra.mrb[0].mxu0 %v1756
        %v1795 = vpop.f32.mrb[0].mxu0
        %v1796 = vadd.f32 0.0, %v1795
        %v1797 = vpop.f32.mrb[0].mxu0
        %v1798 = vpop.f32.mrb[0].mxu0
        %v1799 = vpop.f32.mrb[0].mxu0
        %1800 = vdwg.mxu0
        %v1802 = vsel %vm1411, %v1657, 0
        %v1805 = vsel %vm1665, %v1661, 0
        %1807 = vmatprep.subr.bf16.mxu0 0
        %1808 = vmatpush1.bf16.msra.mxu0 %v1805
        %1809 = vmatprep.subr.bf16.mxu0 0
        %1810 = vmatpush1.bf16.msra.mxu0 0
        %1811 = vmatprep.subr.bf16.mxu0 0
        %1812 = vmatpush1.bf16.msra.mxu0 0
        %1813 = vmatprep.subr.bf16.mxu0 0
        %1814 = vmatpush1.bf16.msra.mxu0 0
        %1815 = vmatprep.subr.bf16.mxu0 0
        %1816 = vmatpush1.bf16.msra.mxu0 0
        %1817 = vmatprep.subr.bf16.mxu0 0
        %1818 = vmatpush1.bf16.msra.mxu0 0
        %1819 = vmatprep.subr.bf16.mxu0 0
        %1820 = vmatpush1.bf16.msra.mxu0 0
        %1821 = vmatprep.subr.bf16.mxu0 0
        %1822 = vmatpush1.bf16.msra.mxu0 0
        %1823 = vmatprep.subr.bf16.mxu0 0
        %1824 = vmatpush1.bf16.msra.mxu0 0
        %1825 = vmatprep.subr.bf16.mxu0 0
        %1826 = vmatpush1.bf16.msra.mxu0 0
        %1827 = vmatprep.subr.bf16.mxu0 0
        %1828 = vmatpush1.bf16.msra.mxu0 0
        %1829 = vmatprep.subr.bf16.mxu0 0
        %1830 = vmatpush1.bf16.msra.mxu0 0
        %1831 = vmatprep.subr.bf16.mxu0 0
        %1832 = vmatpush1.bf16.msra.mxu0 0
        %1833 = vmatprep.subr.bf16.mxu0 0
        %1834 = vmatpush1.bf16.msra.mxu0 0
        %1835 = vmatprep.subr.bf16.mxu0 0
        %1836 = vmatpush1.bf16.msra.mxu0 0
        %1837 = vmatprep.subr.bf16.mxu0 0
        %1838 = vmatpush1.bf16.msra.mxu0 0
        %1839 = vmatprep.mubr.bf16.mxu0 0
        %1840 = vmatmul.mubr.bf16.gmra.mrb[0].mxu0 %v1802
        %v1841 = vpop.f32.mrb[0].mxu0
        %v1842 = vadd.f32 0.0, %v1841
        %v1843 = vpop.f32.mrb[0].mxu0
        %v1844 = vpop.f32.mrb[0].mxu0
        %v1845 = vpop.f32.mrb[0].mxu0
        %1846 = vdwg.mxu0
        %v1847 = vpack.c.bf16 %v1704, %v1704
        %v1848 = vpack.c.bf16 %v1750, %v1750
        %v1849 = vpack.c.bf16 %v1796, %v1796
        %v1850 = vpack.c.bf16 %v1842, %v1842
        %v1851 = vld [vmem:[%s8] sm:$0xf]
        %v1852 = vld [vmem:[%s8 + $0x4] sm:$0xf]
        %v1853 = vld [vmem:[%s8 + $0x8] sm:$0xf]
        %v1854 = vld [vmem:[%s8 + $0xc] sm:$0xf]
        %v1856 = vsel %vm1411, %v1847, 0
        %v1859 = vsel %vm1665, %v1851, 0
        %1861 = vmatprep.subr.bf16.mxu0 0
        %1862 = vmatpush1.bf16.msra.mxu0 %v1859
        %1863 = vmatprep.subr.bf16.mxu0 0
        %1864 = vmatpush1.bf16.msra.mxu0 0
        %1865 = vmatprep.subr.bf16.mxu0 0
        %1866 = vmatpush1.bf16.msra.mxu0 0
        %1867 = vmatprep.subr.bf16.mxu0 0
        %1868 = vmatpush1.bf16.msra.mxu0 0
        %1869 = vmatprep.subr.bf16.mxu0 0
        %1870 = vmatpush1.bf16.msra.mxu0 0
        %1871 = vmatprep.subr.bf16.mxu0 0
        %1872 = vmatpush1.bf16.msra.mxu0 0
        %1873 = vmatprep.subr.bf16.mxu0 0
        %1874 = vmatpush1.bf16.msra.mxu0 0
        %1875 = vmatprep.subr.bf16.mxu0 0
        %1876 = vmatpush1.bf16.msra.mxu0 0
        %1877 = vmatprep.subr.bf16.mxu0 0
        %1878 = vmatpush1.bf16.msra.mxu0 0
        %1879 = vmatprep.subr.bf16.mxu0 0
        %1880 = vmatpush1.bf16.msra.mxu0 0
        %1881 = vmatprep.subr.bf16.mxu0 0
        %1882 = vmatpush1.bf16.msra.mxu0 0
        %1883 = vmatprep.subr.bf16.mxu0 0
        %1884 = vmatpush1.bf16.msra.mxu0 0
        %1885 = vmatprep.subr.bf16.mxu0 0
        %1886 = vmatpush1.bf16.msra.mxu0 0
        %1887 = vmatprep.subr.bf16.mxu0 0
        %1888 = vmatpush1.bf16.msra.mxu0 0
        %1889 = vmatprep.subr.bf16.mxu0 0
        %1890 = vmatpush1.bf16.msra.mxu0 0
        %1891 = vmatprep.subr.bf16.mxu0 0
        %1892 = vmatpush1.bf16.msra.mxu0 0
        %1893 = vmatprep.mubr.bf16.mxu0 0
        %1894 = vmatmul.mubr.bf16.gmra.mrb[0].mxu0 %v1856
        %v1895 = vpop.f32.mrb[0].mxu0
        %v1896 = vadd.f32 0.0, %v1895
        %v1897 = vpop.f32.mrb[0].mxu0
        %v1898 = vpop.f32.mrb[0].mxu0
        %v1899 = vpop.f32.mrb[0].mxu0
        %1900 = vdwg.mxu0
        %v1902 = vsel %vm1411, %v1848, 0
        %v1905 = vsel %vm1665, %v1852, 0
        %1907 = vmatprep.subr.bf16.mxu0 0
        %1908 = vmatpush1.bf16.msra.mxu0 %v1905
        %1909 = vmatprep.subr.bf16.mxu0 0
        %1910 = vmatpush1.bf16.msra.mxu0 0
        %1911 = vmatprep.subr.bf16.mxu0 0
        %1912 = vmatpush1.bf16.msra.mxu0 0
        %1913 = vmatprep.subr.bf16.mxu0 0
        %1914 = vmatpush1.bf16.msra.mxu0 0
        %1915 = vmatprep.subr.bf16.mxu0 0
        %1916 = vmatpush1.bf16.msra.mxu0 0
        %1917 = vmatprep.subr.bf16.mxu0 0
        %1918 = vmatpush1.bf16.msra.mxu0 0
        %1919 = vmatprep.subr.bf16.mxu0 0
        %1920 = vmatpush1.bf16.msra.mxu0 0
        %1921 = vmatprep.subr.bf16.mxu0 0
        %1922 = vmatpush1.bf16.msra.mxu0 0
        %1923 = vmatprep.subr.bf16.mxu0 0
        %1924 = vmatpush1.bf16.msra.mxu0 0
        %1925 = vmatprep.subr.bf16.mxu0 0
        %1926 = vmatpush1.bf16.msra.mxu0 0
        %1927 = vmatprep.subr.bf16.mxu0 0
        %1928 = vmatpush1.bf16.msra.mxu0 0
        %1929 = vmatprep.subr.bf16.mxu0 0
        %1930 = vmatpush1.bf16.msra.mxu0 0
        %1931 = vmatprep.subr.bf16.mxu0 0
        %1932 = vmatpush1.bf16.msra.mxu0 0
        %1933 = vmatprep.subr.bf16.mxu0 0
        %1934 = vmatpush1.bf16.msra.mxu0 0
        %1935 = vmatprep.subr.bf16.mxu0 0
        %1936 = vmatpush1.bf16.msra.mxu0 0
        %1937 = vmatprep.subr.bf16.mxu0 0
        %1938 = vmatpush1.bf16.msra.mxu0 0
        %1939 = vmatprep.mubr.bf16.mxu0 0
        %1940 = vmatmul.mubr.bf16.gmra.mrb[0].mxu0 %v1902
        %v1941 = vpop.f32.mrb[0].mxu0
        %v1942 = vadd.f32 0.0, %v1941
        %v1943 = vpop.f32.mrb[0].mxu0
        %v1944 = vpop.f32.mrb[0].mxu0
        %v1945 = vpop.f32.mrb[0].mxu0
        %1946 = vdwg.mxu0
        %v1948 = vsel %vm1411, %v1849, 0
        %v1951 = vsel %vm1665, %v1853, 0
        %1953 = vmatprep.subr.bf16.mxu0 0
        %1954 = vmatpush1.bf16.msra.mxu0 %v1951
        %1955 = vmatprep.subr.bf16.mxu0 0
        %1956 = vmatpush1.bf16.msra.mxu0 0
        %1957 = vmatprep.subr.bf16.mxu0 0
        %1958 = vmatpush1.bf16.msra.mxu0 0
        %1959 = vmatprep.subr.bf16.mxu0 0
        %1960 = vmatpush1.bf16.msra.mxu0 0
        %1961 = vmatprep.subr.bf16.mxu0 0
        %1962 = vmatpush1.bf16.msra.mxu0 0
        %1963 = vmatprep.subr.bf16.mxu0 0
        %1964 = vmatpush1.bf16.msra.mxu0 0
        %1965 = vmatprep.subr.bf16.mxu0 0
        %1966 = vmatpush1.bf16.msra.mxu0 0
        %1967 = vmatprep.subr.bf16.mxu0 0
        %1968 = vmatpush1.bf16.msra.mxu0 0
        %1969 = vmatprep.subr.bf16.mxu0 0
        %1970 = vmatpush1.bf16.msra.mxu0 0
        %1971 = vmatprep.subr.bf16.mxu0 0
        %1972 = vmatpush1.bf16.msra.mxu0 0
        %1973 = vmatprep.subr.bf16.mxu0 0
        %1974 = vmatpush1.bf16.msra.mxu0 0
        %1975 = vmatprep.subr.bf16.mxu0 0
        %1976 = vmatpush1.bf16.msra.mxu0 0
        %1977 = vmatprep.subr.bf16.mxu0 0
        %1978 = vmatpush1.bf16.msra.mxu0 0
        %1979 = vmatprep.subr.bf16.mxu0 0
        %1980 = vmatpush1.bf16.msra.mxu0 0
        %1981 = vmatprep.subr.bf16.mxu0 0
        %1982 = vmatpush1.bf16.msra.mxu0 0
        %1983 = vmatprep.subr.bf16.mxu0 0
        %1984 = vmatpush1.bf16.msra.mxu0 0
        %1985 = vmatprep.mubr.bf16.mxu0 0
        %1986 = vmatmul.mubr.bf16.gmra.mrb[0].mxu0 %v1948
        %v1987 = vpop.f32.mrb[0].mxu0
        %v1988 = vadd.f32 0.0, %v1987
        %v1989 = vpop.f32.mrb[0].mxu0
        %v1990 = vpop.f32.mrb[0].mxu0
        %v1991 = vpop.f32.mrb[0].mxu0
        %1992 = vdwg.mxu0
        %v1994 = vsel %vm1411, %v1850, 0
        %v1997 = vsel %vm1665, %v1854, 0
        %1999 = vmatprep.subr.bf16.mxu0 0
        %2000 = vmatpush1.bf16.msra.mxu0 %v1997
        %2001 = vmatprep.subr.bf16.mxu0 0
        %2002 = vmatpush1.bf16.msra.mxu0 0
        %2003 = vmatprep.subr.bf16.mxu0 0
        %2004 = vmatpush1.bf16.msra.mxu0 0
        %2005 = vmatprep.subr.bf16.mxu0 0
        %2006 = vmatpush1.bf16.msra.mxu0 0
        %2007 = vmatprep.subr.bf16.mxu0 0
        %2008 = vmatpush1.bf16.msra.mxu0 0
        %2009 = vmatprep.subr.bf16.mxu0 0
        %2010 = vmatpush1.bf16.msra.mxu0 0
        %2011 = vmatprep.subr.bf16.mxu0 0
        %2012 = vmatpush1.bf16.msra.mxu0 0
        %2013 = vmatprep.subr.bf16.mxu0 0
        %2014 = vmatpush1.bf16.msra.mxu0 0
        %2015 = vmatprep.subr.bf16.mxu0 0
        %2016 = vmatpush1.bf16.msra.mxu0 0
        %2017 = vmatprep.subr.bf16.mxu0 0
        %2018 = vmatpush1.bf16.msra.mxu0 0
        %2019 = vmatprep.subr.bf16.mxu0 0
        %2020 = vmatpush1.bf16.msra.mxu0 0
        %2021 = vmatprep.subr.bf16.mxu0 0
        %2022 = vmatpush1.bf16.msra.mxu0 0
        %2023 = vmatprep.subr.bf16.mxu0 0
        %2024 = vmatpush1.bf16.msra.mxu0 0
        %2025 = vmatprep.subr.bf16.mxu0 0
        %2026 = vmatpush1.bf16.msra.mxu0 0
        %2027 = vmatprep.subr.bf16.mxu0 0
        %2028 = vmatpush1.bf16.msra.mxu0 0
        %2029 = vmatprep.subr.bf16.mxu0 0
        %2030 = vmatpush1.bf16.msra.mxu0 0
        %2031 = vmatprep.mubr.bf16.mxu0 0
        %2032 = vmatmul.mubr.bf16.gmra.mrb[0].mxu0 %v1994
        %v2033 = vpop.f32.mrb[0].mxu0
        %v2034 = vadd.f32 0.0, %v2033
        %v2035 = vpop.f32.mrb[0].mxu0
        %v2036 = vpop.f32.mrb[0].mxu0
        %v2037 = vpop.f32.mrb[0].mxu0
        %2038 = vdwg.mxu0
        %v2039 = vsel %vm699, %v1896, 0.0
        %v2040 = vsel %vm699, %v1942, 0.0
        %v2041 = vadd.f32 %v2039, %v2040
        %v2042 = vsel %vm699, %v1988, 0.0
        %v2043 = vadd.f32 %v2041, %v2042
        %v2044 = vsel %vm699, %v2034, 0.0
        %v2045 = vadd.f32 %v2043, %v2044
        %v2046 = vld [vmem:[%s9] sm:$0x1]
        %v2048 = vlaneseq
        %v2049 = vshrl.u32 %v2048, 7
        %v2050 = vsub.s32 0, %v2049
        %v2051 = vrot.slane %v2046, %v2050
        %v2053 = vadd.f32 %v2045, %v2051
        %v2054 = vadd.f32 %v640, %v2053
        %v2055 = vld [vmem:[%s10] sm:$0x1]
        %v2056 = vld [vmem:[%s11] sm:$0x1]
        %v2057 = vsel %vm699, %v2054, 0.0
        %2058 = vadd.xlane.f32.xlu0 %v2057
        %v2059 = vpop.xlane.xlu0 %2058
        %v2060 = vrcp.pop 32.0
        %v2061 = vmul.f32 %v2059, %v2060
        %v2062 = vsub.f32 %v2054, %v2061
        %v2063 = vmul.f32 %v2062, %v2062
        %v2064 = vsel %vm699, %v2063, 0.0
        %2065 = vadd.xlane.f32.xlu0 %v2064
        %v2066 = vpop.xlane.xlu0 %2065
        %v2067 = vmul.f32 %v2066, %v2060
        %v2068 = vadd.f32 %v2067, 1e-05
        %v2069 = vrsqrt.pop %v2068
        %v2070 = vmul.f32 %v2062, %v2069
        %v2072 = vlaneseq
        %v2073 = vshrl.u32 %v2072, 7
        %v2074 = vsub.s32 0, %v2073
        %v2075 = vrot.slane %v2055, %v2074
        %v2077 = vmul.f32 %v2070, %v2075
        %v2079 = vlaneseq
        %v2080 = vshrl.u32 %v2079, 7
        %v2081 = vsub.s32 0, %v2080
        %v2082 = vrot.slane %v2056, %v2081
        %v2084 = vadd.f32 %v2077, %v2082
        %v2085 = vpack.c.bf16 %v2084, %v2084
        %v2086 = vld [vmem:[%s12] sm:$0xf]
        %v2087 = vld [vmem:[%s12 + $0x4] sm:$0xf]
        %v2088 = vld [vmem:[%s12 + $0x8] sm:$0xf]
        %v2089 = vld [vmem:[%s12 + $0xc] sm:$0xf]
        %v2090 = vld [vmem:[%s13] sm:$0x1]
        %v2092 = vlaneseq
        %v2093 = vshrl.u32 %v2092, 7
        %v2094 = vsub.s32 0, %v2093
        %v2095 = vrot.slane %v2090, %v2094
        %v2101 = vunpack.c.l.b16 %v2086
        %v2102 = vunpack.c.l.b16 %v2087
        %v2103 = vunpack.c.l.b16 %v2088
        %v2104 = vunpack.c.l.b16 %v2089
        %v2105 = vpack.c.b16 %v2102, %v2101
        %v2106 = vpack.c.b16 %v2104, %v2103
        %v2110 = vsel %vm699, %v2085, 0
        %2112 = vmatprep.subr.bf16.mxu0 0
        %2113 = vmatpush1.bf16.msra.mxu0 %v2105
        %2114 = vmatprep.subr.bf16.mxu0 0
        %2115 = vmatpush1.bf16.msra.mxu0 %v2106
        %2116 = vmatprep.subr.bf16.mxu0 0
        %2117 = vmatpush1.bf16.msra.mxu0 0
        %2118 = vmatprep.subr.bf16.mxu0 0
        %2119 = vmatpush1.bf16.msra.mxu0 0
        %2120 = vmatprep.subr.bf16.mxu0 0
        %2121 = vmatpush1.bf16.msra.mxu0 0
        %2122 = vmatprep.subr.bf16.mxu0 0
        %2123 = vmatpush1.bf16.msra.mxu0 0
        %2124 = vmatprep.subr.bf16.mxu0 0
        %2125 = vmatpush1.bf16.msra.mxu0 0
        %2126 = vmatprep.subr.bf16.mxu0 0
        %2127 = vmatpush1.bf16.msra.mxu0 0
        %2128 = vmatprep.subr.bf16.mxu0 0
        %2129 = vmatpush1.bf16.msra.mxu0 0
        %2130 = vmatprep.subr.bf16.mxu0 0
        %2131 = vmatpush1.bf16.msra.mxu0 0
        %2132 = vmatprep.subr.bf16.mxu0 0
        %2133 = vmatpush1.bf16.msra.mxu0 0
        %2134 = vmatprep.subr.bf16.mxu0 0
        %2135 = vmatpush1.bf16.msra.mxu0 0
        %2136 = vmatprep.subr.bf16.mxu0 0
        %2137 = vmatpush1.bf16.msra.mxu0 0
        %2138 = vmatprep.subr.bf16.mxu0 0
        %2139 = vmatpush1.bf16.msra.mxu0 0
        %2140 = vmatprep.subr.bf16.mxu0 0
        %2141 = vmatpush1.bf16.msra.mxu0 0
        %2142 = vmatprep.subr.bf16.mxu0 0
        %2143 = vmatpush1.bf16.msra.mxu0 0
        %2144 = vmatprep.mubr.bf16.mxu0 0
        %2145 = vmatmul.mubr.bf16.gmra.mrb[0].mxu0 %v2110
        %v2146 = vpop.f32.mrb[0].mxu0
        %v2147 = vadd.f32 %v2095, %v2146
        %v2148 = vpop.f32.mrb[0].mxu0
        %v2149 = vpop.f32.mrb[0].mxu0
        %v2150 = vpop.f32.mrb[0].mxu0
        %2151 = vdwg.mxu0
        %v2152 = vmax.f32 %v2147, 0.0
        %v2153 = vpack.c.bf16 %v2152, %v2152
        %v2154 = vld [vmem:[%s14] sm:$0xf]
        %v2155 = vld [vmem:[%s14 + $0x4] sm:$0xf]
        %v2156 = vld [vmem:[%s14 + $0x8] sm:$0xf]
        %v2157 = vld [vmem:[%s14 + $0xc] sm:$0xf]
        %v2158 = vld [vmem:[%s14 + $0x10] sm:$0xf]
        %v2159 = vld [vmem:[%s14 + $0x14] sm:$0xf]
        %v2160 = vld [vmem:[%s14 + $0x18] sm:$0xf]
        %v2161 = vld [vmem:[%s14 + $0x1c] sm:$0xf]
        %v2162 = vld [vmem:[%s14 + $0x20] sm:$0xf]
        %v2163 = vld [vmem:[%s14 + $0x24] sm:$0xf]
        %v2164 = vld [vmem:[%s14 + $0x28] sm:$0xf]
        %v2165 = vld [vmem:[%s14 + $0x2c] sm:$0xf]
        %v2166 = vld [vmem:[%s14 + $0x30] sm:$0xf]
        %v2167 = vld [vmem:[%s14 + $0x34] sm:$0xf]
        %v2168 = vld [vmem:[%s14 + $0x38] sm:$0xf]
        %v2169 = vld [vmem:[%s14 + $0x3c] sm:$0xf]
        %v2170 = vld [vmem:[%s15] sm:$0x1]
        %v2172 = vlaneseq
        %v2173 = vshrl.u32 %v2172, 7
        %v2174 = vsub.s32 0, %v2173
        %v2175 = vrot.slane %v2170, %v2174
        %v2193 = vunpack.c.l.b16 %v2154
        %v2194 = vunpack.c.l.b16 %v2155
        %v2195 = vunpack.c.l.b16 %v2156
        %v2196 = vunpack.c.l.b16 %v2157
        %v2197 = vunpack.c.l.b16 %v2158
        %v2198 = vunpack.c.l.b16 %v2159
        %v2199 = vunpack.c.l.b16 %v2160
        %v2200 = vunpack.c.l.b16 %v2161
        %v2201 = vunpack.c.l.b16 %v2162
        %v2202 = vunpack.c.l.b16 %v2163
        %v2203 = vunpack.c.l.b16 %v2164
        %v2204 = vunpack.c.l.b16 %v2165
        %v2205 = vunpack.c.l.b16 %v2166
        %v2206 = vunpack.c.l.b16 %v2167
        %v2207 = vunpack.c.l.b16 %v2168
        %v2208 = vunpack.c.l.b16 %v2169
        %v2209 = vpack.c.b16 %v2194, %v2193
        %v2210 = vpack.c.b16 %v2196, %v2195
        %v2211 = vpack.c.b16 %v2198, %v2197
        %v2212 = vpack.c.b16 %v2200, %v2199
        %v2213 = vpack.c.b16 %v2202, %v2201
        %v2214 = vpack.c.b16 %v2204, %v2203
        %v2215 = vpack.c.b16 %v2206, %v2205
        %v2216 = vpack.c.b16 %v2208, %v2207
        %2225 = vmatprep.subr.bf16.mxu0 0
        %2226 = vmatpush1.bf16.msra.mxu0 %v2209
        %2227 = vmatprep.subr.bf16.mxu0 0
        %2228 = vmatpush1.bf16.msra.mxu0 %v2210
        %2229 = vmatprep.subr.bf16.mxu0 0
        %2230 = vmatpush1.bf16.msra.mxu0 %v2211
        %2231 = vmatprep.subr.bf16.mxu0 0
        %2232 = vmatpush1.bf16.msra.mxu0 %v2212
        %2233 = vmatprep.subr.bf16.mxu0 0
        %2234 = vmatpush1.bf16.msra.mxu0 %v2213
        %2235 = vmatprep.subr.bf16.mxu0 0
        %2236 = vmatpush1.bf16.msra.mxu0 %v2214
        %2237 = vmatprep.subr.bf16.mxu0 0
        %2238 = vmatpush1.bf16.msra.mxu0 %v2215
        %2239 = vmatprep.subr.bf16.mxu0 0
        %2240 = vmatpush1.bf16.msra.mxu0 %v2216
        %2241 = vmatprep.subr.bf16.mxu0 0
        %2242 = vmatpush1.bf16.msra.mxu0 0
        %2243 = vmatprep.subr.bf16.mxu0 0
        %2244 = vmatpush1.bf16.msra.mxu0 0
        %2245 = vmatprep.subr.bf16.mxu0 0
        %2246 = vmatpush1.bf16.msra.mxu0 0
        %2247 = vmatprep.subr.bf16.mxu0 0
        %2248 = vmatpush1.bf16.msra.mxu0 0
        %2249 = vmatprep.subr.bf16.mxu0 0
        %2250 = vmatpush1.bf16.msra.mxu0 0
        %2251 = vmatprep.subr.bf16.mxu0 0
        %2252 = vmatpush1.bf16.msra.mxu0 0
        %2253 = vmatprep.subr.bf16.mxu0 0
        %2254 = vmatpush1.bf16.msra.mxu0 0
        %2255 = vmatprep.subr.bf16.mxu0 0
        %2256 = vmatpush1.bf16.msra.mxu0 0
        %2257 = vmatprep.mubr.bf16.mxu0 0
        %2258 = vmatmul.mubr.bf16.gmra.mrb[0].mxu0 %v2153
        %v2259 = vpop.f32.mrb[0].mxu0
        %v2260 = vadd.f32 %v2175, %v2259
        %v2261 = vpop.f32.mrb[0].mxu0
        %v2262 = vpop.f32.mrb[0].mxu0
        %v2263 = vpop.f32.mrb[0].mxu0
        %2264 = vdwg.mxu0
        %v2265 = vadd.f32 %v2084, %v2260
        %v2266 = vld [vmem:[%s16] sm:$0x1]
        %v2267 = vld [vmem:[%s17] sm:$0x1]
        %v2268 = vsel %vm699, %v2265, 0.0
        %2269 = vadd.xlane.f32.xlu0 %v2268
        %v2270 = vpop.xlane.xlu0 %2269
        %v2271 = vmul.f32 %v2270, %v2060
        %v2272 = vsub.f32 %v2265, %v2271
        %v2273 = vmul.f32 %v2272, %v2272
        %v2274 = vsel %vm699, %v2273, 0.0
        %2275 = vadd.xlane.f32.xlu0 %v2274
        %v2276 = vpop.xlane.xlu0 %2275
        %v2277 = vmul.f32 %v2276, %v2060
        %v2278 = vadd.f32 %v2277, 1e-05
        %v2279 = vrsqrt.pop %v2278
        %v2280 = vmul.f32 %v2272, %v2279
        %v2282 = vlaneseq
        %v2283 = vshrl.u32 %v2282, 7
        %v2284 = vsub.s32 0, %v2283
        %v2285 = vrot.slane %v2266, %v2284
        %v2287 = vmul.f32 %v2280, %v2285
        %v2289 = vlaneseq
        %v2290 = vshrl.u32 %v2289, 7
        %v2291 = vsub.s32 0, %v2290
        %v2292 = vrot.slane %v2267, %v2291
        %v2294 = vadd.f32 %v2287, %v2292
        %v2295 = vpack.c.bf16 %v2294, %v2294
        %s2296 = scalar_lea.vmem %s2, 64
        %v2297 = vld [vmem:[%s2296] sm:$0xf]
        %v2298 = vld [vmem:[%s2296 + $0x4] sm:$0xf]
        %v2299 = vld [vmem:[%s2296 + $0x8] sm:$0xf]
        %v2300 = vld [vmem:[%s2296 + $0xc] sm:$0xf]
        %v2301 = vld [vmem:[%s2296 + $0x10] sm:$0xf]
        %v2302 = vld [vmem:[%s2296 + $0x14] sm:$0xf]
        %v2303 = vld [vmem:[%s2296 + $0x18] sm:$0xf]
        %v2304 = vld [vmem:[%s2296 + $0x1c] sm:$0xf]
        %v2305 = vld [vmem:[%s2296 + $0x20] sm:$0xf]
        %v2306 = vld [vmem:[%s2296 + $0x24] sm:$0xf]
        %v2307 = vld [vmem:[%s2296 + $0x28] sm:$0xf]
        %v2308 = vld [vmem:[%s2296 + $0x2c] sm:$0xf]
        %v2309 = vld [vmem:[%s2296 + $0x30] sm:$0xf]
        %v2310 = vld [vmem:[%s2296 + $0x34] sm:$0xf]
        %v2311 = vld [vmem:[%s2296 + $0x38] sm:$0xf]
        %v2312 = vld [vmem:[%s2296 + $0x3c] sm:$0xf]
        %s2313 = scalar_lea.vmem %s5, 4
        %v2314 = vld [vmem:[%s2313] sm:$0x1]
        %v2315 = vld [vmem:[%s2313 + $0x1] sm:$0x1]
        %v2316 = vld [vmem:[%s2313 + $0x2] sm:$0x1]
        %v2317 = vld [vmem:[%s2313 + $0x3] sm:$0x1]
        %v2322 = vlaneseq
        %v2323 = vshrl.u32 %v2322, 7
        %v2324 = vsub.s32 0, %v2323
        %v2325 = vrot.slane %v2314, %v2324
        %v2326 = vlaneseq
        %v2327 = vshrl.u32 %v2326, 7
        %v2328 = vsub.s32 0, %v2327
        %v2329 = vrot.slane %v2315, %v2328
        %v2330 = vlaneseq
        %v2331 = vshrl.u32 %v2330, 7
        %v2332 = vsub.s32 0, %v2331
        %v2333 = vrot.slane %v2316, %v2332
        %v2334 = vlaneseq
        %v2335 = vshrl.u32 %v2334, 7
        %v2336 = vsub.s32 0, %v2335
        %v2337 = vrot.slane %v2317, %v2336
        %v2346 = vunpack.c.l.b16 %v2297
        %v2347 = vunpack.c.l.b16 %v2298
        %v2348 = vunpack.c.l.b16 %v2299
        %v2349 = vunpack.c.l.b16 %v2300
        %v2350 = vpack.c.b16 %v2347, %v2346
        %v2351 = vpack.c.b16 %v2349, %v2348
        %v2355 = vsel %vm699, %v2295, 0
        %2357 = vmatprep.subr.bf16.mxu0 0
        %2358 = vmatpush1.bf16.msra.mxu0 %v2350
        %2359 = vmatprep.subr.bf16.mxu0 0
        %2360 = vmatpush1.bf16.msra.mxu0 %v2351
        %2361 = vmatprep.subr.bf16.mxu0 0
        %2362 = vmatpush1.bf16.msra.mxu0 0
        %2363 = vmatprep.subr.bf16.mxu0 0
        %2364 = vmatpush1.bf16.msra.mxu0 0
        %2365 = vmatprep.subr.bf16.mxu0 0
        %2366 = vmatpush1.bf16.msra.mxu0 0
        %2367 = vmatprep.subr.bf16.mxu0 0
        %2368 = vmatpush1.bf16.msra.mxu0 0
        %2369 = vmatprep.subr.bf16.mxu0 0
        %2370 = vmatpush1.bf16.msra.mxu0 0
        %2371 = vmatprep.subr.bf16.mxu0 0
        %2372 = vmatpush1.bf16.msra.mxu0 0
        %2373 = vmatprep.subr.bf16.mxu0 0
        %2374 = vmatpush1.bf16.msra.mxu0 0
        %2375 = vmatprep.subr.bf16.mxu0 0
        %2376 = vmatpush1.bf16.msra.mxu0 0
        %2377 = vmatprep.subr.bf16.mxu0 0
        %2378 = vmatpush1.bf16.msra.mxu0 0
        %2379 = vmatprep.subr.bf16.mxu0 0
        %2380 = vmatpush1.bf16.msra.mxu0 0
        %2381 = vmatprep.subr.bf16.mxu0 0
        %2382 = vmatpush1.bf16.msra.mxu0 0
        %2383 = vmatprep.subr.bf16.mxu0 0
        %2384 = vmatpush1.bf16.msra.mxu0 0
        %2385 = vmatprep.subr.bf16.mxu0 0
        %2386 = vmatpush1.bf16.msra.mxu0 0
        %2387 = vmatprep.subr.bf16.mxu0 0
        %2388 = vmatpush1.bf16.msra.mxu0 0
        %2389 = vmatprep.mubr.bf16.mxu0 0
        %2390 = vmatmul.mubr.bf16.gmra.mrb[0].mxu0 %v2355
        %v2391 = vpop.f32.mrb[0].mxu0
        %v2392 = vadd.f32 %v2325, %v2391
        %v2393 = vpop.f32.mrb[0].mxu0
        %v2394 = vpop.f32.mrb[0].mxu0
        %v2395 = vpop.f32.mrb[0].mxu0
        %2396 = vdwg.mxu0
        %v2401 = vunpack.c.l.b16 %v2301
        %v2402 = vunpack.c.l.b16 %v2302
        %v2403 = vunpack.c.l.b16 %v2303
        %v2404 = vunpack.c.l.b16 %v2304
        %v2405 = vpack.c.b16 %v2402, %v2401
        %v2406 = vpack.c.b16 %v2404, %v2403
        %2409 = vmatprep.subr.bf16.mxu0 0
        %2410 = vmatpush1.bf16.msra.mxu0 %v2405
        %2411 = vmatprep.subr.bf16.mxu0 0
        %2412 = vmatpush1.bf16.msra.mxu0 %v2406
        %2413 = vmatprep.subr.bf16.mxu0 0
        %2414 = vmatpush1.bf16.msra.mxu0 0
        %2415 = vmatprep.subr.bf16.mxu0 0
        %2416 = vmatpush1.bf16.msra.mxu0 0
        %2417 = vmatprep.subr.bf16.mxu0 0
        %2418 = vmatpush1.bf16.msra.mxu0 0
        %2419 = vmatprep.subr.bf16.mxu0 0
        %2420 = vmatpush1.bf16.msra.mxu0 0
        %2421 = vmatprep.subr.bf16.mxu0 0
        %2422 = vmatpush1.bf16.msra.mxu0 0
        %2423 = vmatprep.subr.bf16.mxu0 0
        %2424 = vmatpush1.bf16.msra.mxu0 0
        %2425 = vmatprep.subr.bf16.mxu0 0
        %2426 = vmatpush1.bf16.msra.mxu0 0
        %2427 = vmatprep.subr.bf16.mxu0 0
        %2428 = vmatpush1.bf16.msra.mxu0 0
        %2429 = vmatprep.subr.bf16.mxu0 0
        %2430 = vmatpush1.bf16.msra.mxu0 0
        %2431 = vmatprep.subr.bf16.mxu0 0
        %2432 = vmatpush1.bf16.msra.mxu0 0
        %2433 = vmatprep.subr.bf16.mxu0 0
        %2434 = vmatpush1.bf16.msra.mxu0 0
        %2435 = vmatprep.subr.bf16.mxu0 0
        %2436 = vmatpush1.bf16.msra.mxu0 0
        %2437 = vmatprep.subr.bf16.mxu0 0
        %2438 = vmatpush1.bf16.msra.mxu0 0
        %2439 = vmatprep.subr.bf16.mxu0 0
        %2440 = vmatpush1.bf16.msra.mxu0 0
        %2441 = vmatprep.mubr.bf16.mxu0 0
        %2442 = vmatmul.mubr.bf16.gmra.mrb[0].mxu0 %v2355
        %v2443 = vpop.f32.mrb[0].mxu0
        %v2444 = vadd.f32 %v2329, %v2443
        %v2445 = vpop.f32.mrb[0].mxu0
        %v2446 = vpop.f32.mrb[0].mxu0
        %v2447 = vpop.f32.mrb[0].mxu0
        %2448 = vdwg.mxu0
        %v2453 = vunpack.c.l.b16 %v2305
        %v2454 = vunpack.c.l.b16 %v2306
        %v2455 = vunpack.c.l.b16 %v2307
        %v2456 = vunpack.c.l.b16 %v2308
        %v2457 = vpack.c.b16 %v2454, %v2453
        %v2458 = vpack.c.b16 %v2456, %v2455
        %2461 = vmatprep.subr.bf16.mxu0 0
        %2462 = vmatpush1.bf16.msra.mxu0 %v2457
        %2463 = vmatprep.subr.bf16.mxu0 0
        %2464 = vmatpush1.bf16.msra.mxu0 %v2458
        %2465 = vmatprep.subr.bf16.mxu0 0
        %2466 = vmatpush1.bf16.msra.mxu0 0
        %2467 = vmatprep.subr.bf16.mxu0 0
        %2468 = vmatpush1.bf16.msra.mxu0 0
        %2469 = vmatprep.subr.bf16.mxu0 0
        %2470 = vmatpush1.bf16.msra.mxu0 0
        %2471 = vmatprep.subr.bf16.mxu0 0
        %2472 = vmatpush1.bf16.msra.mxu0 0
        %2473 = vmatprep.subr.bf16.mxu0 0
        %2474 = vmatpush1.bf16.msra.mxu0 0
        %2475 = vmatprep.subr.bf16.mxu0 0
        %2476 = vmatpush1.bf16.msra.mxu0 0
        %2477 = vmatprep.subr.bf16.mxu0 0
        %2478 = vmatpush1.bf16.msra.mxu0 0
        %2479 = vmatprep.subr.bf16.mxu0 0
        %2480 = vmatpush1.bf16.msra.mxu0 0
        %2481 = vmatprep.subr.bf16.mxu0 0
        %2482 = vmatpush1.bf16.msra.mxu0 0
        %2483 = vmatprep.subr.bf16.mxu0 0
        %2484 = vmatpush1.bf16.msra.mxu0 0
        %2485 = vmatprep.subr.bf16.mxu0 0
        %2486 = vmatpush1.bf16.msra.mxu0 0
        %2487 = vmatprep.subr.bf16.mxu0 0
        %2488 = vmatpush1.bf16.msra.mxu0 0
        %2489 = vmatprep.subr.bf16.mxu0 0
        %2490 = vmatpush1.bf16.msra.mxu0 0
        %2491 = vmatprep.subr.bf16.mxu0 0
        %2492 = vmatpush1.bf16.msra.mxu0 0
        %2493 = vmatprep.mubr.bf16.mxu0 0
        %2494 = vmatmul.mubr.bf16.gmra.mrb[0].mxu0 %v2355
        %v2495 = vpop.f32.mrb[0].mxu0
        %v2496 = vadd.f32 %v2333, %v2495
        %v2497 = vpop.f32.mrb[0].mxu0
        %v2498 = vpop.f32.mrb[0].mxu0
        %v2499 = vpop.f32.mrb[0].mxu0
        %2500 = vdwg.mxu0
        %v2505 = vunpack.c.l.b16 %v2309
        %v2506 = vunpack.c.l.b16 %v2310
        %v2507 = vunpack.c.l.b16 %v2311
        %v2508 = vunpack.c.l.b16 %v2312
        %v2509 = vpack.c.b16 %v2506, %v2505
        %v2510 = vpack.c.b16 %v2508, %v2507
        %2513 = vmatprep.subr.bf16.mxu0 0
        %2514 = vmatpush1.bf16.msra.mxu0 %v2509
        %2515 = vmatprep.subr.bf16.mxu0 0
        %2516 = vmatpush1.bf16.msra.mxu0 %v2510
        %2517 = vmatprep.subr.bf16.mxu0 0
        %2518 = vmatpush1.bf16.msra.mxu0 0
        %2519 = vmatprep.subr.bf16.mxu0 0
        %2520 = vmatpush1.bf16.msra.mxu0 0
        %2521 = vmatprep.subr.bf16.mxu0 0
        %2522 = vmatpush1.bf16.msra.mxu0 0
        %2523 = vmatprep.subr.bf16.mxu0 0
        %2524 = vmatpush1.bf16.msra.mxu0 0
        %2525 = vmatprep.subr.bf16.mxu0 0
        %2526 = vmatpush1.bf16.msra.mxu0 0
        %2527 = vmatprep.subr.bf16.mxu0 0
        %2528 = vmatpush1.bf16.msra.mxu0 0
        %2529 = vmatprep.subr.bf16.mxu0 0
        %2530 = vmatpush1.bf16.msra.mxu0 0
        %2531 = vmatprep.subr.bf16.mxu0 0
        %2532 = vmatpush1.bf16.msra.mxu0 0
        %2533 = vmatprep.subr.bf16.mxu0 0
        %2534 = vmatpush1.bf16.msra.mxu0 0
        %2535 = vmatprep.subr.bf16.mxu0 0
        %2536 = vmatpush1.bf16.msra.mxu0 0
        %2537 = vmatprep.subr.bf16.mxu0 0
        %2538 = vmatpush1.bf16.msra.mxu0 0
        %2539 = vmatprep.subr.bf16.mxu0 0
        %2540 = vmatpush1.bf16.msra.mxu0 0
        %2541 = vmatprep.subr.bf16.mxu0 0
        %2542 = vmatpush1.bf16.msra.mxu0 0
        %2543 = vmatprep.subr.bf16.mxu0 0
        %2544 = vmatpush1.bf16.msra.mxu0 0
        %2545 = vmatprep.mubr.bf16.mxu0 0
        %2546 = vmatmul.mubr.bf16.gmra.mrb[0].mxu0 %v2355
        %v2547 = vpop.f32.mrb[0].mxu0
        %v2548 = vadd.f32 %v2337, %v2547
        %v2549 = vpop.f32.mrb[0].mxu0
        %v2550 = vpop.f32.mrb[0].mxu0
        %v2551 = vpop.f32.mrb[0].mxu0
        %2552 = vdwg.mxu0
        %s2553 = scalar_lea.vmem %s3, 64
        %v2554 = vld [vmem:[%s2553] sm:$0xf]
        %v2555 = vld [vmem:[%s2553 + $0x4] sm:$0xf]
        %v2556 = vld [vmem:[%s2553 + $0x8] sm:$0xf]
        %v2557 = vld [vmem:[%s2553 + $0xc] sm:$0xf]
        %v2558 = vld [vmem:[%s2553 + $0x10] sm:$0xf]
        %v2559 = vld [vmem:[%s2553 + $0x14] sm:$0xf]
        %v2560 = vld [vmem:[%s2553 + $0x18] sm:$0xf]
        %v2561 = vld [vmem:[%s2553 + $0x1c] sm:$0xf]
        %v2562 = vld [vmem:[%s2553 + $0x20] sm:$0xf]
        %v2563 = vld [vmem:[%s2553 + $0x24] sm:$0xf]
        %v2564 = vld [vmem:[%s2553 + $0x28] sm:$0xf]
        %v2565 = vld [vmem:[%s2553 + $0x2c] sm:$0xf]
        %v2566 = vld [vmem:[%s2553 + $0x30] sm:$0xf]
        %v2567 = vld [vmem:[%s2553 + $0x34] sm:$0xf]
        %v2568 = vld [vmem:[%s2553 + $0x38] sm:$0xf]
        %v2569 = vld [vmem:[%s2553 + $0x3c] sm:$0xf]
        %s2570 = scalar_lea.vmem %s6, 4
        %v2571 = vld [vmem:[%s2570] sm:$0x1]
        %v2572 = vld [vmem:[%s2570 + $0x1] sm:$0x1]
        %v2573 = vld [vmem:[%s2570 + $0x2] sm:$0x1]
        %v2574 = vld [vmem:[%s2570 + $0x3] sm:$0x1]
        %v2579 = vlaneseq
        %v2580 = vshrl.u32 %v2579, 7
        %v2581 = vsub.s32 0, %v2580
        %v2582 = vrot.slane %v2571, %v2581
        %v2583 = vlaneseq
        %v2584 = vshrl.u32 %v2583, 7
        %v2585 = vsub.s32 0, %v2584
        %v2586 = vrot.slane %v2572, %v2585
        %v2587 = vlaneseq
        %v2588 = vshrl.u32 %v2587, 7
        %v2589 = vsub.s32 0, %v2588
        %v2590 = vrot.slane %v2573, %v2589
        %v2591 = vlaneseq
        %v2592 = vshrl.u32 %v2591, 7
        %v2593 = vsub.s32 0, %v2592
        %v2594 = vrot.slane %v2574, %v2593
        %v2603 = vunpack.c.l.b16 %v2554
        %v2604 = vunpack.c.l.b16 %v2555
        %v2605 = vunpack.c.l.b16 %v2556
        %v2606 = vunpack.c.l.b16 %v2557
        %v2607 = vpack.c.b16 %v2604, %v2603
        %v2608 = vpack.c.b16 %v2606, %v2605
        %2611 = vmatprep.subr.bf16.mxu0 0
        %2612 = vmatpush1.bf16.msra.mxu0 %v2607
        %2613 = vmatprep.subr.bf16.mxu0 0
        %2614 = vmatpush1.bf16.msra.mxu0 %v2608
        %2615 = vmatprep.subr.bf16.mxu0 0
        %2616 = vmatpush1.bf16.msra.mxu0 0
        %2617 = vmatprep.subr.bf16.mxu0 0
        %2618 = vmatpush1.bf16.msra.mxu0 0
        %2619 = vmatprep.subr.bf16.mxu0 0
        %2620 = vmatpush1.bf16.msra.mxu0 0
        %2621 = vmatprep.subr.bf16.mxu0 0
        %2622 = vmatpush1.bf16.msra.mxu0 0
        %2623 = vmatprep.subr.bf16.mxu0 0
        %2624 = vmatpush1.bf16.msra.mxu0 0
        %2625 = vmatprep.subr.bf16.mxu0 0
        %2626 = vmatpush1.bf16.msra.mxu0 0
        %2627 = vmatprep.subr.bf16.mxu0 0
        %2628 = vmatpush1.bf16.msra.mxu0 0
        %2629 = vmatprep.subr.bf16.mxu0 0
        %2630 = vmatpush1.bf16.msra.mxu0 0
        %2631 = vmatprep.subr.bf16.mxu0 0
        %2632 = vmatpush1.bf16.msra.mxu0 0
        %2633 = vmatprep.subr.bf16.mxu0 0
        %2634 = vmatpush1.bf16.msra.mxu0 0
        %2635 = vmatprep.subr.bf16.mxu0 0
        %2636 = vmatpush1.bf16.msra.mxu0 0
        %2637 = vmatprep.subr.bf16.mxu0 0
        %2638 = vmatpush1.bf16.msra.mxu0 0
        %2639 = vmatprep.subr.bf16.mxu0 0
        %2640 = vmatpush1.bf16.msra.mxu0 0
        %2641 = vmatprep.subr.bf16.mxu0 0
        %2642 = vmatpush1.bf16.msra.mxu0 0
        %2643 = vmatprep.mubr.bf16.mxu0 0
        %2644 = vmatmul.mubr.bf16.gmra.mrb[0].mxu0 %v2355
        %v2645 = vpop.f32.mrb[0].mxu0
        %v2646 = vadd.f32 %v2582, %v2645
        %v2647 = vpop.f32.mrb[0].mxu0
        %v2648 = vpop.f32.mrb[0].mxu0
        %v2649 = vpop.f32.mrb[0].mxu0
        %2650 = vdwg.mxu0
        %v2655 = vunpack.c.l.b16 %v2558
        %v2656 = vunpack.c.l.b16 %v2559
        %v2657 = vunpack.c.l.b16 %v2560
        %v2658 = vunpack.c.l.b16 %v2561
        %v2659 = vpack.c.b16 %v2656, %v2655
        %v2660 = vpack.c.b16 %v2658, %v2657
        %2663 = vmatprep.subr.bf16.mxu0 0
        %2664 = vmatpush1.bf16.msra.mxu0 %v2659
        %2665 = vmatprep.subr.bf16.mxu0 0
        %2666 = vmatpush1.bf16.msra.mxu0 %v2660
        %2667 = vmatprep.subr.bf16.mxu0 0
        %2668 = vmatpush1.bf16.msra.mxu0 0
        %2669 = vmatprep.subr.bf16.mxu0 0
        %2670 = vmatpush1.bf16.msra.mxu0 0
        %2671 = vmatprep.subr.bf16.mxu0 0
        %2672 = vmatpush1.bf16.msra.mxu0 0
        %2673 = vmatprep.subr.bf16.mxu0 0
        %2674 = vmatpush1.bf16.msra.mxu0 0
        %2675 = vmatprep.subr.bf16.mxu0 0
        %2676 = vmatpush1.bf16.msra.mxu0 0
        %2677 = vmatprep.subr.bf16.mxu0 0
        %2678 = vmatpush1.bf16.msra.mxu0 0
        %2679 = vmatprep.subr.bf16.mxu0 0
        %2680 = vmatpush1.bf16.msra.mxu0 0
        %2681 = vmatprep.subr.bf16.mxu0 0
        %2682 = vmatpush1.bf16.msra.mxu0 0
        %2683 = vmatprep.subr.bf16.mxu0 0
        %2684 = vmatpush1.bf16.msra.mxu0 0
        %2685 = vmatprep.subr.bf16.mxu0 0
        %2686 = vmatpush1.bf16.msra.mxu0 0
        %2687 = vmatprep.subr.bf16.mxu0 0
        %2688 = vmatpush1.bf16.msra.mxu0 0
        %2689 = vmatprep.subr.bf16.mxu0 0
        %2690 = vmatpush1.bf16.msra.mxu0 0
        %2691 = vmatprep.subr.bf16.mxu0 0
        %2692 = vmatpush1.bf16.msra.mxu0 0
        %2693 = vmatprep.subr.bf16.mxu0 0
        %2694 = vmatpush1.bf16.msra.mxu0 0
        %2695 = vmatprep.mubr.bf16.mxu0 0
        %2696 = vmatmul.mubr.bf16.gmra.mrb[0].mxu0 %v2355
        %v2697 = vpop.f32.mrb[0].mxu0
        %v2698 = vadd.f32 %v2586, %v2697
        %v2699 = vpop.f32.mrb[0].mxu0
        %v2700 = vpop.f32.mrb[0].mxu0
        %v2701 = vpop.f32.mrb[0].mxu0
        %2702 = vdwg.mxu0
        %v2707 = vunpack.c.l.b16 %v2562
        %v2708 = vunpack.c.l.b16 %v2563
        %v2709 = vunpack.c.l.b16 %v2564
        %v2710 = vunpack.c.l.b16 %v2565
        %v2711 = vpack.c.b16 %v2708, %v2707
        %v2712 = vpack.c.b16 %v2710, %v2709
        %2715 = vmatprep.subr.bf16.mxu0 0
        %2716 = vmatpush1.bf16.msra.mxu0 %v2711
        %2717 = vmatprep.subr.bf16.mxu0 0
        %2718 = vmatpush1.bf16.msra.mxu0 %v2712
        %2719 = vmatprep.subr.bf16.mxu0 0
        %2720 = vmatpush1.bf16.msra.mxu0 0
        %2721 = vmatprep.subr.bf16.mxu0 0
        %2722 = vmatpush1.bf16.msra.mxu0 0
        %2723 = vmatprep.subr.bf16.mxu0 0
        %2724 = vmatpush1.bf16.msra.mxu0 0
        %2725 = vmatprep.subr.bf16.mxu0 0
        %2726 = vmatpush1.bf16.msra.mxu0 0
        %2727 = vmatprep.subr.bf16.mxu0 0
        %2728 = vmatpush1.bf16.msra.mxu0 0
        %2729 = vmatprep.subr.bf16.mxu0 0
        %2730 = vmatpush1.bf16.msra.mxu0 0
        %2731 = vmatprep.subr.bf16.mxu0 0
        %2732 = vmatpush1.bf16.msra.mxu0 0
        %2733 = vmatprep.subr.bf16.mxu0 0
        %2734 = vmatpush1.bf16.msra.mxu0 0
        %2735 = vmatprep.subr.bf16.mxu0 0
        %2736 = vmatpush1.bf16.msra.mxu0 0
        %2737 = vmatprep.subr.bf16.mxu0 0
        %2738 = vmatpush1.bf16.msra.mxu0 0
        %2739 = vmatprep.subr.bf16.mxu0 0
        %2740 = vmatpush1.bf16.msra.mxu0 0
        %2741 = vmatprep.subr.bf16.mxu0 0
        %2742 = vmatpush1.bf16.msra.mxu0 0
        %2743 = vmatprep.subr.bf16.mxu0 0
        %2744 = vmatpush1.bf16.msra.mxu0 0
        %2745 = vmatprep.subr.bf16.mxu0 0
        %2746 = vmatpush1.bf16.msra.mxu0 0
        %2747 = vmatprep.mubr.bf16.mxu0 0
        %2748 = vmatmul.mubr.bf16.gmra.mrb[0].mxu0 %v2355
        %v2749 = vpop.f32.mrb[0].mxu0
        %v2750 = vadd.f32 %v2590, %v2749
        %v2751 = vpop.f32.mrb[0].mxu0
        %v2752 = vpop.f32.mrb[0].mxu0
        %v2753 = vpop.f32.mrb[0].mxu0
        %2754 = vdwg.mxu0
        %v2759 = vunpack.c.l.b16 %v2566
        %v2760 = vunpack.c.l.b16 %v2567
        %v2761 = vunpack.c.l.b16 %v2568
        %v2762 = vunpack.c.l.b16 %v2569
        %v2763 = vpack.c.b16 %v2760, %v2759
        %v2764 = vpack.c.b16 %v2762, %v2761
        %2767 = vmatprep.subr.bf16.mxu0 0
        %2768 = vmatpush1.bf16.msra.mxu0 %v2763
        %2769 = vmatprep.subr.bf16.mxu0 0
        %2770 = vmatpush1.bf16.msra.mxu0 %v2764
        %2771 = vmatprep.subr.bf16.mxu0 0
        %2772 = vmatpush1.bf16.msra.mxu0 0
        %2773 = vmatprep.subr.bf16.mxu0 0
        %2774 = vmatpush1.bf16.msra.mxu0 0
        %2775 = vmatprep.subr.bf16.mxu0 0
        %2776 = vmatpush1.bf16.msra.mxu0 0
        %2777 = vmatprep.subr.bf16.mxu0 0
        %2778 = vmatpush1.bf16.msra.mxu0 0
        %2779 = vmatprep.subr.bf16.mxu0 0
        %2780 = vmatpush1.bf16.msra.mxu0 0
        %2781 = vmatprep.subr.bf16.mxu0 0
        %2782 = vmatpush1.bf16.msra.mxu0 0
        %2783 = vmatprep.subr.bf16.mxu0 0
        %2784 = vmatpush1.bf16.msra.mxu0 0
        %2785 = vmatprep.subr.bf16.mxu0 0
        %2786 = vmatpush1.bf16.msra.mxu0 0
        %2787 = vmatprep.subr.bf16.mxu0 0
        %2788 = vmatpush1.bf16.msra.mxu0 0
        %2789 = vmatprep.subr.bf16.mxu0 0
        %2790 = vmatpush1.bf16.msra.mxu0 0
        %2791 = vmatprep.subr.bf16.mxu0 0
        %2792 = vmatpush1.bf16.msra.mxu0 0
        %2793 = vmatprep.subr.bf16.mxu0 0
        %2794 = vmatpush1.bf16.msra.mxu0 0
        %2795 = vmatprep.subr.bf16.mxu0 0
        %2796 = vmatpush1.bf16.msra.mxu0 0
        %2797 = vmatprep.subr.bf16.mxu0 0
        %2798 = vmatpush1.bf16.msra.mxu0 0
        %2799 = vmatprep.mubr.bf16.mxu0 0
        %2800 = vmatmul.mubr.bf16.gmra.mrb[0].mxu0 %v2355
        %v2801 = vpop.f32.mrb[0].mxu0
        %v2802 = vadd.f32 %v2594, %v2801
        %v2803 = vpop.f32.mrb[0].mxu0
        %v2804 = vpop.f32.mrb[0].mxu0
        %v2805 = vpop.f32.mrb[0].mxu0
        %2806 = vdwg.mxu0
        %s2807 = scalar_lea.vmem %s4, 64
        %v2808 = vld [vmem:[%s2807] sm:$0xf]
        %v2809 = vld [vmem:[%s2807 + $0x4] sm:$0xf]
        %v2810 = vld [vmem:[%s2807 + $0x8] sm:$0xf]
        %v2811 = vld [vmem:[%s2807 + $0xc] sm:$0xf]
        %v2812 = vld [vmem:[%s2807 + $0x10] sm:$0xf]
        %v2813 = vld [vmem:[%s2807 + $0x14] sm:$0xf]
        %v2814 = vld [vmem:[%s2807 + $0x18] sm:$0xf]
        %v2815 = vld [vmem:[%s2807 + $0x1c] sm:$0xf]
        %v2816 = vld [vmem:[%s2807 + $0x20] sm:$0xf]
        %v2817 = vld [vmem:[%s2807 + $0x24] sm:$0xf]
        %v2818 = vld [vmem:[%s2807 + $0x28] sm:$0xf]
        %v2819 = vld [vmem:[%s2807 + $0x2c] sm:$0xf]
        %v2820 = vld [vmem:[%s2807 + $0x30] sm:$0xf]
        %v2821 = vld [vmem:[%s2807 + $0x34] sm:$0xf]
        %v2822 = vld [vmem:[%s2807 + $0x38] sm:$0xf]
        %v2823 = vld [vmem:[%s2807 + $0x3c] sm:$0xf]
        %s2824 = scalar_lea.vmem %s7, 4
        %v2825 = vld [vmem:[%s2824] sm:$0x1]
        %v2826 = vld [vmem:[%s2824 + $0x1] sm:$0x1]
        %v2827 = vld [vmem:[%s2824 + $0x2] sm:$0x1]
        %v2828 = vld [vmem:[%s2824 + $0x3] sm:$0x1]
        %v2833 = vlaneseq
        %v2834 = vshrl.u32 %v2833, 7
        %v2835 = vsub.s32 0, %v2834
        %v2836 = vrot.slane %v2825, %v2835
        %v2837 = vlaneseq
        %v2838 = vshrl.u32 %v2837, 7
        %v2839 = vsub.s32 0, %v2838
        %v2840 = vrot.slane %v2826, %v2839
        %v2841 = vlaneseq
        %v2842 = vshrl.u32 %v2841, 7
        %v2843 = vsub.s32 0, %v2842
        %v2844 = vrot.slane %v2827, %v2843
        %v2845 = vlaneseq
        %v2846 = vshrl.u32 %v2845, 7
        %v2847 = vsub.s32 0, %v2846
        %v2848 = vrot.slane %v2828, %v2847
        %v2857 = vunpack.c.l.b16 %v2808
        %v2858 = vunpack.c.l.b16 %v2809
        %v2859 = vunpack.c.l.b16 %v2810
        %v2860 = vunpack.c.l.b16 %v2811
        %v2861 = vpack.c.b16 %v2858, %v2857
        %v2862 = vpack.c.b16 %v2860, %v2859
        %2865 = vmatprep.subr.bf16.mxu0 0
        %2866 = vmatpush1.bf16.msra.mxu0 %v2861
        %2867 = vmatprep.subr.bf16.mxu0 0
        %2868 = vmatpush1.bf16.msra.mxu0 %v2862
        %2869 = vmatprep.subr.bf16.mxu0 0
        %2870 = vmatpush1.bf16.msra.mxu0 0
        %2871 = vmatprep.subr.bf16.mxu0 0
        %2872 = vmatpush1.bf16.msra.mxu0 0
        %2873 = vmatprep.subr.bf16.mxu0 0
        %2874 = vmatpush1.bf16.msra.mxu0 0
        %2875 = vmatprep.subr.bf16.mxu0 0
        %2876 = vmatpush1.bf16.msra.mxu0 0
        %2877 = vmatprep.subr.bf16.mxu0 0
        %2878 = vmatpush1.bf16.msra.mxu0 0
        %2879 = vmatprep.subr.bf16.mxu0 0
        %2880 = vmatpush1.bf16.msra.mxu0 0
        %2881 = vmatprep.subr.bf16.mxu0 0
        %2882 = vmatpush1.bf16.msra.mxu0 0
        %2883 = vmatprep.subr.bf16.mxu0 0
        %2884 = vmatpush1.bf16.msra.mxu0 0
        %2885 = vmatprep.subr.bf16.mxu0 0
        %2886 = vmatpush1.bf16.msra.mxu0 0
        %2887 = vmatprep.subr.bf16.mxu0 0
        %2888 = vmatpush1.bf16.msra.mxu0 0
        %2889 = vmatprep.subr.bf16.mxu0 0
        %2890 = vmatpush1.bf16.msra.mxu0 0
        %2891 = vmatprep.subr.bf16.mxu0 0
        %2892 = vmatpush1.bf16.msra.mxu0 0
        %2893 = vmatprep.subr.bf16.mxu0 0
        %2894 = vmatpush1.bf16.msra.mxu0 0
        %2895 = vmatprep.subr.bf16.mxu0 0
        %2896 = vmatpush1.bf16.msra.mxu0 0
        %2897 = vmatprep.mubr.bf16.mxu0 0
        %2898 = vmatmul.mubr.bf16.gmra.mrb[0].mxu0 %v2355
        %v2899 = vpop.f32.mrb[0].mxu0
        %v2900 = vadd.f32 %v2836, %v2899
        %v2901 = vpop.f32.mrb[0].mxu0
        %v2902 = vpop.f32.mrb[0].mxu0
        %v2903 = vpop.f32.mrb[0].mxu0
        %2904 = vdwg.mxu0
        %v2909 = vunpack.c.l.b16 %v2812
        %v2910 = vunpack.c.l.b16 %v2813
        %v2911 = vunpack.c.l.b16 %v2814
        %v2912 = vunpack.c.l.b16 %v2815
        %v2913 = vpack.c.b16 %v2910, %v2909
        %v2914 = vpack.c.b16 %v2912, %v2911
        %2917 = vmatprep.subr.bf16.mxu0 0
        %2918 = vmatpush1.bf16.msra.mxu0 %v2913
        %2919 = vmatprep.subr.bf16.mxu0 0
        %2920 = vmatpush1.bf16.msra.mxu0 %v2914
        %2921 = vmatprep.subr.bf16.mxu0 0
        %2922 = vmatpush1.bf16.msra.mxu0 0
        %2923 = vmatprep.subr.bf16.mxu0 0
        %2924 = vmatpush1.bf16.msra.mxu0 0
        %2925 = vmatprep.subr.bf16.mxu0 0
        %2926 = vmatpush1.bf16.msra.mxu0 0
        %2927 = vmatprep.subr.bf16.mxu0 0
        %2928 = vmatpush1.bf16.msra.mxu0 0
        %2929 = vmatprep.subr.bf16.mxu0 0
        %2930 = vmatpush1.bf16.msra.mxu0 0
        %2931 = vmatprep.subr.bf16.mxu0 0
        %2932 = vmatpush1.bf16.msra.mxu0 0
        %2933 = vmatprep.subr.bf16.mxu0 0
        %2934 = vmatpush1.bf16.msra.mxu0 0
        %2935 = vmatprep.subr.bf16.mxu0 0
        %2936 = vmatpush1.bf16.msra.mxu0 0
        %2937 = vmatprep.subr.bf16.mxu0 0
        %2938 = vmatpush1.bf16.msra.mxu0 0
        %2939 = vmatprep.subr.bf16.mxu0 0
        %2940 = vmatpush1.bf16.msra.mxu0 0
        %2941 = vmatprep.subr.bf16.mxu0 0
        %2942 = vmatpush1.bf16.msra.mxu0 0
        %2943 = vmatprep.subr.bf16.mxu0 0
        %2944 = vmatpush1.bf16.msra.mxu0 0
        %2945 = vmatprep.subr.bf16.mxu0 0
        %2946 = vmatpush1.bf16.msra.mxu0 0
        %2947 = vmatprep.subr.bf16.mxu0 0
        %2948 = vmatpush1.bf16.msra.mxu0 0
        %2949 = vmatprep.mubr.bf16.mxu0 0
        %2950 = vmatmul.mubr.bf16.gmra.mrb[0].mxu0 %v2355
        %v2951 = vpop.f32.mrb[0].mxu0
        %v2952 = vadd.f32 %v2840, %v2951
        %v2953 = vpop.f32.mrb[0].mxu0
        %v2954 = vpop.f32.mrb[0].mxu0
        %v2955 = vpop.f32.mrb[0].mxu0
        %2956 = vdwg.mxu0
        %v2961 = vunpack.c.l.b16 %v2816
        %v2962 = vunpack.c.l.b16 %v2817
        %v2963 = vunpack.c.l.b16 %v2818
        %v2964 = vunpack.c.l.b16 %v2819
        %v2965 = vpack.c.b16 %v2962, %v2961
        %v2966 = vpack.c.b16 %v2964, %v2963
        %2969 = vmatprep.subr.bf16.mxu0 0
        %2970 = vmatpush1.bf16.msra.mxu0 %v2965
        %2971 = vmatprep.subr.bf16.mxu0 0
        %2972 = vmatpush1.bf16.msra.mxu0 %v2966
        %2973 = vmatprep.subr.bf16.mxu0 0
        %2974 = vmatpush1.bf16.msra.mxu0 0
        %2975 = vmatprep.subr.bf16.mxu0 0
        %2976 = vmatpush1.bf16.msra.mxu0 0
        %2977 = vmatprep.subr.bf16.mxu0 0
        %2978 = vmatpush1.bf16.msra.mxu0 0
        %2979 = vmatprep.subr.bf16.mxu0 0
        %2980 = vmatpush1.bf16.msra.mxu0 0
        %2981 = vmatprep.subr.bf16.mxu0 0
        %2982 = vmatpush1.bf16.msra.mxu0 0
        %2983 = vmatprep.subr.bf16.mxu0 0
        %2984 = vmatpush1.bf16.msra.mxu0 0
        %2985 = vmatprep.subr.bf16.mxu0 0
        %2986 = vmatpush1.bf16.msra.mxu0 0
        %2987 = vmatprep.subr.bf16.mxu0 0
        %2988 = vmatpush1.bf16.msra.mxu0 0
        %2989 = vmatprep.subr.bf16.mxu0 0
        %2990 = vmatpush1.bf16.msra.mxu0 0
        %2991 = vmatprep.subr.bf16.mxu0 0
        %2992 = vmatpush1.bf16.msra.mxu0 0
        %2993 = vmatprep.subr.bf16.mxu0 0
        %2994 = vmatpush1.bf16.msra.mxu0 0
        %2995 = vmatprep.subr.bf16.mxu0 0
        %2996 = vmatpush1.bf16.msra.mxu0 0
        %2997 = vmatprep.subr.bf16.mxu0 0
        %2998 = vmatpush1.bf16.msra.mxu0 0
        %2999 = vmatprep.subr.bf16.mxu0 0
        %3000 = vmatpush1.bf16.msra.mxu0 0
        %3001 = vmatprep.mubr.bf16.mxu0 0
        %3002 = vmatmul.mubr.bf16.gmra.mrb[0].mxu0 %v2355
        %v3003 = vpop.f32.mrb[0].mxu0
        %v3004 = vadd.f32 %v2844, %v3003
        %v3005 = vpop.f32.mrb[0].mxu0
        %v3006 = vpop.f32.mrb[0].mxu0
        %v3007 = vpop.f32.mrb[0].mxu0
        %3008 = vdwg.mxu0
        %v3013 = vunpack.c.l.b16 %v2820
        %v3014 = vunpack.c.l.b16 %v2821
        %v3015 = vunpack.c.l.b16 %v2822
        %v3016 = vunpack.c.l.b16 %v2823
        %v3017 = vpack.c.b16 %v3014, %v3013
        %v3018 = vpack.c.b16 %v3016, %v3015
        %3021 = vmatprep.subr.bf16.mxu0 0
        %3022 = vmatpush1.bf16.msra.mxu0 %v3017
        %3023 = vmatprep.subr.bf16.mxu0 0
        %3024 = vmatpush1.bf16.msra.mxu0 %v3018
        %3025 = vmatprep.subr.bf16.mxu0 0
        %3026 = vmatpush1.bf16.msra.mxu0 0
        %3027 = vmatprep.subr.bf16.mxu0 0
        %3028 = vmatpush1.bf16.msra.mxu0 0
        %3029 = vmatprep.subr.bf16.mxu0 0
        %3030 = vmatpush1.bf16.msra.mxu0 0
        %3031 = vmatprep.subr.bf16.mxu0 0
        %3032 = vmatpush1.bf16.msra.mxu0 0
        %3033 = vmatprep.subr.bf16.mxu0 0
        %3034 = vmatpush1.bf16.msra.mxu0 0
        %3035 = vmatprep.subr.bf16.mxu0 0
        %3036 = vmatpush1.bf16.msra.mxu0 0
        %3037 = vmatprep.subr.bf16.mxu0 0
        %3038 = vmatpush1.bf16.msra.mxu0 0
        %3039 = vmatprep.subr.bf16.mxu0 0
        %3040 = vmatpush1.bf16.msra.mxu0 0
        %3041 = vmatprep.subr.bf16.mxu0 0
        %3042 = vmatpush1.bf16.msra.mxu0 0
        %3043 = vmatprep.subr.bf16.mxu0 0
        %3044 = vmatpush1.bf16.msra.mxu0 0
        %3045 = vmatprep.subr.bf16.mxu0 0
        %3046 = vmatpush1.bf16.msra.mxu0 0
        %3047 = vmatprep.subr.bf16.mxu0 0
        %3048 = vmatpush1.bf16.msra.mxu0 0
        %3049 = vmatprep.subr.bf16.mxu0 0
        %3050 = vmatpush1.bf16.msra.mxu0 0
        %3051 = vmatprep.subr.bf16.mxu0 0
        %3052 = vmatpush1.bf16.msra.mxu0 0
        %3053 = vmatprep.mubr.bf16.mxu0 0
        %3054 = vmatmul.mubr.bf16.gmra.mrb[0].mxu0 %v2355
        %v3055 = vpop.f32.mrb[0].mxu0
        %v3056 = vadd.f32 %v2848, %v3055
        %v3057 = vpop.f32.mrb[0].mxu0
        %v3058 = vpop.f32.mrb[0].mxu0
        %v3059 = vpop.f32.mrb[0].mxu0
        %3060 = vdwg.mxu0
        %v3061 = vpack.c.bf16 %v2392, %v2392
        %v3062 = vpack.c.bf16 %v2444, %v2444
        %v3063 = vpack.c.bf16 %v2496, %v2496
        %v3064 = vpack.c.bf16 %v2548, %v2548
        %v3065 = vpack.c.bf16 %v2646, %v2646
        %v3066 = vpack.c.bf16 %v2698, %v2698
        %v3067 = vpack.c.bf16 %v2750, %v2750
        %v3068 = vpack.c.bf16 %v2802, %v2802
        %v3070 = vsel %vm1411, %v3061, 0
        %v3073 = vsel %vm1411, %v3065, 0
        %3075 = vmatprep.subr.bf16.mxu0 0
        %3076 = vmatpush1.bf16.xpose.msra.mxu0 %v3073
        %3077 = vmatprep.subr.bf16.mxu0 0
        %3078 = vmatpush1.bf16.xpose.msra.mxu0 0
        %3079 = vmatprep.subr.bf16.mxu0 0
        %3080 = vmatpush1.bf16.xpose.msra.mxu0 0
        %3081 = vmatprep.subr.bf16.mxu0 0
        %3082 = vmatpush1.bf16.xpose.msra.mxu0 0
        %3083 = vmatprep.subr.bf16.mxu0 0
        %3084 = vmatpush1.bf16.xpose.msra.mxu0 0
        %3085 = vmatprep.subr.bf16.mxu0 0
        %3086 = vmatpush1.bf16.xpose.msra.mxu0 0
        %3087 = vmatprep.subr.bf16.mxu0 0
        %3088 = vmatpush1.bf16.xpose.msra.mxu0 0
        %3089 = vmatprep.subr.bf16.mxu0 0
        %3090 = vmatpush1.bf16.xpose.msra.mxu0 0
        %3091 = vmatprep.subr.bf16.mxu0 0
        %3092 = vmatpush1.bf16.xpose.msra.mxu0 0
        %3093 = vmatprep.subr.bf16.mxu0 0
        %3094 = vmatpush1.bf16.xpose.msra.mxu0 0
        %3095 = vmatprep.subr.bf16.mxu0 0
        %3096 = vmatpush1.bf16.xpose.msra.mxu0 0
        %3097 = vmatprep.subr.bf16.mxu0 0
        %3098 = vmatpush1.bf16.xpose.msra.mxu0 0
        %3099 = vmatprep.subr.bf16.mxu0 0
        %3100 = vmatpush1.bf16.xpose.msra.mxu0 0
        %3101 = vmatprep.subr.bf16.mxu0 0
        %3102 = vmatpush1.bf16.xpose.msra.mxu0 0
        %3103 = vmatprep.subr.bf16.mxu0 0
        %3104 = vmatpush1.bf16.xpose.msra.mxu0 0
        %3105 = vmatprep.subr.bf16.mxu0 0
        %3106 = vmatpush1.bf16.xpose.msra.mxu0 0
        %3107 = vmatprep.mubr.bf16.mxu0 0
        %3108 = vmatmul.mubr.bf16.gmra.mrb[0].mxu0 %v3070
        %v3109 = vpop.f32.mrb[0].mxu0
        %v3110 = vadd.f32 0.0, %v3109
        %v3111 = vpop.f32.mrb[0].mxu0
        %v3112 = vpop.f32.mrb[0].mxu0
        %v3113 = vpop.f32.mrb[0].mxu0
        %3114 = vdwg.mxu0
        %v3116 = vsel %vm1411, %v3062, 0
        %v3119 = vsel %vm1411, %v3066, 0
        %3121 = vmatprep.subr.bf16.mxu0 0
        %3122 = vmatpush1.bf16.xpose.msra.mxu0 %v3119
        %3123 = vmatprep.subr.bf16.mxu0 0
        %3124 = vmatpush1.bf16.xpose.msra.mxu0 0
        %3125 = vmatprep.subr.bf16.mxu0 0
        %3126 = vmatpush1.bf16.xpose.msra.mxu0 0
        %3127 = vmatprep.subr.bf16.mxu0 0
        %3128 = vmatpush1.bf16.xpose.msra.mxu0 0
        %3129 = vmatprep.subr.bf16.mxu0 0
        %3130 = vmatpush1.bf16.xpose.msra.mxu0 0
        %3131 = vmatprep.subr.bf16.mxu0 0
        %3132 = vmatpush1.bf16.xpose.msra.mxu0 0
        %3133 = vmatprep.subr.bf16.mxu0 0
        %3134 = vmatpush1.bf16.xpose.msra.mxu0 0
        %3135 = vmatprep.subr.bf16.mxu0 0
        %3136 = vmatpush1.bf16.xpose.msra.mxu0 0
        %3137 = vmatprep.subr.bf16.mxu0 0
        %3138 = vmatpush1.bf16.xpose.msra.mxu0 0
        %3139 = vmatprep.subr.bf16.mxu0 0
        %3140 = vmatpush1.bf16.xpose.msra.mxu0 0
        %3141 = vmatprep.subr.bf16.mxu0 0
        %3142 = vmatpush1.bf16.xpose.msra.mxu0 0
        %3143 = vmatprep.subr.bf16.mxu0 0
        %3144 = vmatpush1.bf16.xpose.msra.mxu0 0
        %3145 = vmatprep.subr.bf16.mxu0 0
        %3146 = vmatpush1.bf16.xpose.msra.mxu0 0
        %3147 = vmatprep.subr.bf16.mxu0 0
        %3148 = vmatpush1.bf16.xpose.msra.mxu0 0
        %3149 = vmatprep.subr.bf16.mxu0 0
        %3150 = vmatpush1.bf16.xpose.msra.mxu0 0
        %3151 = vmatprep.subr.bf16.mxu0 0
        %3152 = vmatpush1.bf16.xpose.msra.mxu0 0
        %3153 = vmatprep.mubr.bf16.mxu0 0
        %3154 = vmatmul.mubr.bf16.gmra.mrb[0].mxu0 %v3116
        %v3155 = vpop.f32.mrb[0].mxu0
        %v3156 = vadd.f32 0.0, %v3155
        %v3157 = vpop.f32.mrb[0].mxu0
        %v3158 = vpop.f32.mrb[0].mxu0
        %v3159 = vpop.f32.mrb[0].mxu0
        %3160 = vdwg.mxu0
        %v3162 = vsel %vm1411, %v3063, 0
        %v3165 = vsel %vm1411, %v3067, 0
        %3167 = vmatprep.subr.bf16.mxu0 0
        %3168 = vmatpush1.bf16.xpose.msra.mxu0 %v3165
        %3169 = vmatprep.subr.bf16.mxu0 0
        %3170 = vmatpush1.bf16.xpose.msra.mxu0 0
        %3171 = vmatprep.subr.bf16.mxu0 0
        %3172 = vmatpush1.bf16.xpose.msra.mxu0 0
        %3173 = vmatprep.subr.bf16.mxu0 0
        %3174 = vmatpush1.bf16.xpose.msra.mxu0 0
        %3175 = vmatprep.subr.bf16.mxu0 0
        %3176 = vmatpush1.bf16.xpose.msra.mxu0 0
        %3177 = vmatprep.subr.bf16.mxu0 0
        %3178 = vmatpush1.bf16.xpose.msra.mxu0 0
        %3179 = vmatprep.subr.bf16.mxu0 0
        %3180 = vmatpush1.bf16.xpose.msra.mxu0 0
        %3181 = vmatprep.subr.bf16.mxu0 0
        %3182 = vmatpush1.bf16.xpose.msra.mxu0 0
        %3183 = vmatprep.subr.bf16.mxu0 0
        %3184 = vmatpush1.bf16.xpose.msra.mxu0 0
        %3185 = vmatprep.subr.bf16.mxu0 0
        %3186 = vmatpush1.bf16.xpose.msra.mxu0 0
        %3187 = vmatprep.subr.bf16.mxu0 0
        %3188 = vmatpush1.bf16.xpose.msra.mxu0 0
        %3189 = vmatprep.subr.bf16.mxu0 0
        %3190 = vmatpush1.bf16.xpose.msra.mxu0 0
        %3191 = vmatprep.subr.bf16.mxu0 0
        %3192 = vmatpush1.bf16.xpose.msra.mxu0 0
        %3193 = vmatprep.subr.bf16.mxu0 0
        %3194 = vmatpush1.bf16.xpose.msra.mxu0 0
        %3195 = vmatprep.subr.bf16.mxu0 0
        %3196 = vmatpush1.bf16.xpose.msra.mxu0 0
        %3197 = vmatprep.subr.bf16.mxu0 0
        %3198 = vmatpush1.bf16.xpose.msra.mxu0 0
        %3199 = vmatprep.mubr.bf16.mxu0 0
        %3200 = vmatmul.mubr.bf16.gmra.mrb[0].mxu0 %v3162
        %v3201 = vpop.f32.mrb[0].mxu0
        %v3202 = vadd.f32 0.0, %v3201
        %v3203 = vpop.f32.mrb[0].mxu0
        %v3204 = vpop.f32.mrb[0].mxu0
        %v3205 = vpop.f32.mrb[0].mxu0
        %3206 = vdwg.mxu0
        %v3208 = vsel %vm1411, %v3064, 0
        %v3211 = vsel %vm1411, %v3068, 0
        %3213 = vmatprep.subr.bf16.mxu0 0
        %3214 = vmatpush1.bf16.xpose.msra.mxu0 %v3211
        %3215 = vmatprep.subr.bf16.mxu0 0
        %3216 = vmatpush1.bf16.xpose.msra.mxu0 0
        %3217 = vmatprep.subr.bf16.mxu0 0
        %3218 = vmatpush1.bf16.xpose.msra.mxu0 0
        %3219 = vmatprep.subr.bf16.mxu0 0
        %3220 = vmatpush1.bf16.xpose.msra.mxu0 0
        %3221 = vmatprep.subr.bf16.mxu0 0
        %3222 = vmatpush1.bf16.xpose.msra.mxu0 0
        %3223 = vmatprep.subr.bf16.mxu0 0
        %3224 = vmatpush1.bf16.xpose.msra.mxu0 0
        %3225 = vmatprep.subr.bf16.mxu0 0
        %3226 = vmatpush1.bf16.xpose.msra.mxu0 0
        %3227 = vmatprep.subr.bf16.mxu0 0
        %3228 = vmatpush1.bf16.xpose.msra.mxu0 0
        %3229 = vmatprep.subr.bf16.mxu0 0
        %3230 = vmatpush1.bf16.xpose.msra.mxu0 0
        %3231 = vmatprep.subr.bf16.mxu0 0
        %3232 = vmatpush1.bf16.xpose.msra.mxu0 0
        %3233 = vmatprep.subr.bf16.mxu0 0
        %3234 = vmatpush1.bf16.xpose.msra.mxu0 0
        %3235 = vmatprep.subr.bf16.mxu0 0
        %3236 = vmatpush1.bf16.xpose.msra.mxu0 0
        %3237 = vmatprep.subr.bf16.mxu0 0
        %3238 = vmatpush1.bf16.xpose.msra.mxu0 0
        %3239 = vmatprep.subr.bf16.mxu0 0
        %3240 = vmatpush1.bf16.xpose.msra.mxu0 0
        %3241 = vmatprep.subr.bf16.mxu0 0
        %3242 = vmatpush1.bf16.xpose.msra.mxu0 0
        %3243 = vmatprep.subr.bf16.mxu0 0
        %3244 = vmatpush1.bf16.xpose.msra.mxu0 0
        %3245 = vmatprep.mubr.bf16.mxu0 0
        %3246 = vmatmul.mubr.bf16.gmra.mrb[0].mxu0 %v3208
        %v3247 = vpop.f32.mrb[0].mxu0
        %v3248 = vadd.f32 0.0, %v3247
        %v3249 = vpop.f32.mrb[0].mxu0
        %v3250 = vpop.f32.mrb[0].mxu0
        %v3251 = vpop.f32.mrb[0].mxu0
        %3252 = vdwg.mxu0
        %v3253 = vmul.f32 %v3110, 0.35355338
        %v3254 = vmul.f32 %v3156, 0.35355338
        %v3255 = vmul.f32 %v3202, 0.35355338
        %v3256 = vmul.f32 %v3248, 0.35355338
        %v3257 = vadd.f32 %v3253, %v1604
        %v3258 = vadd.f32 %v3254, %v1604
        %v3259 = vadd.f32 %v3255, %v1604
        %v3260 = vadd.f32 %v3256, %v1604
        %v3261 = vsel %vm1411, %v3257, -inf
        %3262 = vmax.xlane.f32.xlu0 %v3261
        %v3263 = vpop.xlane.xlu0 %3262
        %v3264 = vsel %vm1411, %v3258, -inf
        %3265 = vmax.xlane.f32.xlu0 %v3264
        %v3266 = vpop.xlane.xlu0 %3265
        %v3267 = vsel %vm1411, %v3259, -inf
        %3268 = vmax.xlane.f32.xlu0 %v3267
        %v3269 = vpop.xlane.xlu0 %3268
        %v3270 = vsel %vm1411, %v3260, -inf
        %3271 = vmax.xlane.f32.xlu0 %v3270
        %v3272 = vpop.xlane.xlu0 %3271
        %v3273 = vsub.f32 %v3257, %v3263
        %v3274 = vsub.f32 %v3258, %v3266
        %v3275 = vsub.f32 %v3259, %v3269
        %v3276 = vsub.f32 %v3260, %v3272
        %v3277 = vmul.f32 %v3273, 1.442695
        %v3278 = vpow.pop %v3277
        %v3279 = vmul.f32 %v3274, 1.442695
        %v3280 = vpow.pop %v3279
        %v3281 = vmul.f32 %v3275, 1.442695
        %v3282 = vpow.pop %v3281
        %v3283 = vmul.f32 %v3276, 1.442695
        %v3284 = vpow.pop %v3283
        %v3285 = vsel %vm1411, %v3278, 0.0
        %3286 = vadd.xlane.f32.xlu0 %v3285
        %v3287 = vpop.xlane.xlu0 %3286
        %v3288 = vsel %vm1411, %v3280, 0.0
        %3289 = vadd.xlane.f32.xlu0 %v3288
        %v3290 = vpop.xlane.xlu0 %3289
        %v3291 = vsel %vm1411, %v3282, 0.0
        %3292 = vadd.xlane.f32.xlu0 %v3291
        %v3293 = vpop.xlane.xlu0 %3292
        %v3294 = vsel %vm1411, %v3284, 0.0
        %3295 = vadd.xlane.f32.xlu0 %v3294
        %v3296 = vpop.xlane.xlu0 %3295
        %v3297 = vrcp.pop %v3287
        %v3298 = vrcp.pop %v3290
        %v3299 = vrcp.pop %v3293
        %v3300 = vrcp.pop %v3296
        %v3301 = vmul.f32 %v3278, %v3297
        %v3302 = vmul.f32 %v3280, %v3298
        %v3303 = vmul.f32 %v3282, %v3299
        %v3304 = vmul.f32 %v3284, %v3300
        %v3305 = vpack.c.bf16 %v3301, %v3301
        %v3306 = vpack.c.bf16 %v3302, %v3302
        %v3307 = vpack.c.bf16 %v3303, %v3303
        %v3308 = vpack.c.bf16 %v3304, %v3304
        %v3309 = vpack.c.bf16 %v2900, %v2900
        %v3310 = vpack.c.bf16 %v2952, %v2952
        %v3311 = vpack.c.bf16 %v3004, %v3004
        %v3312 = vpack.c.bf16 %v3056, %v3056
        %v3314 = vsel %vm1411, %v3305, 0
        %v3317 = vsel %vm1665, %v3309, 0
        %3319 = vmatprep.subr.bf16.mxu0 0
        %3320 = vmatpush1.bf16.msra.mxu0 %v3317
        %3321 = vmatprep.subr.bf16.mxu0 0
        %3322 = vmatpush1.bf16.msra.mxu0 0
        %3323 = vmatprep.subr.bf16.mxu0 0
        %3324 = vmatpush1.bf16.msra.mxu0 0
        %3325 = vmatprep.subr.bf16.mxu0 0
        %3326 = vmatpush1.bf16.msra.mxu0 0
        %3327 = vmatprep.subr.bf16.mxu0 0
        %3328 = vmatpush1.bf16.msra.mxu0 0
        %3329 = vmatprep.subr.bf16.mxu0 0
        %3330 = vmatpush1.bf16.msra.mxu0 0
        %3331 = vmatprep.subr.bf16.mxu0 0
        %3332 = vmatpush1.bf16.msra.mxu0 0
        %3333 = vmatprep.subr.bf16.mxu0 0
        %3334 = vmatpush1.bf16.msra.mxu0 0
        %3335 = vmatprep.subr.bf16.mxu0 0
        %3336 = vmatpush1.bf16.msra.mxu0 0
        %3337 = vmatprep.subr.bf16.mxu0 0
        %3338 = vmatpush1.bf16.msra.mxu0 0
        %3339 = vmatprep.subr.bf16.mxu0 0
        %3340 = vmatpush1.bf16.msra.mxu0 0
        %3341 = vmatprep.subr.bf16.mxu0 0
        %3342 = vmatpush1.bf16.msra.mxu0 0
        %3343 = vmatprep.subr.bf16.mxu0 0
        %3344 = vmatpush1.bf16.msra.mxu0 0
        %3345 = vmatprep.subr.bf16.mxu0 0
        %3346 = vmatpush1.bf16.msra.mxu0 0
        %3347 = vmatprep.subr.bf16.mxu0 0
        %3348 = vmatpush1.bf16.msra.mxu0 0
        %3349 = vmatprep.subr.bf16.mxu0 0
        %3350 = vmatpush1.bf16.msra.mxu0 0
        %3351 = vmatprep.mubr.bf16.mxu0 0
        %3352 = vmatmul.mubr.bf16.gmra.mrb[0].mxu0 %v3314
        %v3353 = vpop.f32.mrb[0].mxu0
        %v3354 = vadd.f32 0.0, %v3353
        %v3355 = vpop.f32.mrb[0].mxu0
        %v3356 = vpop.f32.mrb[0].mxu0
        %v3357 = vpop.f32.mrb[0].mxu0
        %3358 = vdwg.mxu0
        %v3360 = vsel %vm1411, %v3306, 0
        %v3363 = vsel %vm1665, %v3310, 0
        %3365 = vmatprep.subr.bf16.mxu0 0
        %3366 = vmatpush1.bf16.msra.mxu0 %v3363
        %3367 = vmatprep.subr.bf16.mxu0 0
        %3368 = vmatpush1.bf16.msra.mxu0 0
        %3369 = vmatprep.subr.bf16.mxu0 0
        %3370 = vmatpush1.bf16.msra.mxu0 0
        %3371 = vmatprep.subr.bf16.mxu0 0
        %3372 = vmatpush1.bf16.msra.mxu0 0
        %3373 = vmatprep.subr.bf16.mxu0 0
        %3374 = vmatpush1.bf16.msra.mxu0 0
        %3375 = vmatprep.subr.bf16.mxu0 0
        %3376 = vmatpush1.bf16.msra.mxu0 0
        %3377 = vmatprep.subr.bf16.mxu0 0
        %3378 = vmatpush1.bf16.msra.mxu0 0
        %3379 = vmatprep.subr.bf16.mxu0 0
        %3380 = vmatpush1.bf16.msra.mxu0 0
        %3381 = vmatprep.subr.bf16.mxu0 0
        %3382 = vmatpush1.bf16.msra.mxu0 0
        %3383 = vmatprep.subr.bf16.mxu0 0
        %3384 = vmatpush1.bf16.msra.mxu0 0
        %3385 = vmatprep.subr.bf16.mxu0 0
        %3386 = vmatpush1.bf16.msra.mxu0 0
        %3387 = vmatprep.subr.bf16.mxu0 0
        %3388 = vmatpush1.bf16.msra.mxu0 0
        %3389 = vmatprep.subr.bf16.mxu0 0
        %3390 = vmatpush1.bf16.msra.mxu0 0
        %3391 = vmatprep.subr.bf16.mxu0 0
        %3392 = vmatpush1.bf16.msra.mxu0 0
        %3393 = vmatprep.subr.bf16.mxu0 0
        %3394 = vmatpush1.bf16.msra.mxu0 0
        %3395 = vmatprep.subr.bf16.mxu0 0
        %3396 = vmatpush1.bf16.msra.mxu0 0
        %3397 = vmatprep.mubr.bf16.mxu0 0
        %3398 = vmatmul.mubr.bf16.gmra.mrb[0].mxu0 %v3360
        %v3399 = vpop.f32.mrb[0].mxu0
        %v3400 = vadd.f32 0.0, %v3399
        %v3401 = vpop.f32.mrb[0].mxu0
        %v3402 = vpop.f32.mrb[0].mxu0
        %v3403 = vpop.f32.mrb[0].mxu0
        %3404 = vdwg.mxu0
        %v3406 = vsel %vm1411, %v3307, 0
        %v3409 = vsel %vm1665, %v3311, 0
        %3411 = vmatprep.subr.bf16.mxu0 0
        %3412 = vmatpush1.bf16.msra.mxu0 %v3409
        %3413 = vmatprep.subr.bf16.mxu0 0
        %3414 = vmatpush1.bf16.msra.mxu0 0
        %3415 = vmatprep.subr.bf16.mxu0 0
        %3416 = vmatpush1.bf16.msra.mxu0 0
        %3417 = vmatprep.subr.bf16.mxu0 0
        %3418 = vmatpush1.bf16.msra.mxu0 0
        %3419 = vmatprep.subr.bf16.mxu0 0
        %3420 = vmatpush1.bf16.msra.mxu0 0
        %3421 = vmatprep.subr.bf16.mxu0 0
        %3422 = vmatpush1.bf16.msra.mxu0 0
        %3423 = vmatprep.subr.bf16.mxu0 0
        %3424 = vmatpush1.bf16.msra.mxu0 0
        %3425 = vmatprep.subr.bf16.mxu0 0
        %3426 = vmatpush1.bf16.msra.mxu0 0
        %3427 = vmatprep.subr.bf16.mxu0 0
        %3428 = vmatpush1.bf16.msra.mxu0 0
        %3429 = vmatprep.subr.bf16.mxu0 0
        %3430 = vmatpush1.bf16.msra.mxu0 0
        %3431 = vmatprep.subr.bf16.mxu0 0
        %3432 = vmatpush1.bf16.msra.mxu0 0
        %3433 = vmatprep.subr.bf16.mxu0 0
        %3434 = vmatpush1.bf16.msra.mxu0 0
        %3435 = vmatprep.subr.bf16.mxu0 0
        %3436 = vmatpush1.bf16.msra.mxu0 0
        %3437 = vmatprep.subr.bf16.mxu0 0
        %3438 = vmatpush1.bf16.msra.mxu0 0
        %3439 = vmatprep.subr.bf16.mxu0 0
        %3440 = vmatpush1.bf16.msra.mxu0 0
        %3441 = vmatprep.subr.bf16.mxu0 0
        %3442 = vmatpush1.bf16.msra.mxu0 0
        %3443 = vmatprep.mubr.bf16.mxu0 0
        %3444 = vmatmul.mubr.bf16.gmra.mrb[0].mxu0 %v3406
        %v3445 = vpop.f32.mrb[0].mxu0
        %v3446 = vadd.f32 0.0, %v3445
        %v3447 = vpop.f32.mrb[0].mxu0
        %v3448 = vpop.f32.mrb[0].mxu0
        %v3449 = vpop.f32.mrb[0].mxu0
        %3450 = vdwg.mxu0
        %v3452 = vsel %vm1411, %v3308, 0
        %v3455 = vsel %vm1665, %v3312, 0
        %3457 = vmatprep.subr.bf16.mxu0 0
        %3458 = vmatpush1.bf16.msra.mxu0 %v3455
        %3459 = vmatprep.subr.bf16.mxu0 0
        %3460 = vmatpush1.bf16.msra.mxu0 0
        %3461 = vmatprep.subr.bf16.mxu0 0
        %3462 = vmatpush1.bf16.msra.mxu0 0
        %3463 = vmatprep.subr.bf16.mxu0 0
        %3464 = vmatpush1.bf16.msra.mxu0 0
        %3465 = vmatprep.subr.bf16.mxu0 0
        %3466 = vmatpush1.bf16.msra.mxu0 0
        %3467 = vmatprep.subr.bf16.mxu0 0
        %3468 = vmatpush1.bf16.msra.mxu0 0
        %3469 = vmatprep.subr.bf16.mxu0 0
        %3470 = vmatpush1.bf16.msra.mxu0 0
        %3471 = vmatprep.subr.bf16.mxu0 0
        %3472 = vmatpush1.bf16.msra.mxu0 0
        %3473 = vmatprep.subr.bf16.mxu0 0
        %3474 = vmatpush1.bf16.msra.mxu0 0
        %3475 = vmatprep.subr.bf16.mxu0 0
        %3476 = vmatpush1.bf16.msra.mxu0 0
        %3477 = vmatprep.subr.bf16.mxu0 0
        %3478 = vmatpush1.bf16.msra.mxu0 0
        %3479 = vmatprep.subr.bf16.mxu0 0
        %3480 = vmatpush1.bf16.msra.mxu0 0
        %3481 = vmatprep.subr.bf16.mxu0 0
        %3482 = vmatpush1.bf16.msra.mxu0 0
        %3483 = vmatprep.subr.bf16.mxu0 0
        %3484 = vmatpush1.bf16.msra.mxu0 0
        %3485 = vmatprep.subr.bf16.mxu0 0
        %3486 = vmatpush1.bf16.msra.mxu0 0
        %3487 = vmatprep.subr.bf16.mxu0 0
        %3488 = vmatpush1.bf16.msra.mxu0 0
        %3489 = vmatprep.mubr.bf16.mxu0 0
        %3490 = vmatmul.mubr.bf16.gmra.mrb[0].mxu0 %v3452
        %v3491 = vpop.f32.mrb[0].mxu0
        %v3492 = vadd.f32 0.0, %v3491
        %v3493 = vpop.f32.mrb[0].mxu0
        %v3494 = vpop.f32.mrb[0].mxu0
        %v3495 = vpop.f32.mrb[0].mxu0
        %3496 = vdwg.mxu0
        %v3497 = vpack.c.bf16 %v3354, %v3354
        %v3498 = vpack.c.bf16 %v3400, %v3400
        %v3499 = vpack.c.bf16 %v3446, %v3446
        %v3500 = vpack.c.bf16 %v3492, %v3492
        %s3501 = scalar_lea.vmem %s8, 16
        %v3502 = vld [vmem:[%s3501] sm:$0xf]
        %v3503 = vld [vmem:[%s3501 + $0x4] sm:$0xf]
        %v3504 = vld [vmem:[%s3501 + $0x8] sm:$0xf]
        %v3505 = vld [vmem:[%s3501 + $0xc] sm:$0xf]
        %v3507 = vsel %vm1411, %v3497, 0
        %v3510 = vsel %vm1665, %v3502, 0
        %3512 = vmatprep.subr.bf16.mxu0 0
        %3513 = vmatpush1.bf16.msra.mxu0 %v3510
        %3514 = vmatprep.subr.bf16.mxu0 0
        %3515 = vmatpush1.bf16.msra.mxu0 0
        %3516 = vmatprep.subr.bf16.mxu0 0
        %3517 = vmatpush1.bf16.msra.mxu0 0
        %3518 = vmatprep.subr.bf16.mxu0 0
        %3519 = vmatpush1.bf16.msra.mxu0 0
        %3520 = vmatprep.subr.bf16.mxu0 0
        %3521 = vmatpush1.bf16.msra.mxu0 0
        %3522 = vmatprep.subr.bf16.mxu0 0
        %3523 = vmatpush1.bf16.msra.mxu0 0
        %3524 = vmatprep.subr.bf16.mxu0 0
        %3525 = vmatpush1.bf16.msra.mxu0 0
        %3526 = vmatprep.subr.bf16.mxu0 0
        %3527 = vmatpush1.bf16.msra.mxu0 0
        %3528 = vmatprep.subr.bf16.mxu0 0
        %3529 = vmatpush1.bf16.msra.mxu0 0
        %3530 = vmatprep.subr.bf16.mxu0 0
        %3531 = vmatpush1.bf16.msra.mxu0 0
        %3532 = vmatprep.subr.bf16.mxu0 0
        %3533 = vmatpush1.bf16.msra.mxu0 0
        %3534 = vmatprep.subr.bf16.mxu0 0
        %3535 = vmatpush1.bf16.msra.mxu0 0
        %3536 = vmatprep.subr.bf16.mxu0 0
        %3537 = vmatpush1.bf16.msra.mxu0 0
        %3538 = vmatprep.subr.bf16.mxu0 0
        %3539 = vmatpush1.bf16.msra.mxu0 0
        %3540 = vmatprep.subr.bf16.mxu0 0
        %3541 = vmatpush1.bf16.msra.mxu0 0
        %3542 = vmatprep.subr.bf16.mxu0 0
        %3543 = vmatpush1.bf16.msra.mxu0 0
        %3544 = vmatprep.mubr.bf16.mxu0 0
        %3545 = vmatmul.mubr.bf16.gmra.mrb[0].mxu0 %v3507
        %v3546 = vpop.f32.mrb[0].mxu0
        %v3547 = vadd.f32 0.0, %v3546
        %v3548 = vpop.f32.mrb[0].mxu0
        %v3549 = vpop.f32.mrb[0].mxu0
        %v3550 = vpop.f32.mrb[0].mxu0
        %3551 = vdwg.mxu0
        %v3553 = vsel %vm1411, %v3498, 0
        %v3556 = vsel %vm1665, %v3503, 0
        %3558 = vmatprep.subr.bf16.mxu0 0
        %3559 = vmatpush1.bf16.msra.mxu0 %v3556
        %3560 = vmatprep.subr.bf16.mxu0 0
        %3561 = vmatpush1.bf16.msra.mxu0 0
        %3562 = vmatprep.subr.bf16.mxu0 0
        %3563 = vmatpush1.bf16.msra.mxu0 0
        %3564 = vmatprep.subr.bf16.mxu0 0
        %3565 = vmatpush1.bf16.msra.mxu0 0
        %3566 = vmatprep.subr.bf16.mxu0 0
        %3567 = vmatpush1.bf16.msra.mxu0 0
        %3568 = vmatprep.subr.bf16.mxu0 0
        %3569 = vmatpush1.bf16.msra.mxu0 0
        %3570 = vmatprep.subr.bf16.mxu0 0
        %3571 = vmatpush1.bf16.msra.mxu0 0
        %3572 = vmatprep.subr.bf16.mxu0 0
        %3573 = vmatpush1.bf16.msra.mxu0 0
        %3574 = vmatprep.subr.bf16.mxu0 0
        %3575 = vmatpush1.bf16.msra.mxu0 0
        %3576 = vmatprep.subr.bf16.mxu0 0
        %3577 = vmatpush1.bf16.msra.mxu0 0
        %3578 = vmatprep.subr.bf16.mxu0 0
        %3579 = vmatpush1.bf16.msra.mxu0 0
        %3580 = vmatprep.subr.bf16.mxu0 0
        %3581 = vmatpush1.bf16.msra.mxu0 0
        %3582 = vmatprep.subr.bf16.mxu0 0
        %3583 = vmatpush1.bf16.msra.mxu0 0
        %3584 = vmatprep.subr.bf16.mxu0 0
        %3585 = vmatpush1.bf16.msra.mxu0 0
        %3586 = vmatprep.subr.bf16.mxu0 0
        %3587 = vmatpush1.bf16.msra.mxu0 0
        %3588 = vmatprep.subr.bf16.mxu0 0
        %3589 = vmatpush1.bf16.msra.mxu0 0
        %3590 = vmatprep.mubr.bf16.mxu0 0
        %3591 = vmatmul.mubr.bf16.gmra.mrb[0].mxu0 %v3553
        %v3592 = vpop.f32.mrb[0].mxu0
        %v3593 = vadd.f32 0.0, %v3592
        %v3594 = vpop.f32.mrb[0].mxu0
        %v3595 = vpop.f32.mrb[0].mxu0
        %v3596 = vpop.f32.mrb[0].mxu0
        %3597 = vdwg.mxu0
        %v3599 = vsel %vm1411, %v3499, 0
        %v3602 = vsel %vm1665, %v3504, 0
        %3604 = vmatprep.subr.bf16.mxu0 0
        %3605 = vmatpush1.bf16.msra.mxu0 %v3602
        %3606 = vmatprep.subr.bf16.mxu0 0
        %3607 = vmatpush1.bf16.msra.mxu0 0
        %3608 = vmatprep.subr.bf16.mxu0 0
        %3609 = vmatpush1.bf16.msra.mxu0 0
        %3610 = vmatprep.subr.bf16.mxu0 0
        %3611 = vmatpush1.bf16.msra.mxu0 0
        %3612 = vmatprep.subr.bf16.mxu0 0
        %3613 = vmatpush1.bf16.msra.mxu0 0
        %3614 = vmatprep.subr.bf16.mxu0 0
        %3615 = vmatpush1.bf16.msra.mxu0 0
        %3616 = vmatprep.subr.bf16.mxu0 0
        %3617 = vmatpush1.bf16.msra.mxu0 0
        %3618 = vmatprep.subr.bf16.mxu0 0
        %3619 = vmatpush1.bf16.msra.mxu0 0
        %3620 = vmatprep.subr.bf16.mxu0 0
        %3621 = vmatpush1.bf16.msra.mxu0 0
        %3622 = vmatprep.subr.bf16.mxu0 0
        %3623 = vmatpush1.bf16.msra.mxu0 0
        %3624 = vmatprep.subr.bf16.mxu0 0
        %3625 = vmatpush1.bf16.msra.mxu0 0
        %3626 = vmatprep.subr.bf16.mxu0 0
        %3627 = vmatpush1.bf16.msra.mxu0 0
        %3628 = vmatprep.subr.bf16.mxu0 0
        %3629 = vmatpush1.bf16.msra.mxu0 0
        %3630 = vmatprep.subr.bf16.mxu0 0
        %3631 = vmatpush1.bf16.msra.mxu0 0
        %3632 = vmatprep.subr.bf16.mxu0 0
        %3633 = vmatpush1.bf16.msra.mxu0 0
        %3634 = vmatprep.subr.bf16.mxu0 0
        %3635 = vmatpush1.bf16.msra.mxu0 0
        %3636 = vmatprep.mubr.bf16.mxu0 0
        %3637 = vmatmul.mubr.bf16.gmra.mrb[0].mxu0 %v3599
        %v3638 = vpop.f32.mrb[0].mxu0
        %v3639 = vadd.f32 0.0, %v3638
        %v3640 = vpop.f32.mrb[0].mxu0
        %v3641 = vpop.f32.mrb[0].mxu0
        %v3642 = vpop.f32.mrb[0].mxu0
        %3643 = vdwg.mxu0
        %v3645 = vsel %vm1411, %v3500, 0
        %v3648 = vsel %vm1665, %v3505, 0
        %3650 = vmatprep.subr.bf16.mxu0 0
        %3651 = vmatpush1.bf16.msra.mxu0 %v3648
        %3652 = vmatprep.subr.bf16.mxu0 0
        %3653 = vmatpush1.bf16.msra.mxu0 0
        %3654 = vmatprep.subr.bf16.mxu0 0
        %3655 = vmatpush1.bf16.msra.mxu0 0
        %3656 = vmatprep.subr.bf16.mxu0 0
        %3657 = vmatpush1.bf16.msra.mxu0 0
        %3658 = vmatprep.subr.bf16.mxu0 0
        %3659 = vmatpush1.bf16.msra.mxu0 0
        %3660 = vmatprep.subr.bf16.mxu0 0
        %3661 = vmatpush1.bf16.msra.mxu0 0
        %3662 = vmatprep.subr.bf16.mxu0 0
        %3663 = vmatpush1.bf16.msra.mxu0 0
        %3664 = vmatprep.subr.bf16.mxu0 0
        %3665 = vmatpush1.bf16.msra.mxu0 0
        %3666 = vmatprep.subr.bf16.mxu0 0
        %3667 = vmatpush1.bf16.msra.mxu0 0
        %3668 = vmatprep.subr.bf16.mxu0 0
        %3669 = vmatpush1.bf16.msra.mxu0 0
        %3670 = vmatprep.subr.bf16.mxu0 0
        %3671 = vmatpush1.bf16.msra.mxu0 0
        %3672 = vmatprep.subr.bf16.mxu0 0
        %3673 = vmatpush1.bf16.msra.mxu0 0
        %3674 = vmatprep.subr.bf16.mxu0 0
        %3675 = vmatpush1.bf16.msra.mxu0 0
        %3676 = vmatprep.subr.bf16.mxu0 0
        %3677 = vmatpush1.bf16.msra.mxu0 0
        %3678 = vmatprep.subr.bf16.mxu0 0
        %3679 = vmatpush1.bf16.msra.mxu0 0
        %3680 = vmatprep.subr.bf16.mxu0 0
        %3681 = vmatpush1.bf16.msra.mxu0 0
        %3682 = vmatprep.mubr.bf16.mxu0 0
        %3683 = vmatmul.mubr.bf16.gmra.mrb[0].mxu0 %v3645
        %v3684 = vpop.f32.mrb[0].mxu0
        %v3685 = vadd.f32 0.0, %v3684
        %v3686 = vpop.f32.mrb[0].mxu0
        %v3687 = vpop.f32.mrb[0].mxu0
        %v3688 = vpop.f32.mrb[0].mxu0
        %3689 = vdwg.mxu0
        %v3690 = vsel %vm699, %v3547, 0.0
        %v3691 = vsel %vm699, %v3593, 0.0
        %v3692 = vadd.f32 %v3690, %v3691
        %v3693 = vsel %vm699, %v3639, 0.0
        %v3694 = vadd.f32 %v3692, %v3693
        %v3695 = vsel %vm699, %v3685, 0.0
        %v3696 = vadd.f32 %v3694, %v3695
        %s3697 = scalar_lea.vmem %s9, 1
        %v3698 = vld [vmem:[%s3697] sm:$0x1]
        %v3700 = vlaneseq
        %v3701 = vshrl.u32 %v3700, 7
        %v3702 = vsub.s32 0, %v3701
        %v3703 = vrot.slane %v3698, %v3702
        %v3705 = vadd.f32 %v3696, %v3703
        %v3706 = vadd.f32 %v2294, %v3705
        %s3707 = scalar_lea.vmem %s10, 1
        %v3708 = vld [vmem:[%s3707] sm:$0x1]
        %s3709 = scalar_lea.vmem %s11, 1
        %v3710 = vld [vmem:[%s3709] sm:$0x1]
        %v3711 = vsel %vm699, %v3706, 0.0
        %3712 = vadd.xlane.f32.xlu0 %v3711
        %v3713 = vpop.xlane.xlu0 %3712
        %v3714 = vmul.f32 %v3713, %v2060
        %v3715 = vsub.f32 %v3706, %v3714
        %v3716 = vmul.f32 %v3715, %v3715
        %v3717 = vsel %vm699, %v3716, 0.0
        %3718 = vadd.xlane.f32.xlu0 %v3717
        %v3719 = vpop.xlane.xlu0 %3718
        %v3720 = vmul.f32 %v3719, %v2060
        %v3721 = vadd.f32 %v3720, 1e-05
        %v3722 = vrsqrt.pop %v3721
        %v3723 = vmul.f32 %v3715, %v3722
        %v3725 = vlaneseq
        %v3726 = vshrl.u32 %v3725, 7
        %v3727 = vsub.s32 0, %v3726
        %v3728 = vrot.slane %v3708, %v3727
        %v3730 = vmul.f32 %v3723, %v3728
        %v3732 = vlaneseq
        %v3733 = vshrl.u32 %v3732, 7
        %v3734 = vsub.s32 0, %v3733
        %v3735 = vrot.slane %v3710, %v3734
        %v3737 = vadd.f32 %v3730, %v3735
        %v3738 = vpack.c.bf16 %v3737, %v3737
        %s3739 = scalar_lea.vmem %s12, 16
        %v3740 = vld [vmem:[%s3739] sm:$0xf]
        %v3741 = vld [vmem:[%s3739 + $0x4] sm:$0xf]
        %v3742 = vld [vmem:[%s3739 + $0x8] sm:$0xf]
        %v3743 = vld [vmem:[%s3739 + $0xc] sm:$0xf]
        %s3744 = scalar_lea.vmem %s13, 1
        %v3745 = vld [vmem:[%s3744] sm:$0x1]
        %v3747 = vlaneseq
        %v3748 = vshrl.u32 %v3747, 7
        %v3749 = vsub.s32 0, %v3748
        %v3750 = vrot.slane %v3745, %v3749
        %v3756 = vunpack.c.l.b16 %v3740
        %v3757 = vunpack.c.l.b16 %v3741
        %v3758 = vunpack.c.l.b16 %v3742
        %v3759 = vunpack.c.l.b16 %v3743
        %v3760 = vpack.c.b16 %v3757, %v3756
        %v3761 = vpack.c.b16 %v3759, %v3758
        %v3765 = vsel %vm699, %v3738, 0
        %3767 = vmatprep.subr.bf16.mxu0 0
        %3768 = vmatpush1.bf16.msra.mxu0 %v3760
        %3769 = vmatprep.subr.bf16.mxu0 0
        %3770 = vmatpush1.bf16.msra.mxu0 %v3761
        %3771 = vmatprep.subr.bf16.mxu0 0
        %3772 = vmatpush1.bf16.msra.mxu0 0
        %3773 = vmatprep.subr.bf16.mxu0 0
        %3774 = vmatpush1.bf16.msra.mxu0 0
        %3775 = vmatprep.subr.bf16.mxu0 0
        %3776 = vmatpush1.bf16.msra.mxu0 0
        %3777 = vmatprep.subr.bf16.mxu0 0
        %3778 = vmatpush1.bf16.msra.mxu0 0
        %3779 = vmatprep.subr.bf16.mxu0 0
        %3780 = vmatpush1.bf16.msra.mxu0 0
        %3781 = vmatprep.subr.bf16.mxu0 0
        %3782 = vmatpush1.bf16.msra.mxu0 0
        %3783 = vmatprep.subr.bf16.mxu0 0
        %3784 = vmatpush1.bf16.msra.mxu0 0
        %3785 = vmatprep.subr.bf16.mxu0 0
        %3786 = vmatpush1.bf16.msra.mxu0 0
        %3787 = vmatprep.subr.bf16.mxu0 0
        %3788 = vmatpush1.bf16.msra.mxu0 0
        %3789 = vmatprep.subr.bf16.mxu0 0
        %3790 = vmatpush1.bf16.msra.mxu0 0
        %3791 = vmatprep.subr.bf16.mxu0 0
        %3792 = vmatpush1.bf16.msra.mxu0 0
        %3793 = vmatprep.subr.bf16.mxu0 0
        %3794 = vmatpush1.bf16.msra.mxu0 0
        %3795 = vmatprep.subr.bf16.mxu0 0
        %3796 = vmatpush1.bf16.msra.mxu0 0
        %3797 = vmatprep.subr.bf16.mxu0 0
        %3798 = vmatpush1.bf16.msra.mxu0 0
        %3799 = vmatprep.mubr.bf16.mxu0 0
        %3800 = vmatmul.mubr.bf16.gmra.mrb[0].mxu0 %v3765
        %v3801 = vpop.f32.mrb[0].mxu0
        %v3802 = vadd.f32 %v3750, %v3801
        %v3803 = vpop.f32.mrb[0].mxu0
        %v3804 = vpop.f32.mrb[0].mxu0
        %v3805 = vpop.f32.mrb[0].mxu0
        %3806 = vdwg.mxu0
        %v3807 = vmax.f32 %v3802, 0.0
        %v3808 = vpack.c.bf16 %v3807, %v3807
        %s3809 = scalar_lea.vmem %s14, 64
        %v3810 = vld [vmem:[%s3809] sm:$0xf]
        %v3811 = vld [vmem:[%s3809 + $0x4] sm:$0xf]
        %v3812 = vld [vmem:[%s3809 + $0x8] sm:$0xf]
        %v3813 = vld [vmem:[%s3809 + $0xc] sm:$0xf]
        %v3814 = vld [vmem:[%s3809 + $0x10] sm:$0xf]
        %v3815 = vld [vmem:[%s3809 + $0x14] sm:$0xf]
        %v3816 = vld [vmem:[%s3809 + $0x18] sm:$0xf]
        %v3817 = vld [vmem:[%s3809 + $0x1c] sm:$0xf]
        %v3818 = vld [vmem:[%s3809 + $0x20] sm:$0xf]
        %v3819 = vld [vmem:[%s3809 + $0x24] sm:$0xf]
        %v3820 = vld [vmem:[%s3809 + $0x28] sm:$0xf]
        %v3821 = vld [vmem:[%s3809 + $0x2c] sm:$0xf]
        %v3822 = vld [vmem:[%s3809 + $0x30] sm:$0xf]
        %v3823 = vld [vmem:[%s3809 + $0x34] sm:$0xf]
        %v3824 = vld [vmem:[%s3809 + $0x38] sm:$0xf]
        %v3825 = vld [vmem:[%s3809 + $0x3c] sm:$0xf]
        %s3826 = scalar_lea.vmem %s15, 1
        %v3827 = vld [vmem:[%s3826] sm:$0x1]
        %v3829 = vlaneseq
        %v3830 = vshrl.u32 %v3829, 7
        %v3831 = vsub.s32 0, %v3830
        %v3832 = vrot.slane %v3827, %v3831
        %v3850 = vunpack.c.l.b16 %v3810
        %v3851 = vunpack.c.l.b16 %v3811
        %v3852 = vunpack.c.l.b16 %v3812
        %v3853 = vunpack.c.l.b16 %v3813
        %v3854 = vunpack.c.l.b16 %v3814
        %v3855 = vunpack.c.l.b16 %v3815
        %v3856 = vunpack.c.l.b16 %v3816
        %v3857 = vunpack.c.l.b16 %v3817
        %v3858 = vunpack.c.l.b16 %v3818
        %v3859 = vunpack.c.l.b16 %v3819
        %v3860 = vunpack.c.l.b16 %v3820
        %v3861 = vunpack.c.l.b16 %v3821
        %v3862 = vunpack.c.l.b16 %v3822
        %v3863 = vunpack.c.l.b16 %v3823
        %v3864 = vunpack.c.l.b16 %v3824
        %v3865 = vunpack.c.l.b16 %v3825
        %v3866 = vpack.c.b16 %v3851, %v3850
        %v3867 = vpack.c.b16 %v3853, %v3852
        %v3868 = vpack.c.b16 %v3855, %v3854
        %v3869 = vpack.c.b16 %v3857, %v3856
        %v3870 = vpack.c.b16 %v3859, %v3858
        %v3871 = vpack.c.b16 %v3861, %v3860
        %v3872 = vpack.c.b16 %v3863, %v3862
        %v3873 = vpack.c.b16 %v3865, %v3864
        %3882 = vmatprep.subr.bf16.mxu0 0
        %3883 = vmatpush1.bf16.msra.mxu0 %v3866
        %3884 = vmatprep.subr.bf16.mxu0 0
        %3885 = vmatpush1.bf16.msra.mxu0 %v3867
        %3886 = vmatprep.subr.bf16.mxu0 0
        %3887 = vmatpush1.bf16.msra.mxu0 %v3868
        %3888 = vmatprep.subr.bf16.mxu0 0
        %3889 = vmatpush1.bf16.msra.mxu0 %v3869
        %3890 = vmatprep.subr.bf16.mxu0 0
        %3891 = vmatpush1.bf16.msra.mxu0 %v3870
        %3892 = vmatprep.subr.bf16.mxu0 0
        %3893 = vmatpush1.bf16.msra.mxu0 %v3871
        %3894 = vmatprep.subr.bf16.mxu0 0
        %3895 = vmatpush1.bf16.msra.mxu0 %v3872
        %3896 = vmatprep.subr.bf16.mxu0 0
        %3897 = vmatpush1.bf16.msra.mxu0 %v3873
        %3898 = vmatprep.subr.bf16.mxu0 0
        %3899 = vmatpush1.bf16.msra.mxu0 0
        %3900 = vmatprep.subr.bf16.mxu0 0
        %3901 = vmatpush1.bf16.msra.mxu0 0
        %3902 = vmatprep.subr.bf16.mxu0 0
        %3903 = vmatpush1.bf16.msra.mxu0 0
        %3904 = vmatprep.subr.bf16.mxu0 0
        %3905 = vmatpush1.bf16.msra.mxu0 0
        %3906 = vmatprep.subr.bf16.mxu0 0
        %3907 = vmatpush1.bf16.msra.mxu0 0
        %3908 = vmatprep.subr.bf16.mxu0 0
        %3909 = vmatpush1.bf16.msra.mxu0 0
        %3910 = vmatprep.subr.bf16.mxu0 0
        %3911 = vmatpush1.bf16.msra.mxu0 0
        %3912 = vmatprep.subr.bf16.mxu0 0
        %3913 = vmatpush1.bf16.msra.mxu0 0
        %3914 = vmatprep.mubr.bf16.mxu0 0
        %3915 = vmatmul.mubr.bf16.gmra.mrb[0].mxu0 %v3808
        %v3916 = vpop.f32.mrb[0].mxu0
        %v3917 = vadd.f32 %v3832, %v3916
        %v3918 = vpop.f32.mrb[0].mxu0
        %v3919 = vpop.f32.mrb[0].mxu0
        %v3920 = vpop.f32.mrb[0].mxu0
        %3921 = vdwg.mxu0
        %v3922 = vadd.f32 %v3737, %v3917
        %s3923 = scalar_lea.vmem %s16, 1
        %v3924 = vld [vmem:[%s3923] sm:$0x1]
        %s3925 = scalar_lea.vmem %s17, 1
        %v3926 = vld [vmem:[%s3925] sm:$0x1]
        %v3927 = vsel %vm699, %v3922, 0.0
        %3928 = vadd.xlane.f32.xlu0 %v3927
        %v3929 = vpop.xlane.xlu0 %3928
        %v3930 = vmul.f32 %v3929, %v2060
        %v3931 = vsub.f32 %v3922, %v3930
        %v3932 = vmul.f32 %v3931, %v3931
        %v3933 = vsel %vm699, %v3932, 0.0
        %3934 = vadd.xlane.f32.xlu0 %v3933
        %v3935 = vpop.xlane.xlu0 %3934
        %v3936 = vmul.f32 %v3935, %v2060
        %v3937 = vadd.f32 %v3936, 1e-05
        %v3938 = vrsqrt.pop %v3937
        %v3939 = vmul.f32 %v3931, %v3938
        %v3941 = vlaneseq
        %v3942 = vshrl.u32 %v3941, 7
        %v3943 = vsub.s32 0, %v3942
        %v3944 = vrot.slane %v3924, %v3943
        %v3946 = vmul.f32 %v3939, %v3944
        %v3948 = vlaneseq
        %v3949 = vshrl.u32 %v3948, 7
        %v3950 = vsub.s32 0, %v3949
        %v3951 = vrot.slane %v3926, %v3950
        %v3953 = vadd.f32 %v3946, %v3951
        %v3954 = vld [vmem:[%s18] sm:$0x1]
        %v3955 = vld [vmem:[%s19] sm:$0x1]
        %v3956 = vsel %vm699, %v3953, 0.0
        %3957 = vadd.xlane.f32.xlu0 %v3956
        %v3958 = vpop.xlane.xlu0 %3957
        %v3959 = vmul.f32 %v3958, %v2060
        %v3960 = vsub.f32 %v3953, %v3959
        %v3961 = vmul.f32 %v3960, %v3960
        %v3962 = vsel %vm699, %v3961, 0.0
        %3963 = vadd.xlane.f32.xlu0 %v3962
        %v3964 = vpop.xlane.xlu0 %3963
        %v3965 = vmul.f32 %v3964, %v2060
        %v3966 = vadd.f32 %v3965, 1e-05
        %v3967 = vrsqrt.pop %v3966
        %v3968 = vmul.f32 %v3960, %v3967
        %v3970 = vlaneseq
        %v3971 = vshrl.u32 %v3970, 7
        %v3972 = vsub.s32 0, %v3971
        %v3973 = vrot.slane %v3954, %v3972
        %v3975 = vmul.f32 %v3968, %v3973
        %v3977 = vlaneseq
        %v3978 = vshrl.u32 %v3977, 7
        %v3979 = vsub.s32 0, %v3978
        %v3980 = vrot.slane %v3955, %v3979
        %v3982 = vadd.f32 %v3975, %v3980
        %3983 = vst.msk [vmem:[%s631] sm:$0xff] %vm699, %v3982
        %s3984 = sand.u32 %s472, 1
        %s3985 = scalar_lea.sflag [#allocation3], %s3984
        %s3986 = sand.u32 %s472, 1
        %s3987 = smul.addr %s3986, 8
        %s3988 = scalar_lea.vmem [#allocation2], %s3987
        // Predicated region
        $region101: #{tpu_custom_call.1} parent=99 // pred_check
          %p3989 = pneg %p482
        $region102: #{tpu_custom_call.1} parent=99 // pred_check_branch
          %3991 = sbr.rel (%p3989) target = $region104
        $region103: #{tpu_custom_call.1} parent=99 // pred_region
          %s3993 = ssub.s32 128, 128
          %3994 = vsyncadd %s3985, %s3993
          %s3995 = smul.addr %s34, 128
          %s3996 = scalar_lea.hbm %s20, %s3995
          %s3998 = sshll.u32 %s3988, 4
          %s3999 = int_to_ptr.vmem [resolvable:$true] %s3998
          %4001 = dma.vmem_to_hbm [thread:$0]  %s3999, 128, %s3996, %s3985
        $region104: #{tpu_custom_call.1} parent=99 // pred_fallthru
          _
      $region100: #{tpu_custom_call.1} parent=5 // pred_fallthru
        _
      %p4002 = scmp.le.s32.totalorder 2, %s29
      // Predicated region
      $region105: #{tpu_custom_call.1} parent=5 // pred_check
        %p4003 = pneg %p4002
      $region106: #{tpu_custom_call.1} parent=5 // pred_check_branch
        %4005 = sbr.rel (%p4003) target = $region108
      $region107: #{tpu_custom_call.1} parent=5 // pred_region
        %s4006 = ssub.s32 %s29, 2
        // Predicated region
        $region109: #{tpu_custom_call.1} parent=107 // pred_check
          %p4007 = pneg %p488
        $region110: #{tpu_custom_call.1} parent=107 // pred_check_branch
          %4009 = sbr.rel (%p4007) target = $region112
        $region111: #{tpu_custom_call.1} parent=107 // pred_region
          %s4010 = sand.u32 %s473, 1
          %s4011 = scalar_lea.sflag [#allocation3], %s4010
          %s4012 = sand.u32 %s473, 1
          %s4013 = smul.addr %s4012, 8
          %s4014 = scalar_lea.vmem [#allocation2], %s4013
          %4015 = dma.done %s4011, 128
        $region112: #{tpu_custom_call.1} parent=107 // pred_fallthru
          _
      $region108: #{tpu_custom_call.1} parent=5 // pred_fallthru
        _
    $region6: #{tpu_custom_call.1} parent=1 // loop_footer
      %s33 = sadd.s32 1, %s29
    $region7: #{tpu_custom_call.1} parent=1 // loop_footer_branch
      %28 = sbr.rel target = $region3
    $region8: #{tpu_custom_call.1} parent=1 // loop_exit
      _
    %4016 = vsyncpa [#allocation3], 1
    %s4017 = scalar_lea.sflag [#allocation3], 1
    %4018 = vsyncpa %s4017, 1

</llo_original>
